<compile_context>
chip_gen: v6e
topology: v6e:2x2x1
jax: 0.10.0
libtpu: 0.0.40
codegen_flags: <defaults>
</compile_context>

<pallas_src>
import math

import jax
import jax.numpy as jnp
from jax import lax
from jax.experimental import pallas as pl
from jax.experimental.pallas import tpu as pltpu

# ------------- small, shape-consistent hyper-parameters (mirrors WaveNet.__init__) ----
B = 2
OUT_CH = 16                   # out_channels
RES = 32                      # residual_channels
GATE = 64                     # gate_channels
GATE_OUT = GATE // 2
LOCAL = GATE                  # local_channels (conditioning comes from upsample_net -> gate_channels)
SKIP_OUT = RES                # skip_out_channels (skip path is conv1x1_skip -> residual_channels)
MEL = 16                      # mel_channels
MEL_KERNEL = 32               # upsample kernel size
MEL_STRIDE = 16               # upsample stride
KSIZE = 3                     # dilated conv kernel size
LAYERS = 4
LAYERS_PER_STACK = 2
T_MEL = 7
T = (T_MEL - 1) * MEL_STRIDE + MEL_KERNEL       # 128: audio length == upsampled cond length
T_ZS = (T_MEL - 1) * MEL_STRIDE + 1             # zero-stuffed mel length
T_PAD = T_ZS + 2 * (MEL_KERNEL - 1)             # padded length so transposed conv == plain conv
N = B * T                                       # 256: folded (batch, time) lane extent


# ----------------------------------- Pallas kernel ------------------------------------
def wavenet_kernel(x_ref, slab_ref, w_up_ref, w_first_ref, w_layer_ref, w_so_ref,
                   w_l1_ref, w_l2_ref, b_layer_ref, b_so_ref, b_misc_ref, out_ref):
    f32 = jnp.float32
    bf16 = jnp.bfloat16

    # coalesced misc biases: [b_up(64); b_first(32); b_l1(32); b_l2(16)]
    bm = b_misc_ref[...]
    b_up = bm[0:GATE]
    b_first = bm[GATE:GATE + RES]
    b_l1 = bm[GATE + RES:GATE + 2 * RES]
    b_l2 = bm[GATE + 2 * RES:]

    # ---- upsample_net: ConvTranspose1d(mel, gate, K, stride) as ONE im2col matmul ----
    c = jnp.dot(w_up_ref[...], slab_ref[...], preferred_element_type=f32) + b_up
    c_bf = c.astype(bf16)                                   # (GATE, N), constant over layers

    # ---- first_conv: 1x1 conv ----
    x = jnp.dot(w_first_ref[...], x_ref[...], preferred_element_type=f32) + b_first  # (RES, N) f32

    # hoisted per-element time index (batch folded into lanes => index modulo T) + masks
    t_idx = lax.broadcasted_iota(jnp.int32, (RES, N), 1) % T
    masks = {s: t_idx >= s for s in (1, 2, 4)}              # the only shifts that occur

    def shifted(xf, s):
        # causal shift-right by s samples within each batch element, zero-filled
        return jnp.where(masks[s], pltpu.roll(xf, s, axis=1), 0.0).astype(bf16)

    skips = jnp.zeros((RES, N), f32)
    sqrt_half = f32(math.sqrt(0.5))

    for l in range(LAYERS):
        d = 2 ** (l % LAYERS_PER_STACK)
        residual = x
        # TODO(synk): F.dropout is identity at inference (training=False); training-mode
        # dropout masking is not implemented here.

        # dilated causal conv (3 taps) + conditioning 1x1 fused into one K=160 dot.
        z = jnp.concatenate([shifted(x, 2 * d), shifted(x, d), x.astype(bf16), c_bf], axis=0)
        pre = jnp.dot(w_layer_ref[l], z, preferred_element_type=f32) + b_layer_ref[l]   # (GATE, N)

        # TODO(synk): the reference CausalConv splits along dim=-1 (time) and WaveNet.forward
        # passes an undefined `g_bct`; that code cannot execute in PyTorch.  The intended
        # (standard WaveNet) channel-dim split / gated activation is used here.
        g = (jnp.tanh(pre[:GATE_OUT]) * jax.nn.sigmoid(pre[GATE_OUT:])).astype(bf16)

        if l == LAYERS - 1:
            # residual output is dead after the last layer: only compute the skip half
            s = jnp.dot(w_so_ref[l][:RES], g, preferred_element_type=f32) + b_so_ref[l][:RES]
            skips = skips + s
        else:
            # stacked [w_skip; w_out] -> single head dot, sublane-sliced
            so = jnp.dot(w_so_ref[l], g, preferred_element_type=f32) + b_so_ref[l]      # (2*RES, N)
            skips = skips + so[:RES]
            x = (so[RES:] + residual) * sqrt_half

    skips = skips * f32(math.sqrt(1.0 / LAYERS))
    h = jnp.maximum(skips, 0.0)
    h = jnp.dot(w_l1_ref[...], h.astype(bf16), preferred_element_type=f32) + b_l1
    h = jnp.maximum(h, 0.0)
    h = jnp.dot(w_l2_ref[...], h.astype(bf16), preferred_element_type=f32) + b_l2

    # softmax over the channel dim (axis 0 of the (C, B*T) tile)
    m = jnp.max(h, axis=0, keepdims=True)
    e = jnp.exp(h - m)
    inv = pl.reciprocal(jnp.sum(e, axis=0, keepdims=True), approx=True)
    out_ref[...] = (e * inv).astype(out_ref.dtype)


# ------------------------------------ wrapper -----------------------------------------
def wavenet_forward(x, x_local, p):
    f32 = jnp.float32
    bf16 = jnp.bfloat16

    # ---- layout glue: fold batch into lanes ----
    x_f = jnp.transpose(x, (1, 0, 2)).reshape(OUT_CH, N).astype(bf16)     # (OUT_CH, B*T)

    # zero-stuff + pad mel conditioning, then build the im2col slab for the transposed conv
    x_zs = jnp.zeros((B, MEL, T_ZS), f32).at[:, :, ::MEL_STRIDE].set(x_local)
    x_pad = jnp.pad(x_zs, ((0, 0), (0, 0), (MEL_KERNEL - 1, MEL_KERNEL - 1)))   # (B, MEL, T_PAD)
    slab = jnp.stack([x_pad[:, :, j:j + T] for j in range(MEL_KERNEL)], axis=1)  # (B, K, MEL, T)
    slab = jnp.transpose(slab, (1, 2, 0, 3)).reshape(MEL_KERNEL * MEL, N).astype(bf16)

    # ---- weight re-layout / stacking (done once, outside the kernel hot path) ----
    # ConvTranspose weight (in, out, K) -> flipped per-tap (K, GATE, MEL) -> stacked (GATE, K*MEL)
    w_up_taps = jnp.transpose(p["w_up_ct"][:, :, ::-1], (2, 1, 0))
    w_up = jnp.transpose(w_up_taps, (1, 0, 2)).reshape(GATE, MEL_KERNEL * MEL).astype(bf16)

    # dilated conv taps + local 1x1, concatenated along the input dim: (L, GATE, 3*RES+GATE)
    w_taps = jnp.transpose(p["w_conv"], (0, 3, 1, 2))                     # (L, K, GATE, RES)
    w_layer = jnp.concatenate([w_taps[:, 0], w_taps[:, 1], w_taps[:, 2],
                               p["w_local"]], axis=-1).astype(bf16)

    # stacked skip/out head: (L, 2*RES, GATE_OUT)
    w_so = jnp.concatenate([p["w_skip"], p["w_out"]], axis=1).astype(bf16)
    b_so = jnp.concatenate([p["b_skip"], p["b_out"]], axis=1)[:, :, None].astype(f32)
    b_layer = p["b_conv"][:, :, None].astype(f32)

    b_misc = jnp.concatenate([p["b_up"], p["b_first"], p["b_l1"], p["b_l2"]])[:, None].astype(f32)

    args = (x_f, slab, w_up, p["w_first"].astype(bf16), w_layer, w_so,
            p["w_l1"].astype(bf16), p["w_l2"].astype(bf16),
            b_layer, b_so, b_misc)

    def full_spec(shape):
        n = len(shape)
        return pl.BlockSpec(shape, lambda i, _n=n: (0,) * _n)

    out = pl.pallas_call(
        wavenet_kernel,
        out_shape=jax.ShapeDtypeStruct((OUT_CH, N), jnp.float32),
        grid=(1,),
        in_specs=[full_spec(a.shape) for a in args],
        out_specs=full_spec((OUT_CH, N)),
        compiler_params=pltpu.CompilerParams(dimension_semantics=("arbitrary",)),
    )(*args)

    return jnp.transpose(out.reshape(OUT_CH, B, T), (1, 0, 2))            # back to (B, OUT_CH, T)


# ----------------------------- deterministic parameter init ---------------------------
def init_params(key):
    ks = jax.random.split(key, 16)

    def nrm(k, shape, fan_in):
        return jax.random.normal(k, shape, jnp.float32) / math.sqrt(fan_in)

    p = {}
    p["w_up_ct"] = nrm(ks[0], (MEL, GATE, MEL_KERNEL), MEL * MEL_KERNEL)   # ConvTranspose1d weight
    p["b_up"] = nrm(ks[1], (GATE,), GATE)
    p["w_first"] = nrm(ks[2], (RES, OUT_CH), OUT_CH)
    p["b_first"] = nrm(ks[3], (RES,), RES)
    p["w_conv"] = nrm(ks[4], (LAYERS, GATE, RES, KSIZE), RES * KSIZE)
    p["b_conv"] = nrm(ks[5], (LAYERS, GATE), GATE)
    p["w_local"] = nrm(ks[6], (LAYERS, GATE, LOCAL), LOCAL)
    p["w_out"] = nrm(ks[7], (LAYERS, RES, GATE_OUT), GATE_OUT)
    p["b_out"] = nrm(ks[8], (LAYERS, RES), RES)
    p["w_skip"] = nrm(ks[9], (LAYERS, RES, GATE_OUT), GATE_OUT)
    p["b_skip"] = nrm(ks[10], (LAYERS, RES), RES)
    p["w_l1"] = nrm(ks[11], (SKIP_OUT, SKIP_OUT), SKIP_OUT)
    p["b_l1"] = nrm(ks[12], (SKIP_OUT,), SKIP_OUT)
    p["w_l2"] = nrm(ks[13], (OUT_CH, SKIP_OUT), SKIP_OUT)
    p["b_l2"] = nrm(ks[14], (OUT_CH,), OUT_CH)
    return p


# --------------------------------- pure-JAX reference ---------------------------------
def reference_forward(x, x_local, p):
    hi = lax.Precision.HIGHEST
    K = MEL_KERNEL
    # ConvTranspose1d == conv with lhs_dilation and flipped/transposed kernel
    w_flip = jnp.transpose(p["w_up_ct"][:, :, ::-1], (1, 0, 2))   # (GATE, MEL, K)
    c = lax.conv_general_dilated(
        x_local, w_flip, window_strides=(1,), padding=((K - 1, K - 1),),
        lhs_dilation=(MEL_STRIDE,), rhs_dilation=(1,),
        dimension_numbers=("NCH", "OIH", "NCH"), precision=hi)
    c = c + p["b_up"][None, :, None]

    def mm(w, a):
        return jnp.einsum("oi,bit->bot", w, a, precision=hi)

    xr = mm(p["w_first"], x) + p["b_first"][None, :, None]
    skips = 0.0
    for l in range(LAYERS):
        d = 2 ** (l % LAYERS_PER_STACK)
        residual = xr
        pad = (KSIZE - 1) * d
        h = lax.conv_general_dilated(
            xr, p["w_conv"][l], window_strides=(1,), padding=((pad, pad),),
            rhs_dilation=(d,), dimension_numbers=("NCH", "OIH", "NCH"), precision=hi)
        h = h[:, :, :T] + p["b_conv"][l][None, :, None]
        cz = mm(p["w_local"][l], c)
        a = h[:, :GATE_OUT] + cz[:, :GATE_OUT]
        bg = h[:, GATE_OUT:] + cz[:, GATE_OUT:]
        g = jnp.tanh(a) * jax.nn.sigmoid(bg)
        s = mm(p["w_skip"][l], g) + p["b_skip"][l][None, :, None]
        xo = mm(p["w_out"][l], g) + p["b_out"][l][None, :, None]
        xr = (xo + residual) * math.sqrt(0.5)
        skips = skips + s
    skips = skips * math.sqrt(1.0 / LAYERS)
    h = jax.nn.relu(skips)
    h = mm(p["w_l1"], h) + p["b_l1"][None, :, None]
    h = jax.nn.relu(h)
    h = mm(p["w_l2"], h) + p["b_l2"][None, :, None]
    return jax.nn.softmax(h, axis=1)


# --------------------------------------- main ------------------------------------------
if __name__ == "__main__":
    key = jax.random.PRNGKey(0)
    kx, kc, kp = jax.random.split(key, 3)
    x = jax.random.normal(kx, (B, OUT_CH, T), jnp.float32)
    x_local = jax.random.normal(kc, (B, MEL, T_MEL), jnp.float32)
    params = init_params(kp)

    out = wavenet_forward(x, x_local, params)
    out = jax.block_until_ready(out)

    ref = jax.block_until_ready(reference_forward(x, x_local, params))

    assert out.shape == (B, OUT_CH, T)
    assert bool(jnp.all(jnp.isfinite(out)))
    # bf16 matmul operands + approx reciprocal => slightly relaxed tolerances vs f32 reference
    assert bool(jnp.allclose(jnp.sum(out, axis=1), 1.0, atol=5e-3))
    assert bool(jnp.allclose(out, ref, atol=5e-3, rtol=5e-2)), float(jnp.max(jnp.abs(out - ref)))

    print("KERNEL_OK")
</pallas_src>

<mosaic_0001>
module attributes {stable_mosaic.version = 11 : i64} {
  func.func @wavenet_kernel(%arg0: i32, %arg1: memref<16x256xbf16, #tpu.memory_space<vmem>>, %arg2: memref<512x256xbf16, #tpu.memory_space<vmem>>, %arg3: memref<64x512xbf16, #tpu.memory_space<vmem>>, %arg4: memref<32x16xbf16, #tpu.memory_space<vmem>>, %arg5: memref<4x64x160xbf16, #tpu.memory_space<vmem>>, %arg6: memref<4x64x32xbf16, #tpu.memory_space<vmem>>, %arg7: memref<32x32xbf16, #tpu.memory_space<vmem>>, %arg8: memref<16x32xbf16, #tpu.memory_space<vmem>>, %arg9: memref<4x64x1xf32, #tpu.memory_space<vmem>>, %arg10: memref<4x64x1xf32, #tpu.memory_space<vmem>>, %arg11: memref<144x1xf32, #tpu.memory_space<vmem>>, %arg12: memref<16x256xf32, #tpu.memory_space<vmem>>) attributes {dimension_semantics = [#tpu.dimension_semantics<arbitrary>], iteration_bounds = array<i64: 1>, scalar_prefetch = 0 : i64, scratch_operands = 0 : i64, tpu.core_type = #tpu.core_type<tc>, window_params = [{pipeline_mode = #tpu.pipeline_mode<synchronous>, transform_indices = @transform_0, window_bounds = array<i64: 16, 256>}, {pipeline_mode = #tpu.pipeline_mode<synchronous>, transform_indices = @transform_1, window_bounds = array<i64: 512, 256>}, {pipeline_mode = #tpu.pipeline_mode<synchronous>, transform_indices = @transform_2, window_bounds = array<i64: 64, 512>}, {pipeline_mode = #tpu.pipeline_mode<synchronous>, transform_indices = @transform_3, window_bounds = array<i64: 32, 16>}, {pipeline_mode = #tpu.pipeline_mode<synchronous>, transform_indices = @transform_4, window_bounds = array<i64: 4, 64, 160>}, {pipeline_mode = #tpu.pipeline_mode<synchronous>, transform_indices = @transform_5, window_bounds = array<i64: 4, 64, 32>}, {pipeline_mode = #tpu.pipeline_mode<synchronous>, transform_indices = @transform_6, window_bounds = array<i64: 32, 32>}, {pipeline_mode = #tpu.pipeline_mode<synchronous>, transform_indices = @transform_7, window_bounds = array<i64: 16, 32>}, {pipeline_mode = #tpu.pipeline_mode<synchronous>, transform_indices = @transform_8, window_bounds = array<i64: 4, 64, 1>}, {pipeline_mode = #tpu.pipeline_mode<synchronous>, transform_indices = @transform_9, window_bounds = array<i64: 4, 64, 1>}, {pipeline_mode = #tpu.pipeline_mode<synchronous>, transform_indices = @transform_10, window_bounds = array<i64: 144, 1>}, {pipeline_mode = #tpu.pipeline_mode<synchronous>, transform_indices = @transform_11, window_bounds = array<i64: 16, 256>}]} {
    %c0 = arith.constant 0 : index
    %c0_0 = arith.constant 0 : index
    %0 = vector.load %arg11[%c0, %c0_0] : memref<144x1xf32, #tpu.memory_space<vmem>>, vector<144x1xf32>
    %1 = vector.extract_strided_slice %0 {offsets = [0, 0], sizes = [64, 1], strides = [1, 1]} : vector<144x1xf32> to vector<64x1xf32>
    %2 = vector.extract_strided_slice %0 {offsets = [64, 0], sizes = [32, 1], strides = [1, 1]} : vector<144x1xf32> to vector<32x1xf32>
    %3 = vector.extract_strided_slice %0 {offsets = [96, 0], sizes = [32, 1], strides = [1, 1]} : vector<144x1xf32> to vector<32x1xf32>
    %4 = vector.extract_strided_slice %0 {offsets = [128, 0], sizes = [16, 1], strides = [1, 1]} : vector<144x1xf32> to vector<16x1xf32>
    %c0_1 = arith.constant 0 : index
    %c0_2 = arith.constant 0 : index
    %5 = vector.load %arg3[%c0_1, %c0_2] : memref<64x512xbf16, #tpu.memory_space<vmem>>, vector<64x512xbf16>
    %c0_3 = arith.constant 0 : index
    %c0_4 = arith.constant 0 : index
    %6 = vector.load %arg2[%c0_3, %c0_4] : memref<512x256xbf16, #tpu.memory_space<vmem>>, vector<512x256xbf16>
    %cst = arith.constant dense<0.000000e+00> : vector<64x256xf32>
    %7 = tpu.matmul %5, %6, %cst {dimension_numbers = #tpu.dot_dimension_numbers<[1], [0], [0], [1], [0, 0, 1, 1], [], []>} : vector<64x512xbf16>, vector<512x256xbf16>, vector<64x256xf32> -> vector<64x256xf32>
    %8 = vector.broadcast %1 : vector<64x1xf32> to vector<64x256xf32>
    %9 = arith.addf %7, %8 : vector<64x256xf32>
    %10 = arith.truncf %9 : vector<64x256xf32> to vector<64x256xbf16>
    %c0_5 = arith.constant 0 : index
    %c0_6 = arith.constant 0 : index
    %11 = vector.load %arg4[%c0_5, %c0_6] : memref<32x16xbf16, #tpu.memory_space<vmem>>, vector<32x16xbf16>
    %c0_7 = arith.constant 0 : index
    %c0_8 = arith.constant 0 : index
    %12 = vector.load %arg1[%c0_7, %c0_8] : memref<16x256xbf16, #tpu.memory_space<vmem>>, vector<16x256xbf16>
    %cst_9 = arith.constant dense<0.000000e+00> : vector<32x256xf32>
    %13 = tpu.matmul %11, %12, %cst_9 {dimension_numbers = #tpu.dot_dimension_numbers<[1], [0], [0], [1], [0, 0, 1, 1], [], []>} : vector<32x16xbf16>, vector<16x256xbf16>, vector<32x256xf32> -> vector<32x256xf32>
    %14 = vector.broadcast %2 : vector<32x1xf32> to vector<32x256xf32>
    %15 = arith.addf %13, %14 : vector<32x256xf32>
    %16 = tpu.iota {dimensions = array<i32: 1>} : vector<32x256xi32>
    %c128_i32 = arith.constant 128 : i32
    %c0_i32 = arith.constant 0 : i32
    %17 = arith.cmpi eq, %c128_i32, %c0_i32 : i32
    %c1_i32 = arith.constant 1 : i32
    %18 = arith.select %17, %c1_i32, %c128_i32 : i32
    %19 = vector.broadcast %18 : i32 to vector<32x256xi32>
    %20 = arith.remsi %16, %19 : vector<32x256xi32>
    %c0_i32_10 = arith.constant 0 : i32
    %21 = vector.broadcast %c0_i32_10 : i32 to vector<32x256xi32>
    %22 = arith.cmpi ne, %20, %21 : vector<32x256xi32>
    %c0_i32_11 = arith.constant 0 : i32
    %23 = vector.broadcast %c0_i32_11 : i32 to vector<32x256xi32>
    %24 = arith.cmpi slt, %20, %23 : vector<32x256xi32>
    %c0_i32_12 = arith.constant 0 : i32
    %25 = arith.cmpi slt, %18, %c0_i32_12 : i32
    %26 = vector.broadcast %25 : i1 to vector<32x256xi1>
    %27 = vector.broadcast %26 : vector<32x256xi1> to vector<32x256xi1>
    %28 = arith.xori %24, %27 : vector<32x256xi1>
    %29 = arith.andi %28, %22 : vector<32x256xi1>
    %30 = vector.broadcast %18 : i32 to vector<32x256xi32>
    %31 = arith.addi %20, %30 : vector<32x256xi32>
    %32 = arith.select %29, %31, %20 : vector<32x256xi1>, vector<32x256xi32>
    %c1_i32_13 = arith.constant 1 : i32
    %33 = vector.broadcast %c1_i32_13 : i32 to vector<32x256xi32>
    %34 = arith.cmpi sge, %32, %33 : vector<32x256xi32>
    %c2_i32 = arith.constant 2 : i32
    %35 = vector.broadcast %c2_i32 : i32 to vector<32x256xi32>
    %36 = arith.cmpi sge, %32, %35 : vector<32x256xi32>
    %c4_i32 = arith.constant 4 : i32
    %37 = vector.broadcast %c4_i32 : i32 to vector<32x256xi32>
    %38 = arith.cmpi sge, %32, %37 : vector<32x256xi32>
    %cst_14 = arith.constant 0.000000e+00 : f32
    %39 = vector.broadcast %cst_14 : f32 to vector<32x256xf32>
    %c2_i32_15 = arith.constant 2 : i32
    %40 = tpu.dynamic_rotate %15 by %c2_i32_15 dim 1 : vector<32x256xf32>, i32 -> vector<32x256xf32>
    %cst_16 = arith.constant 0.000000e+00 : f32
    %41 = vector.broadcast %cst_16 : f32 to vector<32x256xf32>
    %42 = arith.select %36, %40, %41 : vector<32x256xi1>, vector<32x256xf32>
    %43 = arith.truncf %42 : vector<32x256xf32> to vector<32x256xbf16>
    %c1_i32_17 = arith.constant 1 : i32
    %44 = tpu.dynamic_rotate %15 by %c1_i32_17 dim 1 : vector<32x256xf32>, i32 -> vector<32x256xf32>
    %cst_18 = arith.constant 0.000000e+00 : f32
    %45 = vector.broadcast %cst_18 : f32 to vector<32x256xf32>
    %46 = arith.select %34, %44, %45 : vector<32x256xi1>, vector<32x256xf32>
    %47 = arith.truncf %46 : vector<32x256xf32> to vector<32x256xbf16>
    %48 = arith.truncf %15 : vector<32x256xf32> to vector<32x256xbf16>
    %49 = tpu.concatenate %43, %47, %48, %10 in 0 : vector<32x256xbf16>, vector<32x256xbf16>, vector<32x256xbf16>, vector<64x256xbf16> -> vector<160x256xbf16>
    %c0_19 = arith.constant 0 : index
    %c0_20 = arith.constant 0 : index
    %c0_21 = arith.constant 0 : index
    %50 = vector.load %arg5[%c0_19, %c0_20, %c0_21] : memref<4x64x160xbf16, #tpu.memory_space<vmem>>, vector<1x64x160xbf16>
    %51 = vector.shape_cast %50 : vector<1x64x160xbf16> to vector<64x160xbf16>
    %cst_22 = arith.constant dense<0.000000e+00> : vector<64x256xf32>
    %52 = tpu.matmul %51, %49, %cst_22 {dimension_numbers = #tpu.dot_dimension_numbers<[1], [0], [0], [1], [0, 0, 1, 1], [], []>} : vector<64x160xbf16>, vector<160x256xbf16>, vector<64x256xf32> -> vector<64x256xf32>
    %c0_23 = arith.constant 0 : index
    %c0_24 = arith.constant 0 : index
    %c0_25 = arith.constant 0 : index
    %53 = vector.load %arg9[%c0_23, %c0_24, %c0_25] : memref<4x64x1xf32, #tpu.memory_space<vmem>>, vector<1x64x1xf32>
    %54 = vector.shape_cast %53 : vector<1x64x1xf32> to vector<64x1xf32>
    %55 = vector.broadcast %54 : vector<64x1xf32> to vector<64x256xf32>
    %56 = arith.addf %52, %55 : vector<64x256xf32>
    %57 = vector.extract_strided_slice %56 {offsets = [0, 0], sizes = [32, 256], strides = [1, 1]} : vector<64x256xf32> to vector<32x256xf32>
    %58 = math.tanh %57 : vector<32x256xf32>
    %59 = vector.extract_strided_slice %56 {offsets = [32, 0], sizes = [32, 256], strides = [1, 1]} : vector<64x256xf32> to vector<32x256xf32>
    %60 = arith.negf %59 : vector<32x256xf32>
    %61 = math.exp %60 : vector<32x256xf32>
    %cst_26 = arith.constant 1.000000e+00 : f32
    %62 = vector.broadcast %cst_26 : f32 to vector<32x256xf32>
    %63 = arith.addf %62, %61 : vector<32x256xf32>
    %64 = arith.divf %62, %63 : vector<32x256xf32>
    %65 = arith.mulf %58, %64 : vector<32x256xf32>
    %66 = arith.truncf %65 : vector<32x256xf32> to vector<32x256xbf16>
    %c0_27 = arith.constant 0 : index
    %c0_28 = arith.constant 0 : index
    %c0_29 = arith.constant 0 : index
    %67 = vector.load %arg6[%c0_27, %c0_28, %c0_29] : memref<4x64x32xbf16, #tpu.memory_space<vmem>>, vector<1x64x32xbf16>
    %68 = vector.shape_cast %67 : vector<1x64x32xbf16> to vector<64x32xbf16>
    %cst_30 = arith.constant dense<0.000000e+00> : vector<64x256xf32>
    %69 = tpu.matmul %68, %66, %cst_30 {dimension_numbers = #tpu.dot_dimension_numbers<[1], [0], [0], [1], [0, 0, 1, 1], [], []>} : vector<64x32xbf16>, vector<32x256xbf16>, vector<64x256xf32> -> vector<64x256xf32>
    %c0_31 = arith.constant 0 : index
    %c0_32 = arith.constant 0 : index
    %c0_33 = arith.constant 0 : index
    %70 = vector.load %arg10[%c0_31, %c0_32, %c0_33] : memref<4x64x1xf32, #tpu.memory_space<vmem>>, vector<1x64x1xf32>
    %71 = vector.shape_cast %70 : vector<1x64x1xf32> to vector<64x1xf32>
    %72 = vector.broadcast %71 : vector<64x1xf32> to vector<64x256xf32>
    %73 = arith.addf %69, %72 : vector<64x256xf32>
    %74 = vector.extract_strided_slice %73 {offsets = [0, 0], sizes = [32, 256], strides = [1, 1]} : vector<64x256xf32> to vector<32x256xf32>
    %75 = arith.addf %39, %74 : vector<32x256xf32>
    %76 = vector.extract_strided_slice %73 {offsets = [32, 0], sizes = [32, 256], strides = [1, 1]} : vector<64x256xf32> to vector<32x256xf32>
    %77 = arith.addf %76, %15 : vector<32x256xf32>
    %cst_34 = arith.constant 0.707106769 : f32
    %78 = vector.broadcast %cst_34 : f32 to vector<32x256xf32>
    %79 = arith.mulf %77, %78 : vector<32x256xf32>
    %c4_i32_35 = arith.constant 4 : i32
    %80 = tpu.dynamic_rotate %79 by %c4_i32_35 dim 1 : vector<32x256xf32>, i32 -> vector<32x256xf32>
    %cst_36 = arith.constant 0.000000e+00 : f32
    %81 = vector.broadcast %cst_36 : f32 to vector<32x256xf32>
    %82 = arith.select %38, %80, %81 : vector<32x256xi1>, vector<32x256xf32>
    %83 = arith.truncf %82 : vector<32x256xf32> to vector<32x256xbf16>
    %c2_i32_37 = arith.constant 2 : i32
    %84 = tpu.dynamic_rotate %79 by %c2_i32_37 dim 1 : vector<32x256xf32>, i32 -> vector<32x256xf32>
    %cst_38 = arith.constant 0.000000e+00 : f32
    %85 = vector.broadcast %cst_38 : f32 to vector<32x256xf32>
    %86 = arith.select %36, %84, %85 : vector<32x256xi1>, vector<32x256xf32>
    %87 = arith.truncf %86 : vector<32x256xf32> to vector<32x256xbf16>
    %88 = arith.truncf %79 : vector<32x256xf32> to vector<32x256xbf16>
    %89 = tpu.concatenate %83, %87, %88, %10 in 0 : vector<32x256xbf16>, vector<32x256xbf16>, vector<32x256xbf16>, vector<64x256xbf16> -> vector<160x256xbf16>
    %c1 = arith.constant 1 : index
    %c0_39 = arith.constant 0 : index
    %c0_40 = arith.constant 0 : index
    %90 = vector.load %arg5[%c1, %c0_39, %c0_40] : memref<4x64x160xbf16, #tpu.memory_space<vmem>>, vector<1x64x160xbf16>
    %91 = vector.shape_cast %90 : vector<1x64x160xbf16> to vector<64x160xbf16>
    %cst_41 = arith.constant dense<0.000000e+00> : vector<64x256xf32>
    %92 = tpu.matmul %91, %89, %cst_41 {dimension_numbers = #tpu.dot_dimension_numbers<[1], [0], [0], [1], [0, 0, 1, 1], [], []>} : vector<64x160xbf16>, vector<160x256xbf16>, vector<64x256xf32> -> vector<64x256xf32>
    %c1_42 = arith.constant 1 : index
    %c0_43 = arith.constant 0 : index
    %c0_44 = arith.constant 0 : index
    %93 = vector.load %arg9[%c1_42, %c0_43, %c0_44] : memref<4x64x1xf32, #tpu.memory_space<vmem>>, vector<1x64x1xf32>
    %94 = vector.shape_cast %93 : vector<1x64x1xf32> to vector<64x1xf32>
    %95 = vector.broadcast %94 : vector<64x1xf32> to vector<64x256xf32>
    %96 = arith.addf %92, %95 : vector<64x256xf32>
    %97 = vector.extract_strided_slice %96 {offsets = [0, 0], sizes = [32, 256], strides = [1, 1]} : vector<64x256xf32> to vector<32x256xf32>
    %98 = math.tanh %97 : vector<32x256xf32>
    %99 = vector.extract_strided_slice %96 {offsets = [32, 0], sizes = [32, 256], strides = [1, 1]} : vector<64x256xf32> to vector<32x256xf32>
    %100 = arith.negf %99 : vector<32x256xf32>
    %101 = math.exp %100 : vector<32x256xf32>
    %cst_45 = arith.constant 1.000000e+00 : f32
    %102 = vector.broadcast %cst_45 : f32 to vector<32x256xf32>
    %103 = arith.addf %102, %101 : vector<32x256xf32>
    %104 = arith.divf %102, %103 : vector<32x256xf32>
    %105 = arith.mulf %98, %104 : vector<32x256xf32>
    %106 = arith.truncf %105 : vector<32x256xf32> to vector<32x256xbf16>
    %c1_46 = arith.constant 1 : index
    %c0_47 = arith.constant 0 : index
    %c0_48 = arith.constant 0 : index
    %107 = vector.load %arg6[%c1_46, %c0_47, %c0_48] : memref<4x64x32xbf16, #tpu.memory_space<vmem>>, vector<1x64x32xbf16>
    %108 = vector.shape_cast %107 : vector<1x64x32xbf16> to vector<64x32xbf16>
    %cst_49 = arith.constant dense<0.000000e+00> : vector<64x256xf32>
    %109 = tpu.matmul %108, %106, %cst_49 {dimension_numbers = #tpu.dot_dimension_numbers<[1], [0], [0], [1], [0, 0, 1, 1], [], []>} : vector<64x32xbf16>, vector<32x256xbf16>, vector<64x256xf32> -> vector<64x256xf32>
    %c1_50 = arith.constant 1 : index
    %c0_51 = arith.constant 0 : index
    %c0_52 = arith.constant 0 : index
    %110 = vector.load %arg10[%c1_50, %c0_51, %c0_52] : memref<4x64x1xf32, #tpu.memory_space<vmem>>, vector<1x64x1xf32>
    %111 = vector.shape_cast %110 : vector<1x64x1xf32> to vector<64x1xf32>
    %112 = vector.broadcast %111 : vector<64x1xf32> to vector<64x256xf32>
    %113 = arith.addf %109, %112 : vector<64x256xf32>
    %114 = vector.extract_strided_slice %113 {offsets = [0, 0], sizes = [32, 256], strides = [1, 1]} : vector<64x256xf32> to vector<32x256xf32>
    %115 = arith.addf %75, %114 : vector<32x256xf32>
    %116 = vector.extract_strided_slice %113 {offsets = [32, 0], sizes = [32, 256], strides = [1, 1]} : vector<64x256xf32> to vector<32x256xf32>
    %117 = arith.addf %116, %79 : vector<32x256xf32>
    %cst_53 = arith.constant 0.707106769 : f32
    %118 = vector.broadcast %cst_53 : f32 to vector<32x256xf32>
    %119 = arith.mulf %117, %118 : vector<32x256xf32>
    %c2_i32_54 = arith.constant 2 : i32
    %120 = tpu.dynamic_rotate %119 by %c2_i32_54 dim 1 : vector<32x256xf32>, i32 -> vector<32x256xf32>
    %cst_55 = arith.constant 0.000000e+00 : f32
    %121 = vector.broadcast %cst_55 : f32 to vector<32x256xf32>
    %122 = arith.select %36, %120, %121 : vector<32x256xi1>, vector<32x256xf32>
    %123 = arith.truncf %122 : vector<32x256xf32> to vector<32x256xbf16>
    %c1_i32_56 = arith.constant 1 : i32
    %124 = tpu.dynamic_rotate %119 by %c1_i32_56 dim 1 : vector<32x256xf32>, i32 -> vector<32x256xf32>
    %cst_57 = arith.constant 0.000000e+00 : f32
    %125 = vector.broadcast %cst_57 : f32 to vector<32x256xf32>
    %126 = arith.select %34, %124, %125 : vector<32x256xi1>, vector<32x256xf32>
    %127 = arith.truncf %126 : vector<32x256xf32> to vector<32x256xbf16>
    %128 = arith.truncf %119 : vector<32x256xf32> to vector<32x256xbf16>
    %129 = tpu.concatenate %123, %127, %128, %10 in 0 : vector<32x256xbf16>, vector<32x256xbf16>, vector<32x256xbf16>, vector<64x256xbf16> -> vector<160x256xbf16>
    %c2 = arith.constant 2 : index
    %c0_58 = arith.constant 0 : index
    %c0_59 = arith.constant 0 : index
    %130 = vector.load %arg5[%c2, %c0_58, %c0_59] : memref<4x64x160xbf16, #tpu.memory_space<vmem>>, vector<1x64x160xbf16>
    %131 = vector.shape_cast %130 : vector<1x64x160xbf16> to vector<64x160xbf16>
    %cst_60 = arith.constant dense<0.000000e+00> : vector<64x256xf32>
    %132 = tpu.matmul %131, %129, %cst_60 {dimension_numbers = #tpu.dot_dimension_numbers<[1], [0], [0], [1], [0, 0, 1, 1], [], []>} : vector<64x160xbf16>, vector<160x256xbf16>, vector<64x256xf32> -> vector<64x256xf32>
    %c2_61 = arith.constant 2 : index
    %c0_62 = arith.constant 0 : index
    %c0_63 = arith.constant 0 : index
    %133 = vector.load %arg9[%c2_61, %c0_62, %c0_63] : memref<4x64x1xf32, #tpu.memory_space<vmem>>, vector<1x64x1xf32>
    %134 = vector.shape_cast %133 : vector<1x64x1xf32> to vector<64x1xf32>
    %135 = vector.broadcast %134 : vector<64x1xf32> to vector<64x256xf32>
    %136 = arith.addf %132, %135 : vector<64x256xf32>
    %137 = vector.extract_strided_slice %136 {offsets = [0, 0], sizes = [32, 256], strides = [1, 1]} : vector<64x256xf32> to vector<32x256xf32>
    %138 = math.tanh %137 : vector<32x256xf32>
    %139 = vector.extract_strided_slice %136 {offsets = [32, 0], sizes = [32, 256], strides = [1, 1]} : vector<64x256xf32> to vector<32x256xf32>
    %140 = arith.negf %139 : vector<32x256xf32>
    %141 = math.exp %140 : vector<32x256xf32>
    %cst_64 = arith.constant 1.000000e+00 : f32
    %142 = vector.broadcast %cst_64 : f32 to vector<32x256xf32>
    %143 = arith.addf %142, %141 : vector<32x256xf32>
    %144 = arith.divf %142, %143 : vector<32x256xf32>
    %145 = arith.mulf %138, %144 : vector<32x256xf32>
    %146 = arith.truncf %145 : vector<32x256xf32> to vector<32x256xbf16>
    %c2_65 = arith.constant 2 : index
    %c0_66 = arith.constant 0 : index
    %c0_67 = arith.constant 0 : index
    %147 = vector.load %arg6[%c2_65, %c0_66, %c0_67] : memref<4x64x32xbf16, #tpu.memory_space<vmem>>, vector<1x64x32xbf16>
    %148 = vector.shape_cast %147 : vector<1x64x32xbf16> to vector<64x32xbf16>
    %cst_68 = arith.constant dense<0.000000e+00> : vector<64x256xf32>
    %149 = tpu.matmul %148, %146, %cst_68 {dimension_numbers = #tpu.dot_dimension_numbers<[1], [0], [0], [1], [0, 0, 1, 1], [], []>} : vector<64x32xbf16>, vector<32x256xbf16>, vector<64x256xf32> -> vector<64x256xf32>
    %c2_69 = arith.constant 2 : index
    %c0_70 = arith.constant 0 : index
    %c0_71 = arith.constant 0 : index
    %150 = vector.load %arg10[%c2_69, %c0_70, %c0_71] : memref<4x64x1xf32, #tpu.memory_space<vmem>>, vector<1x64x1xf32>
    %151 = vector.shape_cast %150 : vector<1x64x1xf32> to vector<64x1xf32>
    %152 = vector.broadcast %151 : vector<64x1xf32> to vector<64x256xf32>
    %153 = arith.addf %149, %152 : vector<64x256xf32>
    %154 = vector.extract_strided_slice %153 {offsets = [0, 0], sizes = [32, 256], strides = [1, 1]} : vector<64x256xf32> to vector<32x256xf32>
    %155 = arith.addf %115, %154 : vector<32x256xf32>
    %156 = vector.extract_strided_slice %153 {offsets = [32, 0], sizes = [32, 256], strides = [1, 1]} : vector<64x256xf32> to vector<32x256xf32>
    %157 = arith.addf %156, %119 : vector<32x256xf32>
    %cst_72 = arith.constant 0.707106769 : f32
    %158 = vector.broadcast %cst_72 : f32 to vector<32x256xf32>
    %159 = arith.mulf %157, %158 : vector<32x256xf32>
    %c4_i32_73 = arith.constant 4 : i32
    %160 = tpu.dynamic_rotate %159 by %c4_i32_73 dim 1 : vector<32x256xf32>, i32 -> vector<32x256xf32>
    %cst_74 = arith.constant 0.000000e+00 : f32
    %161 = vector.broadcast %cst_74 : f32 to vector<32x256xf32>
    %162 = arith.select %38, %160, %161 : vector<32x256xi1>, vector<32x256xf32>
    %163 = arith.truncf %162 : vector<32x256xf32> to vector<32x256xbf16>
    %c2_i32_75 = arith.constant 2 : i32
    %164 = tpu.dynamic_rotate %159 by %c2_i32_75 dim 1 : vector<32x256xf32>, i32 -> vector<32x256xf32>
    %cst_76 = arith.constant 0.000000e+00 : f32
    %165 = vector.broadcast %cst_76 : f32 to vector<32x256xf32>
    %166 = arith.select %36, %164, %165 : vector<32x256xi1>, vector<32x256xf32>
    %167 = arith.truncf %166 : vector<32x256xf32> to vector<32x256xbf16>
    %168 = arith.truncf %159 : vector<32x256xf32> to vector<32x256xbf16>
    %169 = tpu.concatenate %163, %167, %168, %10 in 0 : vector<32x256xbf16>, vector<32x256xbf16>, vector<32x256xbf16>, vector<64x256xbf16> -> vector<160x256xbf16>
    %c3 = arith.constant 3 : index
    %c0_77 = arith.constant 0 : index
    %c0_78 = arith.constant 0 : index
    %170 = vector.load %arg5[%c3, %c0_77, %c0_78] : memref<4x64x160xbf16, #tpu.memory_space<vmem>>, vector<1x64x160xbf16>
    %171 = vector.shape_cast %170 : vector<1x64x160xbf16> to vector<64x160xbf16>
    %cst_79 = arith.constant dense<0.000000e+00> : vector<64x256xf32>
    %172 = tpu.matmul %171, %169, %cst_79 {dimension_numbers = #tpu.dot_dimension_numbers<[1], [0], [0], [1], [0, 0, 1, 1], [], []>} : vector<64x160xbf16>, vector<160x256xbf16>, vector<64x256xf32> -> vector<64x256xf32>
    %c3_80 = arith.constant 3 : index
    %c0_81 = arith.constant 0 : index
    %c0_82 = arith.constant 0 : index
    %173 = vector.load %arg9[%c3_80, %c0_81, %c0_82] : memref<4x64x1xf32, #tpu.memory_space<vmem>>, vector<1x64x1xf32>
    %174 = vector.shape_cast %173 : vector<1x64x1xf32> to vector<64x1xf32>
    %175 = vector.broadcast %174 : vector<64x1xf32> to vector<64x256xf32>
    %176 = arith.addf %172, %175 : vector<64x256xf32>
    %177 = vector.extract_strided_slice %176 {offsets = [0, 0], sizes = [32, 256], strides = [1, 1]} : vector<64x256xf32> to vector<32x256xf32>
    %178 = math.tanh %177 : vector<32x256xf32>
    %179 = vector.extract_strided_slice %176 {offsets = [32, 0], sizes = [32, 256], strides = [1, 1]} : vector<64x256xf32> to vector<32x256xf32>
    %180 = arith.negf %179 : vector<32x256xf32>
    %181 = math.exp %180 : vector<32x256xf32>
    %cst_83 = arith.constant 1.000000e+00 : f32
    %182 = vector.broadcast %cst_83 : f32 to vector<32x256xf32>
    %183 = arith.addf %182, %181 : vector<32x256xf32>
    %184 = arith.divf %182, %183 : vector<32x256xf32>
    %185 = arith.mulf %178, %184 : vector<32x256xf32>
    %186 = arith.truncf %185 : vector<32x256xf32> to vector<32x256xbf16>
    %c3_84 = arith.constant 3 : index
    %c0_85 = arith.constant 0 : index
    %c0_86 = arith.constant 0 : index
    %187 = vector.load %arg6[%c3_84, %c0_85, %c0_86] : memref<4x64x32xbf16, #tpu.memory_space<vmem>>, vector<1x64x32xbf16>
    %188 = vector.shape_cast %187 : vector<1x64x32xbf16> to vector<64x32xbf16>
    %189 = vector.extract_strided_slice %188 {offsets = [0, 0], sizes = [32, 32], strides = [1, 1]} : vector<64x32xbf16> to vector<32x32xbf16>
    %cst_87 = arith.constant dense<0.000000e+00> : vector<32x256xf32>
    %190 = tpu.matmul %189, %186, %cst_87 {dimension_numbers = #tpu.dot_dimension_numbers<[1], [0], [0], [1], [0, 0, 1, 1], [], []>} : vector<32x32xbf16>, vector<32x256xbf16>, vector<32x256xf32> -> vector<32x256xf32>
    %c3_88 = arith.constant 3 : index
    %c0_89 = arith.constant 0 : index
    %c0_90 = arith.constant 0 : index
    %191 = vector.load %arg10[%c3_88, %c0_89, %c0_90] : memref<4x64x1xf32, #tpu.memory_space<vmem>>, vector<1x64x1xf32>
    %192 = vector.shape_cast %191 : vector<1x64x1xf32> to vector<64x1xf32>
    %193 = vector.extract_strided_slice %192 {offsets = [0, 0], sizes = [32, 1], strides = [1, 1]} : vector<64x1xf32> to vector<32x1xf32>
    %194 = vector.broadcast %193 : vector<32x1xf32> to vector<32x256xf32>
    %195 = arith.addf %190, %194 : vector<32x256xf32>
    %196 = arith.addf %155, %195 : vector<32x256xf32>
    %cst_91 = arith.constant 5.000000e-01 : f32
    %197 = vector.broadcast %cst_91 : f32 to vector<32x256xf32>
    %198 = arith.mulf %196, %197 : vector<32x256xf32>
    %cst_92 = arith.constant 0.000000e+00 : f32
    %199 = vector.broadcast %cst_92 : f32 to vector<32x256xf32>
    %200 = arith.maximumf %198, %199 : vector<32x256xf32>
    %c0_93 = arith.constant 0 : index
    %c0_94 = arith.constant 0 : index
    %201 = vector.load %arg7[%c0_93, %c0_94] : memref<32x32xbf16, #tpu.memory_space<vmem>>, vector<32x32xbf16>
    %202 = arith.truncf %200 : vector<32x256xf32> to vector<32x256xbf16>
    %cst_95 = arith.constant dense<0.000000e+00> : vector<32x256xf32>
    %203 = tpu.matmul %201, %202, %cst_95 {dimension_numbers = #tpu.dot_dimension_numbers<[1], [0], [0], [1], [0, 0, 1, 1], [], []>} : vector<32x32xbf16>, vector<32x256xbf16>, vector<32x256xf32> -> vector<32x256xf32>
    %204 = vector.broadcast %3 : vector<32x1xf32> to vector<32x256xf32>
    %205 = arith.addf %203, %204 : vector<32x256xf32>
    %cst_96 = arith.constant 0.000000e+00 : f32
    %206 = vector.broadcast %cst_96 : f32 to vector<32x256xf32>
    %207 = arith.maximumf %205, %206 : vector<32x256xf32>
    %c0_97 = arith.constant 0 : index
    %c0_98 = arith.constant 0 : index
    %208 = vector.load %arg8[%c0_97, %c0_98] : memref<16x32xbf16, #tpu.memory_space<vmem>>, vector<16x32xbf16>
    %209 = arith.truncf %207 : vector<32x256xf32> to vector<32x256xbf16>
    %cst_99 = arith.constant dense<0.000000e+00> : vector<16x256xf32>
    %210 = tpu.matmul %208, %209, %cst_99 {dimension_numbers = #tpu.dot_dimension_numbers<[1], [0], [0], [1], [0, 0, 1, 1], [], []>} : vector<16x32xbf16>, vector<32x256xbf16>, vector<16x256xf32> -> vector<16x256xf32>
    %211 = vector.broadcast %4 : vector<16x1xf32> to vector<16x256xf32>
    %212 = arith.addf %210, %211 : vector<16x256xf32>
    %cst_100 = arith.constant dense<0xFF800000> : vector<256xf32>
    %213 = vector.multi_reduction <maximumf>, %212, %cst_100 [0] : vector<16x256xf32> to vector<256xf32>
    %214 = vector.shape_cast %213 : vector<256xf32> to vector<1x256xf32>
    %215 = vector.broadcast %214 : vector<1x256xf32> to vector<16x256xf32>
    %216 = arith.subf %212, %215 : vector<16x256xf32>
    %217 = math.exp %216 : vector<16x256xf32>
    %cst_101 = arith.constant dense<0.000000e+00> : vector<256xf32>
    %218 = vector.multi_reduction <add>, %217, %cst_101 [0] : vector<16x256xf32> to vector<256xf32>
    %219 = vector.shape_cast %218 : vector<256xf32> to vector<1x256xf32>
    %220 = tpu.reciprocal %219 {approx = true} : vector<1x256xf32> -> vector<1x256xf32>
    %221 = vector.broadcast %220 : vector<1x256xf32> to vector<16x256xf32>
    %222 = arith.mulf %217, %221 : vector<16x256xf32>
    %c0_102 = arith.constant 0 : index
    %c0_103 = arith.constant 0 : index
    %223 = vector.load %arg12[%c0_102, %c0_103] : memref<16x256xf32, #tpu.memory_space<vmem>>, vector<16x256xf32>
    tpu.vector_store %arg12[%c0_102, %c0_103], %222 {strides = array<i32>} : memref<16x256xf32, #tpu.memory_space<vmem>>, vector<16x256xf32>,
    return
  }
  func.func @transform_0(%arg0: i32) -> (i32, i32) {
    %c0_i32 = arith.constant 0 : i32
    %c0_i32_0 = arith.constant 0 : i32
    %c0_i32_1 = arith.constant 0 : i32
    return %c0_i32, %c0_i32_0 : i32, i32
  }
  func.func @transform_1(%arg0: i32) -> (i32, i32) {
    %c0_i32 = arith.constant 0 : i32
    %c0_i32_0 = arith.constant 0 : i32
    %c0_i32_1 = arith.constant 0 : i32
    return %c0_i32, %c0_i32_0 : i32, i32
  }
  func.func @transform_2(%arg0: i32) -> (i32, i32) {
    %c0_i32 = arith.constant 0 : i32
    %c0_i32_0 = arith.constant 0 : i32
    %c0_i32_1 = arith.constant 0 : i32
    return %c0_i32, %c0_i32_0 : i32, i32
  }
  func.func @transform_3(%arg0: i32) -> (i32, i32) {
    %c0_i32 = arith.constant 0 : i32
    %c0_i32_0 = arith.constant 0 : i32
    %c0_i32_1 = arith.constant 0 : i32
    return %c0_i32, %c0_i32_0 : i32, i32
  }
  func.func @transform_4(%arg0: i32) -> (i32, i32, i32) {
    %c0_i32 = arith.constant 0 : i32
    %c0_i32_0 = arith.constant 0 : i32
    %c0_i32_1 = arith.constant 0 : i32
    %c0_i32_2 = arith.constant 0 : i32
    return %c0_i32, %c0_i32_0, %c0_i32_1 : i32, i32, i32
  }
  func.func @transform_5(%arg0: i32) -> (i32, i32, i32) {
    %c0_i32 = arith.constant 0 : i32
    %c0_i32_0 = arith.constant 0 : i32
    %c0_i32_1 = arith.constant 0 : i32
    %c0_i32_2 = arith.constant 0 : i32
    return %c0_i32, %c0_i32_0, %c0_i32_1 : i32, i32, i32
  }
  func.func @transform_6(%arg0: i32) -> (i32, i32) {
    %c0_i32 = arith.constant 0 : i32
    %c0_i32_0 = arith.constant 0 : i32
    %c0_i32_1 = arith.constant 0 : i32
    return %c0_i32, %c0_i32_0 : i32, i32
  }
  func.func @transform_7(%arg0: i32) -> (i32, i32) {
    %c0_i32 = arith.constant 0 : i32
    %c0_i32_0 = arith.constant 0 : i32
    %c0_i32_1 = arith.constant 0 : i32
    return %c0_i32, %c0_i32_0 : i32, i32
  }
  func.func @transform_8(%arg0: i32) -> (i32, i32, i32) {
    %c0_i32 = arith.constant 0 : i32
    %c0_i32_0 = arith.constant 0 : i32
    %c0_i32_1 = arith.constant 0 : i32
    %c0_i32_2 = arith.constant 0 : i32
    return %c0_i32, %c0_i32_0, %c0_i32_1 : i32, i32, i32
  }
  func.func @transform_9(%arg0: i32) -> (i32, i32, i32) {
    %c0_i32 = arith.constant 0 : i32
    %c0_i32_0 = arith.constant 0 : i32
    %c0_i32_1 = arith.constant 0 : i32
    %c0_i32_2 = arith.constant 0 : i32
    return %c0_i32, %c0_i32_0, %c0_i32_1 : i32, i32, i32
  }
  func.func @transform_10(%arg0: i32) -> (i32, i32) {
    %c0_i32 = arith.constant 0 : i32
    %c0_i32_0 = arith.constant 0 : i32
    %c0_i32_1 = arith.constant 0 : i32
    return %c0_i32, %c0_i32_0 : i32, i32
  }
  func.func @transform_11(%arg0: i32) -> (i32, i32) {
    %c0_i32 = arith.constant 0 : i32
    %c0_i32_0 = arith.constant 0 : i32
    %c0_i32_1 = arith.constant 0 : i32
    return %c0_i32, %c0_i32_0 : i32, i32
  }
}

</mosaic_0001>

<llo_original>
// kernel: tpu_custom_call.1
$region0: #{tpu_custom_call.1}
  #allocation0 [shape = 'u32[]', space=smem, size = 0x4, offset = 0x4, fixed_abs, tag = 'smem constant byte address 0x4 - core index']
  #allocation1 [shape = 'u32[144,128]{1,0:T(1,128)}', space=vmem, size = 0x12000, scoped, tag = 'internal scratch']
  %s0 = inlined_call_operand.vmem [shape: bf16[16,256], index: 0, kind: input, shape index: {}]
  %s1 = inlined_call_operand.vmem [shape: bf16[512,256], index: 1, kind: input, shape index: {}]
  %s2 = inlined_call_operand.hbm [shape: bf16[64,512], index: 2, kind: input, shape index: {}]
  %s3 = inlined_call_operand.vmem [shape: bf16[32,16], index: 3, kind: input, shape index: {}]
  %s4 = inlined_call_operand.vmem [shape: bf16[4,64,160], index: 4, kind: input, shape index: {}]
  %s5 = inlined_call_operand.vmem [shape: bf16[4,64,32], index: 5, kind: input, shape index: {}]
  %s6 = inlined_call_operand.vmem [shape: bf16[32,32], index: 6, kind: input, shape index: {}]
  %s7 = inlined_call_operand.vmem [shape: bf16[16,32], index: 7, kind: input, shape index: {}]
  %s8 = inlined_call_operand.vmem [shape: f32[4,64,1], index: 8, kind: input, shape index: {}]
  %s9 = inlined_call_operand.vmem [shape: f32[4,64,1], index: 9, kind: input, shape index: {}]
  %s10 = inlined_call_operand.vmem [shape: f32[144,1], index: 10, kind: input, shape index: {}]
  %s11 = inlined_call_operand.hbm [shape: f32[16,256], index: 11, kind: output, shape index: {}]
  %s12 = sld [smem:[#allocation0]]
  $region58: #{tpu_custom_call.1} parent=0
    _
  %s14 = ssub.s32 1, %s12
  %s15 = scalar_select 0, %s14, %s12
  $region1: #{tpu_custom_call.1} parent=0
    #allocation2 [shape = 'u8[65536]{0}', space=vmem, size = 0x10000, scoped, tag = 'input window, operand 2, single buffered']
    #allocation3 [shape = 's32[1]{0}', space=sflag, size = 0x4, scoped, tag = 'scoped memory for tpu_custom_call.1']
    #allocation4 [shape = 's32[1]{0}', space=sflag, size = 0x4, scoped, tag = 'scoped memory for tpu_custom_call.1']
    #allocation5 [shape = 'u8[16384]{0}', space=vmem, size = 0x4000, scoped, tag = 'output window, operand 0, single buffered']
    %16 = vsyncpa [#allocation3], 0
    %17 = vsyncpa [#allocation4], 0
    // Predicated region
    $region2: #{tpu_custom_call.1} parent=1 // pred_check
      _
    $region3: #{tpu_custom_call.1} parent=1 // pred_check_branch
      %19 = sbr.rel (0) target = $region5
    $region4: #{tpu_custom_call.1} parent=1 // pred_region
      _
    $region5: #{tpu_custom_call.1} parent=1 // pred_fallthru
      _
    // Predicated region
    $region6: #{tpu_custom_call.1} parent=1 // pred_check
      _
    $region7: #{tpu_custom_call.1} parent=1 // pred_check_branch
      %21 = sbr.rel (0) target = $region9
    $region8: #{tpu_custom_call.1} parent=1 // pred_region
      _
    $region9: #{tpu_custom_call.1} parent=1 // pred_fallthru
      _
    // Predicated region
    $region10: #{tpu_custom_call.1} parent=1 // pred_check
      _
    $region11: #{tpu_custom_call.1} parent=1 // pred_check_branch
      %23 = sbr.rel (0) target = $region13
    $region12: #{tpu_custom_call.1} parent=1 // pred_region
      %s25 = ssub.s32 2048, 2048
      %26 = vsyncadd [#allocation3], %s25
      %s27 = sshll.u32 [#allocation2], 4
      %s28 = int_to_ptr.vmem [resolvable:$true] %s27
      %33 = dma.hbm_to_vmem [thread:$0]  %s2, 2048, %s28, [#allocation3], 256, 256, 16
    $region13: #{tpu_custom_call.1} parent=1 // pred_fallthru
      _
    // Predicated region
    $region14: #{tpu_custom_call.1} parent=1 // pred_check
      _
    $region15: #{tpu_custom_call.1} parent=1 // pred_check_branch
      %35 = sbr.rel (0) target = $region17
    $region16: #{tpu_custom_call.1} parent=1 // pred_region
      _
    $region17: #{tpu_custom_call.1} parent=1 // pred_fallthru
      _
    // Predicated region
    $region18: #{tpu_custom_call.1} parent=1 // pred_check
      _
    $region19: #{tpu_custom_call.1} parent=1 // pred_check_branch
      %37 = sbr.rel (0) target = $region21
    $region20: #{tpu_custom_call.1} parent=1 // pred_region
      _
    $region21: #{tpu_custom_call.1} parent=1 // pred_fallthru
      _
    // Predicated region
    $region22: #{tpu_custom_call.1} parent=1 // pred_check
      _
    $region23: #{tpu_custom_call.1} parent=1 // pred_check_branch
      %39 = sbr.rel (0) target = $region25
    $region24: #{tpu_custom_call.1} parent=1 // pred_region
      _
    $region25: #{tpu_custom_call.1} parent=1 // pred_fallthru
      _
    // Predicated region
    $region26: #{tpu_custom_call.1} parent=1 // pred_check
      _
    $region27: #{tpu_custom_call.1} parent=1 // pred_check_branch
      %41 = sbr.rel (0) target = $region29
    $region28: #{tpu_custom_call.1} parent=1 // pred_region
      _
    $region29: #{tpu_custom_call.1} parent=1 // pred_fallthru
      _
    // Predicated region
    $region30: #{tpu_custom_call.1} parent=1 // pred_check
      _
    $region31: #{tpu_custom_call.1} parent=1 // pred_check_branch
      %43 = sbr.rel (0) target = $region33
    $region32: #{tpu_custom_call.1} parent=1 // pred_region
      _
    $region33: #{tpu_custom_call.1} parent=1 // pred_fallthru
      _
    // Predicated region
    $region34: #{tpu_custom_call.1} parent=1 // pred_check
      _
    $region35: #{tpu_custom_call.1} parent=1 // pred_check_branch
      %45 = sbr.rel (0) target = $region37
    $region36: #{tpu_custom_call.1} parent=1 // pred_region
      _
    $region37: #{tpu_custom_call.1} parent=1 // pred_fallthru
      _
    // Predicated region
    $region38: #{tpu_custom_call.1} parent=1 // pred_check
      _
    $region39: #{tpu_custom_call.1} parent=1 // pred_check_branch
      %47 = sbr.rel (0) target = $region41
    $region40: #{tpu_custom_call.1} parent=1 // pred_region
      _
    $region41: #{tpu_custom_call.1} parent=1 // pred_fallthru
      _
    // Predicated region
    $region42: #{tpu_custom_call.1} parent=1 // pred_check
      _
    $region43: #{tpu_custom_call.1} parent=1 // pred_check_branch
      %49 = sbr.rel (0) target = $region45
    $region44: #{tpu_custom_call.1} parent=1 // pred_region
      _
    $region45: #{tpu_custom_call.1} parent=1 // pred_fallthru
      _
    // Predicated region
    $region46: #{tpu_custom_call.1} parent=1 // pred_check
      _
    $region47: #{tpu_custom_call.1} parent=1 // pred_check_branch
      %51 = sbr.rel (0) target = $region49
    $region48: #{tpu_custom_call.1} parent=1 // pred_region
      %52 = dma.done [#allocation3], 2048
    $region49: #{tpu_custom_call.1} parent=1 // pred_fallthru
      _
    %v54 = vld [vmem:[%s10] sm:$0xff]
    %v55 = vld [vmem:[%s10 + $0x8] sm:$0xff]
    %v56 = vld [vmem:[%s10 + $0x10] sm:$0xff]
    %v57 = vld [vmem:[%s10 + $0x18] sm:$0xff]
    %v58 = vld [vmem:[%s10 + $0x20] sm:$0xff]
    %v59 = vld [vmem:[%s10 + $0x28] sm:$0xff]
    %v60 = vld [vmem:[%s10 + $0x30] sm:$0xff]
    %v61 = vld [vmem:[%s10 + $0x38] sm:$0xff]
    %v62 = vld [vmem:[%s10 + $0x40] sm:$0xff]
    %v63 = vld [vmem:[%s10 + $0x48] sm:$0xff]
    %v64 = vld [vmem:[%s10 + $0x50] sm:$0xff]
    %v65 = vld [vmem:[%s10 + $0x58] sm:$0xff]
    %v66 = vld [vmem:[%s10 + $0x60] sm:$0xff]
    %v67 = vld [vmem:[%s10 + $0x68] sm:$0xff]
    %v68 = vld [vmem:[%s10 + $0x70] sm:$0xff]
    %v69 = vld [vmem:[%s10 + $0x78] sm:$0xff]
    %v70 = vld [vmem:[%s10 + $0x80] sm:$0xff]
    %v71 = vld [vmem:[%s10 + $0x88] sm:$0xff]
    %v72 = vld [vmem:[#allocation2] sm:$0xff]
    %v73 = vld [vmem:[#allocation2 + $0x8] sm:$0xff]
    %v74 = vld [vmem:[#allocation2 + $0x10] sm:$0xff]
    %v75 = vld [vmem:[#allocation2 + $0x18] sm:$0xff]
    %v76 = vld [vmem:[#allocation2 + $0x20] sm:$0xff]
    %v77 = vld [vmem:[#allocation2 + $0x28] sm:$0xff]
    %v78 = vld [vmem:[#allocation2 + $0x30] sm:$0xff]
    %v79 = vld [vmem:[#allocation2 + $0x38] sm:$0xff]
    %v80 = vld [vmem:[#allocation2 + $0x40] sm:$0xff]
    %v81 = vld [vmem:[#allocation2 + $0x48] sm:$0xff]
    %v82 = vld [vmem:[#allocation2 + $0x50] sm:$0xff]
    %v83 = vld [vmem:[#allocation2 + $0x58] sm:$0xff]
    %v84 = vld [vmem:[#allocation2 + $0x60] sm:$0xff]
    %v85 = vld [vmem:[#allocation2 + $0x68] sm:$0xff]
    %v86 = vld [vmem:[#allocation2 + $0x70] sm:$0xff]
    %v87 = vld [vmem:[#allocation2 + $0x78] sm:$0xff]
    %v88 = vld [vmem:[%s1] sm:$0xff]
    %v89 = vld [vmem:[%s1 + $0x8] sm:$0xff]
    %v90 = vld [vmem:[%s1 + $0x10] sm:$0xff]
    %v91 = vld [vmem:[%s1 + $0x18] sm:$0xff]
    %v92 = vld [vmem:[%s1 + $0x20] sm:$0xff]
    %v93 = vld [vmem:[%s1 + $0x28] sm:$0xff]
    %v94 = vld [vmem:[%s1 + $0x30] sm:$0xff]
    %v95 = vld [vmem:[%s1 + $0x38] sm:$0xff]
    %v96 = vld [vmem:[%s1 + $0x40] sm:$0xff]
    %v97 = vld [vmem:[%s1 + $0x48] sm:$0xff]
    %v98 = vld [vmem:[%s1 + $0x50] sm:$0xff]
    %v99 = vld [vmem:[%s1 + $0x58] sm:$0xff]
    %v100 = vld [vmem:[%s1 + $0x60] sm:$0xff]
    %v101 = vld [vmem:[%s1 + $0x68] sm:$0xff]
    %v102 = vld [vmem:[%s1 + $0x70] sm:$0xff]
    %v103 = vld [vmem:[%s1 + $0x78] sm:$0xff]
    %v104 = vld [vmem:[%s1 + $0x80] sm:$0xff]
    %v105 = vld [vmem:[%s1 + $0x88] sm:$0xff]
    %v106 = vld [vmem:[%s1 + $0x90] sm:$0xff]
    %v107 = vld [vmem:[%s1 + $0x98] sm:$0xff]
    %v108 = vld [vmem:[%s1 + $0xa0] sm:$0xff]
    %v109 = vld [vmem:[%s1 + $0xa8] sm:$0xff]
    %v110 = vld [vmem:[%s1 + $0xb0] sm:$0xff]
    %v111 = vld [vmem:[%s1 + $0xb8] sm:$0xff]
    %v112 = vld [vmem:[%s1 + $0xc0] sm:$0xff]
    %v113 = vld [vmem:[%s1 + $0xc8] sm:$0xff]
    %v114 = vld [vmem:[%s1 + $0xd0] sm:$0xff]
    %v115 = vld [vmem:[%s1 + $0xd8] sm:$0xff]
    %v116 = vld [vmem:[%s1 + $0xe0] sm:$0xff]
    %v117 = vld [vmem:[%s1 + $0xe8] sm:$0xff]
    %v118 = vld [vmem:[%s1 + $0xf0] sm:$0xff]
    %v119 = vld [vmem:[%s1 + $0xf8] sm:$0xff]
    %v120 = vld [vmem:[%s1 + $0x100] sm:$0xff]
    %v121 = vld [vmem:[%s1 + $0x108] sm:$0xff]
    %v122 = vld [vmem:[%s1 + $0x110] sm:$0xff]
    %v123 = vld [vmem:[%s1 + $0x118] sm:$0xff]
    %v124 = vld [vmem:[%s1 + $0x120] sm:$0xff]
    %v125 = vld [vmem:[%s1 + $0x128] sm:$0xff]
    %v126 = vld [vmem:[%s1 + $0x130] sm:$0xff]
    %v127 = vld [vmem:[%s1 + $0x138] sm:$0xff]
    %v128 = vld [vmem:[%s1 + $0x140] sm:$0xff]
    %v129 = vld [vmem:[%s1 + $0x148] sm:$0xff]
    %v130 = vld [vmem:[%s1 + $0x150] sm:$0xff]
    %v131 = vld [vmem:[%s1 + $0x158] sm:$0xff]
    %v132 = vld [vmem:[%s1 + $0x160] sm:$0xff]
    %v133 = vld [vmem:[%s1 + $0x168] sm:$0xff]
    %v134 = vld [vmem:[%s1 + $0x170] sm:$0xff]
    %v135 = vld [vmem:[%s1 + $0x178] sm:$0xff]
    %v136 = vld [vmem:[%s1 + $0x180] sm:$0xff]
    %v137 = vld [vmem:[%s1 + $0x188] sm:$0xff]
    %v138 = vld [vmem:[%s1 + $0x190] sm:$0xff]
    %v139 = vld [vmem:[%s1 + $0x198] sm:$0xff]
    %v140 = vld [vmem:[%s1 + $0x1a0] sm:$0xff]
    %v141 = vld [vmem:[%s1 + $0x1a8] sm:$0xff]
    %v142 = vld [vmem:[%s1 + $0x1b0] sm:$0xff]
    %v143 = vld [vmem:[%s1 + $0x1b8] sm:$0xff]
    %v144 = vld [vmem:[%s1 + $0x1c0] sm:$0xff]
    %v145 = vld [vmem:[%s1 + $0x1c8] sm:$0xff]
    %v146 = vld [vmem:[%s1 + $0x1d0] sm:$0xff]
    %v147 = vld [vmem:[%s1 + $0x1d8] sm:$0xff]
    %v148 = vld [vmem:[%s1 + $0x1e0] sm:$0xff]
    %v149 = vld [vmem:[%s1 + $0x1e8] sm:$0xff]
    %v150 = vld [vmem:[%s1 + $0x1f0] sm:$0xff]
    %v151 = vld [vmem:[%s1 + $0x1f8] sm:$0xff]
    %153 = vset.pattern.permute.xlu0 0
    %154 = vperm.xlu0 %153, %v54
    %v155 = vpop.permute.xlu0 %154
    %158 = vset.pattern.permute.xlu0 0
    %159 = vperm.xlu0 %158, %v55
    %v160 = vpop.permute.xlu0 %159
    %163 = vset.pattern.permute.xlu0 0
    %164 = vperm.xlu0 %163, %v56
    %v165 = vpop.permute.xlu0 %164
    %168 = vset.pattern.permute.xlu0 0
    %169 = vperm.xlu0 %168, %v57
    %v170 = vpop.permute.xlu0 %169
    %173 = vset.pattern.permute.xlu0 0
    %174 = vperm.xlu0 %173, %v58
    %v175 = vpop.permute.xlu0 %174
    %178 = vset.pattern.permute.xlu0 0
    %179 = vperm.xlu0 %178, %v59
    %v180 = vpop.permute.xlu0 %179
    %183 = vset.pattern.permute.xlu0 0
    %184 = vperm.xlu0 %183, %v60
    %v185 = vpop.permute.xlu0 %184
    %188 = vset.pattern.permute.xlu0 0
    %189 = vperm.xlu0 %188, %v61
    %v190 = vpop.permute.xlu0 %189
    %v208 = vunpack.c.l.b16 %v72
    %v209 = vunpack.c.h.b16 %v72
    %v210 = vunpack.c.l.b16 %v73
    %v211 = vunpack.c.h.b16 %v73
    %v212 = vunpack.c.l.b16 %v74
    %v213 = vunpack.c.h.b16 %v74
    %v214 = vunpack.c.l.b16 %v75
    %v215 = vunpack.c.h.b16 %v75
    %v216 = vunpack.c.l.b16 %v76
    %v217 = vunpack.c.h.b16 %v76
    %v218 = vunpack.c.l.b16 %v77
    %v219 = vunpack.c.h.b16 %v77
    %v220 = vunpack.c.l.b16 %v78
    %v221 = vunpack.c.h.b16 %v78
    %v222 = vunpack.c.l.b16 %v79
    %v223 = vunpack.c.h.b16 %v79
    %v224 = vunpack.c.l.b16 %v80
    %v225 = vunpack.c.h.b16 %v80
    %v226 = vunpack.c.l.b16 %v81
    %v227 = vunpack.c.h.b16 %v81
    %v228 = vunpack.c.l.b16 %v82
    %v229 = vunpack.c.h.b16 %v82
    %v230 = vunpack.c.l.b16 %v83
    %v231 = vunpack.c.h.b16 %v83
    %v232 = vunpack.c.l.b16 %v84
    %v233 = vunpack.c.h.b16 %v84
    %v234 = vunpack.c.l.b16 %v85
    %v235 = vunpack.c.h.b16 %v85
    %v236 = vunpack.c.l.b16 %v86
    %v237 = vunpack.c.h.b16 %v86
    %v238 = vunpack.c.l.b16 %v87
    %v239 = vunpack.c.h.b16 %v87
    %v240 = vpack.c.b16 %v212, %v208
    %v241 = vpack.c.b16 %v213, %v209
    %v242 = vpack.c.b16 %v214, %v210
    %v243 = vpack.c.b16 %v215, %v211
    %v244 = vpack.c.b16 %v220, %v216
    %v245 = vpack.c.b16 %v221, %v217
    %v246 = vpack.c.b16 %v222, %v218
    %v247 = vpack.c.b16 %v223, %v219
    %v248 = vpack.c.b16 %v228, %v224
    %v249 = vpack.c.b16 %v229, %v225
    %v250 = vpack.c.b16 %v230, %v226
    %v251 = vpack.c.b16 %v231, %v227
    %v252 = vpack.c.b16 %v236, %v232
    %v253 = vpack.c.b16 %v237, %v233
    %v254 = vpack.c.b16 %v238, %v234
    %v255 = vpack.c.b16 %v239, %v235
    %v336 = vunpack.c.l.b16 %v88
    %v337 = vunpack.c.h.b16 %v88
    %v338 = vunpack.c.l.b16 %v89
    %v339 = vunpack.c.h.b16 %v89
    %v340 = vunpack.c.l.b16 %v90
    %v341 = vunpack.c.h.b16 %v90
    %v342 = vunpack.c.l.b16 %v91
    %v343 = vunpack.c.h.b16 %v91
    %v344 = vunpack.c.l.b16 %v92
    %v345 = vunpack.c.h.b16 %v92
    %v346 = vunpack.c.l.b16 %v93
    %v347 = vunpack.c.h.b16 %v93
    %v348 = vunpack.c.l.b16 %v94
    %v349 = vunpack.c.h.b16 %v94
    %v350 = vunpack.c.l.b16 %v95
    %v351 = vunpack.c.h.b16 %v95
    %v352 = vunpack.c.l.b16 %v96
    %v353 = vunpack.c.h.b16 %v96
    %v354 = vunpack.c.l.b16 %v97
    %v355 = vunpack.c.h.b16 %v97
    %v356 = vunpack.c.l.b16 %v98
    %v357 = vunpack.c.h.b16 %v98
    %v358 = vunpack.c.l.b16 %v99
    %v359 = vunpack.c.h.b16 %v99
    %v360 = vunpack.c.l.b16 %v100
    %v361 = vunpack.c.h.b16 %v100
    %v362 = vunpack.c.l.b16 %v101
    %v363 = vunpack.c.h.b16 %v101
    %v364 = vunpack.c.l.b16 %v102
    %v365 = vunpack.c.h.b16 %v102
    %v366 = vunpack.c.l.b16 %v103
    %v367 = vunpack.c.h.b16 %v103
    %v368 = vunpack.c.l.b16 %v104
    %v369 = vunpack.c.h.b16 %v104
    %v370 = vunpack.c.l.b16 %v105
    %v371 = vunpack.c.h.b16 %v105
    %v372 = vunpack.c.l.b16 %v106
    %v373 = vunpack.c.h.b16 %v106
    %v374 = vunpack.c.l.b16 %v107
    %v375 = vunpack.c.h.b16 %v107
    %v376 = vunpack.c.l.b16 %v108
    %v377 = vunpack.c.h.b16 %v108
    %v378 = vunpack.c.l.b16 %v109
    %v379 = vunpack.c.h.b16 %v109
    %v380 = vunpack.c.l.b16 %v110
    %v381 = vunpack.c.h.b16 %v110
    %v382 = vunpack.c.l.b16 %v111
    %v383 = vunpack.c.h.b16 %v111
    %v384 = vunpack.c.l.b16 %v112
    %v385 = vunpack.c.h.b16 %v112
    %v386 = vunpack.c.l.b16 %v113
    %v387 = vunpack.c.h.b16 %v113
    %v388 = vunpack.c.l.b16 %v114
    %v389 = vunpack.c.h.b16 %v114
    %v390 = vunpack.c.l.b16 %v115
    %v391 = vunpack.c.h.b16 %v115
    %v392 = vunpack.c.l.b16 %v116
    %v393 = vunpack.c.h.b16 %v116
    %v394 = vunpack.c.l.b16 %v117
    %v395 = vunpack.c.h.b16 %v117
    %v396 = vunpack.c.l.b16 %v118
    %v397 = vunpack.c.h.b16 %v118
    %v398 = vunpack.c.l.b16 %v119
    %v399 = vunpack.c.h.b16 %v119
    %v400 = vunpack.c.l.b16 %v120
    %v401 = vunpack.c.h.b16 %v120
    %v402 = vunpack.c.l.b16 %v121
    %v403 = vunpack.c.h.b16 %v121
    %v404 = vunpack.c.l.b16 %v122
    %v405 = vunpack.c.h.b16 %v122
    %v406 = vunpack.c.l.b16 %v123
    %v407 = vunpack.c.h.b16 %v123
    %v408 = vunpack.c.l.b16 %v124
    %v409 = vunpack.c.h.b16 %v124
    %v410 = vunpack.c.l.b16 %v125
    %v411 = vunpack.c.h.b16 %v125
    %v412 = vunpack.c.l.b16 %v126
    %v413 = vunpack.c.h.b16 %v126
    %v414 = vunpack.c.l.b16 %v127
    %v415 = vunpack.c.h.b16 %v127
    %v416 = vunpack.c.l.b16 %v128
    %v417 = vunpack.c.h.b16 %v128
    %v418 = vunpack.c.l.b16 %v129
    %v419 = vunpack.c.h.b16 %v129
    %v420 = vunpack.c.l.b16 %v130
    %v421 = vunpack.c.h.b16 %v130
    %v422 = vunpack.c.l.b16 %v131
    %v423 = vunpack.c.h.b16 %v131
    %v424 = vunpack.c.l.b16 %v132
    %v425 = vunpack.c.h.b16 %v132
    %v426 = vunpack.c.l.b16 %v133
    %v427 = vunpack.c.h.b16 %v133
    %v428 = vunpack.c.l.b16 %v134
    %v429 = vunpack.c.h.b16 %v134
    %v430 = vunpack.c.l.b16 %v135
    %v431 = vunpack.c.h.b16 %v135
    %v432 = vunpack.c.l.b16 %v136
    %v433 = vunpack.c.h.b16 %v136
    %v434 = vunpack.c.l.b16 %v137
    %v435 = vunpack.c.h.b16 %v137
    %v436 = vunpack.c.l.b16 %v138
    %v437 = vunpack.c.h.b16 %v138
    %v438 = vunpack.c.l.b16 %v139
    %v439 = vunpack.c.h.b16 %v139
    %v440 = vunpack.c.l.b16 %v140
    %v441 = vunpack.c.h.b16 %v140
    %v442 = vunpack.c.l.b16 %v141
    %v443 = vunpack.c.h.b16 %v141
    %v444 = vunpack.c.l.b16 %v142
    %v445 = vunpack.c.h.b16 %v142
    %v446 = vunpack.c.l.b16 %v143
    %v447 = vunpack.c.h.b16 %v143
    %v448 = vunpack.c.l.b16 %v144
    %v449 = vunpack.c.h.b16 %v144
    %v450 = vunpack.c.l.b16 %v145
    %v451 = vunpack.c.h.b16 %v145
    %v452 = vunpack.c.l.b16 %v146
    %v453 = vunpack.c.h.b16 %v146
    %v454 = vunpack.c.l.b16 %v147
    %v455 = vunpack.c.h.b16 %v147
    %v456 = vunpack.c.l.b16 %v148
    %v457 = vunpack.c.h.b16 %v148
    %v458 = vunpack.c.l.b16 %v149
    %v459 = vunpack.c.h.b16 %v149
    %v460 = vunpack.c.l.b16 %v150
    %v461 = vunpack.c.h.b16 %v150
    %v462 = vunpack.c.l.b16 %v151
    %v463 = vunpack.c.h.b16 %v151
    %v464 = vpack.c.b16 %v338, %v336
    %v465 = vpack.c.b16 %v339, %v337
    %v466 = vpack.c.b16 %v342, %v340
    %v467 = vpack.c.b16 %v343, %v341
    %v468 = vpack.c.b16 %v346, %v344
    %v469 = vpack.c.b16 %v347, %v345
    %v470 = vpack.c.b16 %v350, %v348
    %v471 = vpack.c.b16 %v351, %v349
    %v472 = vpack.c.b16 %v354, %v352
    %v473 = vpack.c.b16 %v355, %v353
    %v474 = vpack.c.b16 %v358, %v356
    %v475 = vpack.c.b16 %v359, %v357
    %v476 = vpack.c.b16 %v362, %v360
    %v477 = vpack.c.b16 %v363, %v361
    %v478 = vpack.c.b16 %v366, %v364
    %v479 = vpack.c.b16 %v367, %v365
    %v480 = vpack.c.b16 %v370, %v368
    %v481 = vpack.c.b16 %v371, %v369
    %v482 = vpack.c.b16 %v374, %v372
    %v483 = vpack.c.b16 %v375, %v373
    %v484 = vpack.c.b16 %v378, %v376
    %v485 = vpack.c.b16 %v379, %v377
    %v486 = vpack.c.b16 %v382, %v380
    %v487 = vpack.c.b16 %v383, %v381
    %v488 = vpack.c.b16 %v386, %v384
    %v489 = vpack.c.b16 %v387, %v385
    %v490 = vpack.c.b16 %v390, %v388
    %v491 = vpack.c.b16 %v391, %v389
    %v492 = vpack.c.b16 %v394, %v392
    %v493 = vpack.c.b16 %v395, %v393
    %v494 = vpack.c.b16 %v398, %v396
    %v495 = vpack.c.b16 %v399, %v397
    %v496 = vpack.c.b16 %v402, %v400
    %v497 = vpack.c.b16 %v403, %v401
    %v498 = vpack.c.b16 %v406, %v404
    %v499 = vpack.c.b16 %v407, %v405
    %v500 = vpack.c.b16 %v410, %v408
    %v501 = vpack.c.b16 %v411, %v409
    %v502 = vpack.c.b16 %v414, %v412
    %v503 = vpack.c.b16 %v415, %v413
    %v504 = vpack.c.b16 %v418, %v416
    %v505 = vpack.c.b16 %v419, %v417
    %v506 = vpack.c.b16 %v422, %v420
    %v507 = vpack.c.b16 %v423, %v421
    %v508 = vpack.c.b16 %v426, %v424
    %v509 = vpack.c.b16 %v427, %v425
    %v510 = vpack.c.b16 %v430, %v428
    %v511 = vpack.c.b16 %v431, %v429
    %v512 = vpack.c.b16 %v434, %v432
    %v513 = vpack.c.b16 %v435, %v433
    %v514 = vpack.c.b16 %v438, %v436
    %v515 = vpack.c.b16 %v439, %v437
    %v516 = vpack.c.b16 %v442, %v440
    %v517 = vpack.c.b16 %v443, %v441
    %v518 = vpack.c.b16 %v446, %v444
    %v519 = vpack.c.b16 %v447, %v445
    %v520 = vpack.c.b16 %v450, %v448
    %v521 = vpack.c.b16 %v451, %v449
    %v522 = vpack.c.b16 %v454, %v452
    %v523 = vpack.c.b16 %v455, %v453
    %v524 = vpack.c.b16 %v458, %v456
    %v525 = vpack.c.b16 %v459, %v457
    %v526 = vpack.c.b16 %v462, %v460
    %v527 = vpack.c.b16 %v463, %v461
    %592 = vmatprep.subr.bf16.mxu0 %v479
    %593 = vmatpush1.bf16.msra.mxu0 %v478
    %594 = vmatprep.subr.bf16.mxu0 %v477
    %595 = vmatpush1.bf16.msra.mxu0 %v476
    %596 = vmatprep.subr.bf16.mxu0 %v475
    %597 = vmatpush1.bf16.msra.mxu0 %v474
    %598 = vmatprep.subr.bf16.mxu0 %v473
    %599 = vmatpush1.bf16.msra.mxu0 %v472
    %600 = vmatprep.subr.bf16.mxu0 %v471
    %601 = vmatpush1.bf16.msra.mxu0 %v470
    %602 = vmatprep.subr.bf16.mxu0 %v469
    %603 = vmatpush1.bf16.msra.mxu0 %v468
    %604 = vmatprep.subr.bf16.mxu0 %v467
    %605 = vmatpush1.bf16.msra.mxu0 %v466
    %606 = vmatprep.subr.bf16.mxu0 %v465
    %607 = vmatpush1.bf16.msra.mxu0 %v464
    %608 = vmatprep.subr.bf16.mxu0 %v495
    %609 = vmatpush2.bf16.msra.mxu0 %v494
    %610 = vmatprep.subr.bf16.mxu0 %v493
    %611 = vmatpush2.bf16.msra.mxu0 %v492
    %612 = vmatprep.subr.bf16.mxu0 %v491
    %613 = vmatpush2.bf16.msra.mxu0 %v490
    %614 = vmatprep.subr.bf16.mxu0 %v489
    %615 = vmatpush2.bf16.msra.mxu0 %v488
    %616 = vmatprep.subr.bf16.mxu0 %v487
    %617 = vmatpush2.bf16.msra.mxu0 %v486
    %618 = vmatprep.subr.bf16.mxu0 %v485
    %619 = vmatpush2.bf16.msra.mxu0 %v484
    %620 = vmatprep.subr.bf16.mxu0 %v483
    %621 = vmatpush2.bf16.msra.mxu0 %v482
    %622 = vmatprep.subr.bf16.mxu0 %v481
    %623 = vmatpush2.bf16.msra.mxu0 %v480
    %624 = vmatprep.mubr.bf16.mxu0 %v241
    %625 = vmatmul.mubr.bf16.gmra.mxu0 %v240
    %v626 = vpop.f32.mrf.mxu0
    %v627 = vadd.f32 %v155, %v626
    %v628 = vpop.f32.mrf.mxu0
    %v629 = vadd.f32 %v155, %v628
    %v630 = vpop.f32.mrf.mxu0
    %v631 = vadd.f32 %v160, %v630
    %v632 = vpop.f32.mrf.mxu0
    %v633 = vadd.f32 %v160, %v632
    %634 = vmatprep.mubr.bf16.mxu0 %v245
    %635 = vmatmul.mubr.bf16.gmra.mxu0 %v244
    %v636 = vpop.f32.mrf.mxu0
    %v637 = vadd.f32 %v165, %v636
    %v638 = vpop.f32.mrf.mxu0
    %v639 = vadd.f32 %v165, %v638
    %v640 = vpop.f32.mrf.mxu0
    %v641 = vadd.f32 %v170, %v640
    %v642 = vpop.f32.mrf.mxu0
    %v643 = vadd.f32 %v170, %v642
    %644 = vmatprep.mubr.bf16.mxu0 %v249
    %645 = vmatmul.mubr.bf16.gmra.mxu0 %v248
    %v646 = vpop.f32.mrf.mxu0
    %v647 = vadd.f32 %v175, %v646
    %v648 = vpop.f32.mrf.mxu0
    %v649 = vadd.f32 %v175, %v648
    %v650 = vpop.f32.mrf.mxu0
    %v651 = vadd.f32 %v180, %v650
    %v652 = vpop.f32.mrf.mxu0
    %v653 = vadd.f32 %v180, %v652
    %654 = vmatprep.mubr.bf16.mxu0 %v253
    %655 = vmatmul.mubr.bf16.gmra.mxu0 %v252
    %v656 = vpop.f32.mrf.mxu0
    %v657 = vadd.f32 %v185, %v656
    %v658 = vpop.f32.mrf.mxu0
    %v659 = vadd.f32 %v185, %v658
    %v660 = vpop.f32.mrf.mxu0
    %v661 = vadd.f32 %v190, %v660
    %v662 = vpop.f32.mrf.mxu0
    %v663 = vadd.f32 %v190, %v662
    %664 = vdwg.mxu0
    %665 = vmatprep.subr.bf16.mxu0 %v511
    %666 = vmatpush1.bf16.msra.mxu0 %v510
    %667 = vmatprep.subr.bf16.mxu0 %v509
    %668 = vmatpush1.bf16.msra.mxu0 %v508
    %669 = vmatprep.subr.bf16.mxu0 %v507
    %670 = vmatpush1.bf16.msra.mxu0 %v506
    %671 = vmatprep.subr.bf16.mxu0 %v505
    %672 = vmatpush1.bf16.msra.mxu0 %v504
    %673 = vmatprep.subr.bf16.mxu0 %v503
    %674 = vmatpush1.bf16.msra.mxu0 %v502
    %675 = vmatprep.subr.bf16.mxu0 %v501
    %676 = vmatpush1.bf16.msra.mxu0 %v500
    %677 = vmatprep.subr.bf16.mxu0 %v499
    %678 = vmatpush1.bf16.msra.mxu0 %v498
    %679 = vmatprep.subr.bf16.mxu0 %v497
    %680 = vmatpush1.bf16.msra.mxu0 %v496
    %681 = vmatprep.subr.bf16.mxu0 %v527
    %682 = vmatpush2.bf16.msra.mxu0 %v526
    %683 = vmatprep.subr.bf16.mxu0 %v525
    %684 = vmatpush2.bf16.msra.mxu0 %v524
    %685 = vmatprep.subr.bf16.mxu0 %v523
    %686 = vmatpush2.bf16.msra.mxu0 %v522
    %687 = vmatprep.subr.bf16.mxu0 %v521
    %688 = vmatpush2.bf16.msra.mxu0 %v520
    %689 = vmatprep.subr.bf16.mxu0 %v519
    %690 = vmatpush2.bf16.msra.mxu0 %v518
    %691 = vmatprep.subr.bf16.mxu0 %v517
    %692 = vmatpush2.bf16.msra.mxu0 %v516
    %693 = vmatprep.subr.bf16.mxu0 %v515
    %694 = vmatpush2.bf16.msra.mxu0 %v514
    %695 = vmatprep.subr.bf16.mxu0 %v513
    %696 = vmatpush2.bf16.msra.mxu0 %v512
    %697 = vmatprep.mubr.bf16.mxu0 %v243
    %698 = vmatmul.mubr.bf16.gmra.mxu0 %v242
    %v699 = vpop.f32.mrf.mxu0
    %v700 = vadd.f32 %v627, %v699
    %v701 = vpop.f32.mrf.mxu0
    %v702 = vadd.f32 %v629, %v701
    %v703 = vpop.f32.mrf.mxu0
    %v704 = vadd.f32 %v631, %v703
    %v705 = vpop.f32.mrf.mxu0
    %v706 = vadd.f32 %v633, %v705
    %707 = vmatprep.mubr.bf16.mxu0 %v247
    %708 = vmatmul.mubr.bf16.gmra.mxu0 %v246
    %v709 = vpop.f32.mrf.mxu0
    %v710 = vadd.f32 %v637, %v709
    %v711 = vpop.f32.mrf.mxu0
    %v712 = vadd.f32 %v639, %v711
    %v713 = vpop.f32.mrf.mxu0
    %v714 = vadd.f32 %v641, %v713
    %v715 = vpop.f32.mrf.mxu0
    %v716 = vadd.f32 %v643, %v715
    %717 = vmatprep.mubr.bf16.mxu0 %v251
    %718 = vmatmul.mubr.bf16.gmra.mxu0 %v250
    %v719 = vpop.f32.mrf.mxu0
    %v720 = vadd.f32 %v647, %v719
    %v721 = vpop.f32.mrf.mxu0
    %v722 = vadd.f32 %v649, %v721
    %v723 = vpop.f32.mrf.mxu0
    %v724 = vadd.f32 %v651, %v723
    %v725 = vpop.f32.mrf.mxu0
    %v726 = vadd.f32 %v653, %v725
    %727 = vmatprep.mubr.bf16.mxu0 %v255
    %728 = vmatmul.mubr.bf16.gmra.mxu0 %v254
    %v729 = vpop.f32.mrf.mxu0
    %v730 = vadd.f32 %v657, %v729
    %v731 = vpop.f32.mrf.mxu0
    %v732 = vadd.f32 %v659, %v731
    %v733 = vpop.f32.mrf.mxu0
    %v734 = vadd.f32 %v661, %v733
    %v735 = vpop.f32.mrf.mxu0
    %v736 = vadd.f32 %v663, %v735
    %737 = vdwg.mxu0
    %v738 = vpack.c.bf16 %v704, %v700
    %v739 = vpack.c.bf16 %v706, %v702
    %v740 = vpack.c.bf16 %v714, %v710
    %v741 = vpack.c.bf16 %v716, %v712
    %v742 = vpack.c.bf16 %v724, %v720
    %v743 = vpack.c.bf16 %v726, %v722
    %v744 = vpack.c.bf16 %v734, %v730
    %v745 = vpack.c.bf16 %v736, %v732
    %v746 = vld [vmem:[%s3] sm:$0xf]
    %v747 = vld [vmem:[%s3 + $0x4] sm:$0xf]
    %v748 = vld [vmem:[%s3 + $0x8] sm:$0xf]
    %v749 = vld [vmem:[%s3 + $0xc] sm:$0xf]
    %v750 = vld [vmem:[%s0] sm:$0xff]
    %v751 = vld [vmem:[%s0 + $0x8] sm:$0xff]
    %753 = vset.pattern.permute.xlu0 0
    %754 = vperm.xlu0 %753, %v62
    %v755 = vpop.permute.xlu0 %754
    %758 = vset.pattern.permute.xlu0 0
    %759 = vperm.xlu0 %758, %v63
    %v760 = vpop.permute.xlu0 %759
    %763 = vset.pattern.permute.xlu0 0
    %764 = vperm.xlu0 %763, %v64
    %v765 = vpop.permute.xlu0 %764
    %768 = vset.pattern.permute.xlu0 0
    %769 = vperm.xlu0 %768, %v65
    %v770 = vpop.permute.xlu0 %769
    %v776 = vunpack.c.l.b16 %v746
    %v777 = vunpack.c.l.b16 %v747
    %v778 = vunpack.c.l.b16 %v748
    %v779 = vunpack.c.l.b16 %v749
    %v780 = vpack.c.b16 %v777, %v776
    %v781 = vpack.c.b16 %v779, %v778
    %v784 = vunpack.c.l.b16 %v750
    %v785 = vunpack.c.h.b16 %v750
    %v786 = vunpack.c.l.b16 %v751
    %v787 = vunpack.c.h.b16 %v751
    %v788 = vpack.c.b16 %v786, %v784
    %v789 = vpack.c.b16 %v787, %v785
    %vm792 = vcmask 130048
    %v794 = vsel %vm792, %v780, 0
    %v797 = vsel %vm792, %v781, 0
    %799 = vmatprep.subr.bf16.mxu0 0
    %800 = vmatpush1.bf16.msra.mxu0 0
    %801 = vmatprep.subr.bf16.mxu0 0
    %802 = vmatpush1.bf16.msra.mxu0 0
    %803 = vmatprep.subr.bf16.mxu0 0
    %804 = vmatpush1.bf16.msra.mxu0 0
    %805 = vmatprep.subr.bf16.mxu0 0
    %806 = vmatpush1.bf16.msra.mxu0 0
    %807 = vmatprep.subr.bf16.mxu0 0
    %808 = vmatpush1.bf16.msra.mxu0 0
    %809 = vmatprep.subr.bf16.mxu0 0
    %810 = vmatpush1.bf16.msra.mxu0 0
    %811 = vmatprep.subr.bf16.mxu0 0
    %812 = vmatpush1.bf16.msra.mxu0 0
    %813 = vmatprep.subr.bf16.mxu0 %v789
    %814 = vmatpush1.bf16.msra.mxu0 %v788
    %815 = vmatprep.subr.bf16.mxu0 0
    %816 = vmatpush2.bf16.msra.mxu0 0
    %817 = vmatprep.subr.bf16.mxu0 0
    %818 = vmatpush2.bf16.msra.mxu0 0
    %819 = vmatprep.subr.bf16.mxu0 0
    %820 = vmatpush2.bf16.msra.mxu0 0
    %821 = vmatprep.subr.bf16.mxu0 0
    %822 = vmatpush2.bf16.msra.mxu0 0
    %823 = vmatprep.subr.bf16.mxu0 0
    %824 = vmatpush2.bf16.msra.mxu0 0
    %825 = vmatprep.subr.bf16.mxu0 0
    %826 = vmatpush2.bf16.msra.mxu0 0
    %827 = vmatprep.subr.bf16.mxu0 0
    %828 = vmatpush2.bf16.msra.mxu0 0
    %829 = vmatprep.subr.bf16.mxu0 0
    %830 = vmatpush2.bf16.msra.mxu0 0
    %831 = vmatprep.mubr.bf16.mxu0 0
    %832 = vmatmul.mubr.bf16.gmra.mxu0 %v794
    %v833 = vpop.f32.mrf.mxu0
    %v834 = vadd.f32 %v755, %v833
    %v835 = vpop.f32.mrf.mxu0
    %v836 = vadd.f32 %v755, %v835
    %v837 = vpop.f32.mrf.mxu0
    %v838 = vadd.f32 %v760, %v837
    %v839 = vpop.f32.mrf.mxu0
    %v840 = vadd.f32 %v760, %v839
    %841 = vmatprep.mubr.bf16.mxu0 0
    %842 = vmatmul.mubr.bf16.gmra.mxu0 %v797
    %v843 = vpop.f32.mrf.mxu0
    %v844 = vadd.f32 %v765, %v843
    %v845 = vpop.f32.mrf.mxu0
    %v846 = vadd.f32 %v765, %v845
    %v847 = vpop.f32.mrf.mxu0
    %v848 = vadd.f32 %v770, %v847
    %v849 = vpop.f32.mrf.mxu0
    %v850 = vadd.f32 %v770, %v849
    %851 = vdwg.mxu0
    %v852 = vlaneseq
    %v853 = vand.u32 %v852, 127
    %v854 = vadd.s32 %v853, 128
    %vm855 = vcmp.lt.s32.totalorder %v853, 0
    %v856 = vsub.s32 0, %v853
    %v857 = vsel %vm855, %v856, %v853
    %v858 = vshrl.u32 %v857, 7
    %v859 = vand.u32 %v857, 127
    %v860 = vsub.s32 0, %v859
    %v861 = vsel %vm855, %v860, %v859
    %vm862 = vcmp.lt.s32.totalorder %v854, 0
    %v863 = vsub.s32 0, %v854
    %v864 = vsel %vm862, %v863, %v854
    %v865 = vshrl.u32 %v864, 7
    %v866 = vand.u32 %v864, 127
    %v867 = vsub.s32 0, %v866
    %v868 = vsel %vm862, %v867, %v866
    %vm869 = vcmp.ne.s32.totalorder %v861, 0
    %vm870 = vcmp.ne.s32.totalorder %v868, 0
    %vm871 = vcmp.lt.s32.totalorder %v861, 0
    %vm872 = vcmp.lt.s32.totalorder %v868, 0
    %vm873 = vmand %vm871, %vm869
    %vm874 = vmand %vm872, %vm870
    %v875 = vadd.s32 %v861, 128
    %v876 = vadd.s32 %v868, 128
    %v877 = vsel %vm873, %v875, %v861
    %v878 = vsel %vm874, %v876, %v868
    %vm879 = vcmp.ge.s32.totalorder %v877, 1
    %vm880 = vcmp.ge.s32.totalorder %v878, 1
    %vm881 = vcmp.ge.s32.totalorder %v877, 2
    %vm882 = vcmp.ge.s32.totalorder %v878, 2
    %vm883 = vcmp.ge.s32.totalorder %v877, 4
    %vm884 = vcmp.ge.s32.totalorder %v878, 4
    %885 = vrot.lane.b32.xlu0 %v834, 2
    %v886 = vpop.permute.xlu0 %885
    %887 = vrot.lane.b32.xlu0 %v838, 2
    %v888 = vpop.permute.xlu0 %887
    %889 = vrot.lane.b32.xlu0 %v844, 2
    %v890 = vpop.permute.xlu0 %889
    %891 = vrot.lane.b32.xlu0 %v848, 2
    %v892 = vpop.permute.xlu0 %891
    %893 = vrot.lane.b32.xlu0 %v836, 2
    %v894 = vpop.permute.xlu0 %893
    %895 = vrot.lane.b32.xlu0 %v840, 2
    %v896 = vpop.permute.xlu0 %895
    %897 = vrot.lane.b32.xlu0 %v846, 2
    %v898 = vpop.permute.xlu0 %897
    %899 = vrot.lane.b32.xlu0 %v850, 2
    %v900 = vpop.permute.xlu0 %899
    %vm901 = vcmp.lt.s32.totalorder %v853, 2
    %v902 = vsel %vm901, %v886, %v894
    %v903 = vsel %vm901, %v888, %v896
    %v904 = vsel %vm901, %v890, %v898
    %v905 = vsel %vm901, %v892, %v900
    %v906 = vsel %vm901, %v894, %v886
    %v907 = vsel %vm901, %v896, %v888
    %v908 = vsel %vm901, %v898, %v890
    %v909 = vsel %vm901, %v900, %v892
    %v910 = vsel %vm881, %v906, 0.0
    %v911 = vsel %vm882, %v902, 0.0
    %v912 = vsel %vm881, %v907, 0.0
    %v913 = vsel %vm882, %v903, 0.0
    %v914 = vsel %vm881, %v908, 0.0
    %v915 = vsel %vm882, %v904, 0.0
    %v916 = vsel %vm881, %v909, 0.0
    %v917 = vsel %vm882, %v905, 0.0
    %v918 = vpack.c.bf16 %v912, %v910
    %v919 = vpack.c.bf16 %v913, %v911
    %v920 = vpack.c.bf16 %v916, %v914
    %v921 = vpack.c.bf16 %v917, %v915
    %922 = vrot.lane.b32.xlu0 %v834, 1
    %v923 = vpop.permute.xlu0 %922
    %924 = vrot.lane.b32.xlu0 %v838, 1
    %v925 = vpop.permute.xlu0 %924
    %926 = vrot.lane.b32.xlu0 %v844, 1
    %v927 = vpop.permute.xlu0 %926
    %928 = vrot.lane.b32.xlu0 %v848, 1
    %v929 = vpop.permute.xlu0 %928
    %930 = vrot.lane.b32.xlu0 %v836, 1
    %v931 = vpop.permute.xlu0 %930
    %932 = vrot.lane.b32.xlu0 %v840, 1
    %v933 = vpop.permute.xlu0 %932
    %934 = vrot.lane.b32.xlu0 %v846, 1
    %v935 = vpop.permute.xlu0 %934
    %936 = vrot.lane.b32.xlu0 %v850, 1
    %v937 = vpop.permute.xlu0 %936
    %vm938 = vcmp.lt.s32.totalorder %v853, 1
    %v939 = vsel %vm938, %v923, %v931
    %v940 = vsel %vm938, %v925, %v933
    %v941 = vsel %vm938, %v927, %v935
    %v942 = vsel %vm938, %v929, %v937
    %v943 = vsel %vm938, %v931, %v923
    %v944 = vsel %vm938, %v933, %v925
    %v945 = vsel %vm938, %v935, %v927
    %v946 = vsel %vm938, %v937, %v929
    %v947 = vsel %vm879, %v943, 0.0
    %v948 = vsel %vm880, %v939, 0.0
    %v949 = vsel %vm879, %v944, 0.0
    %v950 = vsel %vm880, %v940, 0.0
    %v951 = vsel %vm879, %v945, 0.0
    %v952 = vsel %vm880, %v941, 0.0
    %v953 = vsel %vm879, %v946, 0.0
    %v954 = vsel %vm880, %v942, 0.0
    %v955 = vpack.c.bf16 %v949, %v947
    %v956 = vpack.c.bf16 %v950, %v948
    %v957 = vpack.c.bf16 %v953, %v951
    %v958 = vpack.c.bf16 %v954, %v952
    %v959 = vpack.c.bf16 %v838, %v834
    %v960 = vpack.c.bf16 %v840, %v836
    %v961 = vpack.c.bf16 %v848, %v844
    %v962 = vpack.c.bf16 %v850, %v846
    %v963 = vld [vmem:[%s4] sm:$0xff]
    %v964 = vld [vmem:[%s4 + $0x8] sm:$0xff]
    %v965 = vld [vmem:[%s4 + $0x10] sm:$0xff]
    %v966 = vld [vmem:[%s4 + $0x18] sm:$0xff]
    %v967 = vld [vmem:[%s4 + $0x20] sm:$0xff]
    %v968 = vld [vmem:[%s4 + $0x28] sm:$0xff]
    %v969 = vld [vmem:[%s4 + $0x30] sm:$0xff]
    %v970 = vld [vmem:[%s4 + $0x38] sm:$0xff]
    %v971 = vld [vmem:[%s8] sm:$0xff]
    %v972 = vld [vmem:[%s8 + $0x8] sm:$0xff]
    %v973 = vld [vmem:[%s8 + $0x10] sm:$0xff]
    %v974 = vld [vmem:[%s8 + $0x18] sm:$0xff]
    %v975 = vld [vmem:[%s8 + $0x20] sm:$0xff]
    %v976 = vld [vmem:[%s8 + $0x28] sm:$0xff]
    %v977 = vld [vmem:[%s8 + $0x30] sm:$0xff]
    %v978 = vld [vmem:[%s8 + $0x38] sm:$0xff]
    %980 = vset.pattern.permute.xlu0 0
    %981 = vperm.xlu0 %980, %v971
    %v982 = vpop.permute.xlu0 %981
    %985 = vset.pattern.permute.xlu0 0
    %986 = vperm.xlu0 %985, %v972
    %v987 = vpop.permute.xlu0 %986
    %990 = vset.pattern.permute.xlu0 0
    %991 = vperm.xlu0 %990, %v973
    %v992 = vpop.permute.xlu0 %991
    %995 = vset.pattern.permute.xlu0 0
    %996 = vperm.xlu0 %995, %v974
    %v997 = vpop.permute.xlu0 %996
    %1000 = vset.pattern.permute.xlu0 0
    %1001 = vperm.xlu0 %1000, %v975
    %v1002 = vpop.permute.xlu0 %1001
    %1005 = vset.pattern.permute.xlu0 0
    %1006 = vperm.xlu0 %1005, %v976
    %v1007 = vpop.permute.xlu0 %1006
    %1010 = vset.pattern.permute.xlu0 0
    %1011 = vperm.xlu0 %1010, %v977
    %v1012 = vpop.permute.xlu0 %1011
    %1015 = vset.pattern.permute.xlu0 0
    %1016 = vperm.xlu0 %1015, %v978
    %v1017 = vpop.permute.xlu0 %1016
    %v1027 = vunpack.c.l.b16 %v963
    %v1028 = vunpack.c.h.b16 %v963
    %v1029 = vunpack.c.l.b16 %v964
    %v1030 = vunpack.c.h.b16 %v964
    %v1031 = vunpack.c.l.b16 %v965
    %v1032 = vunpack.c.h.b16 %v965
    %v1033 = vunpack.c.l.b16 %v966
    %v1034 = vunpack.c.h.b16 %v966
    %v1035 = vunpack.c.l.b16 %v967
    %v1036 = vunpack.c.h.b16 %v967
    %v1037 = vunpack.c.l.b16 %v968
    %v1038 = vunpack.c.h.b16 %v968
    %v1039 = vunpack.c.l.b16 %v969
    %v1040 = vunpack.c.h.b16 %v969
    %v1041 = vunpack.c.l.b16 %v970
    %v1042 = vunpack.c.h.b16 %v970
    %v1043 = vpack.c.b16 %v1029, %v1027
    %v1044 = vpack.c.b16 %v1030, %v1028
    %v1045 = vpack.c.b16 %v1033, %v1031
    %v1046 = vpack.c.b16 %v1034, %v1032
    %v1047 = vpack.c.b16 %v1037, %v1035
    %v1048 = vpack.c.b16 %v1038, %v1036
    %v1049 = vpack.c.b16 %v1041, %v1039
    %v1050 = vpack.c.b16 %v1042, %v1040
    %vm1055 = vcmask 261120
    %v1057 = vsel %vm1055, %v1044, 0
    %v1060 = vsel %vm1055, %v1046, 0
    %v1063 = vsel %vm1055, %v1048, 0
    %v1066 = vsel %vm1055, %v1050, 0
    %1068 = vmatprep.subr.bf16.mxu0 %v741
    %1069 = vmatpush1.bf16.msra.mxu0 %v740
    %1070 = vmatprep.subr.bf16.mxu0 %v739
    %1071 = vmatpush1.bf16.msra.mxu0 %v738
    %1072 = vmatprep.subr.bf16.mxu0 %v962
    %1073 = vmatpush1.bf16.msra.mxu0 %v961
    %1074 = vmatprep.subr.bf16.mxu0 %v960
    %1075 = vmatpush1.bf16.msra.mxu0 %v959
    %1076 = vmatprep.subr.bf16.mxu0 %v958
    %1077 = vmatpush1.bf16.msra.mxu0 %v957
    %1078 = vmatprep.subr.bf16.mxu0 %v956
    %1079 = vmatpush1.bf16.msra.mxu0 %v955
    %1080 = vmatprep.subr.bf16.mxu0 %v921
    %1081 = vmatpush1.bf16.msra.mxu0 %v920
    %1082 = vmatprep.subr.bf16.mxu0 %v919
    %1083 = vmatpush1.bf16.msra.mxu0 %v918
    %1084 = vmatprep.subr.bf16.mxu0 0
    %1085 = vmatpush2.bf16.msra.mxu0 0
    %1086 = vmatprep.subr.bf16.mxu0 0
    %1087 = vmatpush2.bf16.msra.mxu0 0
    %1088 = vmatprep.subr.bf16.mxu0 0
    %1089 = vmatpush2.bf16.msra.mxu0 0
    %1090 = vmatprep.subr.bf16.mxu0 0
    %1091 = vmatpush2.bf16.msra.mxu0 0
    %1092 = vmatprep.subr.bf16.mxu0 0
    %1093 = vmatpush2.bf16.msra.mxu0 0
    %1094 = vmatprep.subr.bf16.mxu0 0
    %1095 = vmatpush2.bf16.msra.mxu0 0
    %1096 = vmatprep.subr.bf16.mxu0 %v745
    %1097 = vmatpush2.bf16.msra.mxu0 %v744
    %1098 = vmatprep.subr.bf16.mxu0 %v743
    %1099 = vmatpush2.bf16.msra.mxu0 %v742
    %1100 = vmatprep.mubr.bf16.mxu0 %v1057
    %1101 = vmatmul.mubr.bf16.gmra.mxu0 %v1043
    %v1102 = vpop.f32.mrf.mxu0
    %v1103 = vadd.f32 %v982, %v1102
    %v1104 = vpop.f32.mrf.mxu0
    %v1105 = vadd.f32 %v982, %v1104
    %v1106 = vpop.f32.mrf.mxu0
    %v1107 = vadd.f32 %v987, %v1106
    %v1108 = vpop.f32.mrf.mxu0
    %v1109 = vadd.f32 %v987, %v1108
    %1110 = vmatprep.mubr.bf16.mxu0 %v1060
    %1111 = vmatmul.mubr.bf16.gmra.mxu0 %v1045
    %v1112 = vpop.f32.mrf.mxu0
    %v1113 = vadd.f32 %v992, %v1112
    %v1114 = vpop.f32.mrf.mxu0
    %v1115 = vadd.f32 %v992, %v1114
    %v1116 = vpop.f32.mrf.mxu0
    %v1117 = vadd.f32 %v997, %v1116
    %v1118 = vpop.f32.mrf.mxu0
    %v1119 = vadd.f32 %v997, %v1118
    %1120 = vmatprep.mubr.bf16.mxu0 %v1063
    %1121 = vmatmul.mubr.bf16.gmra.mxu0 %v1047
    %v1122 = vpop.f32.mrf.mxu0
    %v1123 = vadd.f32 %v1002, %v1122
    %v1124 = vpop.f32.mrf.mxu0
    %v1125 = vadd.f32 %v1002, %v1124
    %v1126 = vpop.f32.mrf.mxu0
    %v1127 = vadd.f32 %v1007, %v1126
    %v1128 = vpop.f32.mrf.mxu0
    %v1129 = vadd.f32 %v1007, %v1128
    %1130 = vmatprep.mubr.bf16.mxu0 %v1066
    %1131 = vmatmul.mubr.bf16.gmra.mxu0 %v1049
    %v1132 = vpop.f32.mrf.mxu0
    %v1133 = vadd.f32 %v1012, %v1132
    %v1134 = vpop.f32.mrf.mxu0
    %v1135 = vadd.f32 %v1012, %v1134
    %v1136 = vpop.f32.mrf.mxu0
    %v1137 = vadd.f32 %v1017, %v1136
    %v1138 = vpop.f32.mrf.mxu0
    %v1139 = vadd.f32 %v1017, %v1138
    %1140 = vdwg.mxu0
    %v1141 = vtanh.pop %v1103
    %v1142 = vtanh.pop %v1105
    %v1143 = vtanh.pop %v1107
    %v1144 = vtanh.pop %v1109
    %v1145 = vtanh.pop %v1113
    %v1146 = vtanh.pop %v1115
    %v1147 = vtanh.pop %v1117
    %v1148 = vtanh.pop %v1119
    %v1149 = vxor.u32 %v1123, 2147483648
    %v1150 = vxor.u32 %v1125, 2147483648
    %v1151 = vxor.u32 %v1127, 2147483648
    %v1152 = vxor.u32 %v1129, 2147483648
    %v1153 = vxor.u32 %v1133, 2147483648
    %v1154 = vxor.u32 %v1135, 2147483648
    %v1155 = vxor.u32 %v1137, 2147483648
    %v1156 = vxor.u32 %v1139, 2147483648
    %v1157 = vmul.f32 %v1149, 1.442695
    %v1158 = vpow.pop %v1157
    %v1159 = vmul.f32 %v1150, 1.442695
    %v1160 = vpow.pop %v1159
    %v1161 = vmul.f32 %v1151, 1.442695
    %v1162 = vpow.pop %v1161
    %v1163 = vmul.f32 %v1152, 1.442695
    %v1164 = vpow.pop %v1163
    %v1165 = vmul.f32 %v1153, 1.442695
    %v1166 = vpow.pop %v1165
    %v1167 = vmul.f32 %v1154, 1.442695
    %v1168 = vpow.pop %v1167
    %v1169 = vmul.f32 %v1155, 1.442695
    %v1170 = vpow.pop %v1169
    %v1171 = vmul.f32 %v1156, 1.442695
    %v1172 = vpow.pop %v1171
    %v1173 = vadd.f32 %v1158, 1.0
    %v1174 = vadd.f32 %v1160, 1.0
    %v1175 = vadd.f32 %v1162, 1.0
    %v1176 = vadd.f32 %v1164, 1.0
    %v1177 = vadd.f32 %v1166, 1.0
    %v1178 = vadd.f32 %v1168, 1.0
    %v1179 = vadd.f32 %v1170, 1.0
    %v1180 = vadd.f32 %v1172, 1.0
    %v1181 = vrcp.pop %v1173
    %v1182 = vmul.f32 1.0, %v1181
    %v1183 = vrcp.pop %v1174
    %v1184 = vmul.f32 1.0, %v1183
    %v1185 = vrcp.pop %v1175
    %v1186 = vmul.f32 1.0, %v1185
    %v1187 = vrcp.pop %v1176
    %v1188 = vmul.f32 1.0, %v1187
    %v1189 = vrcp.pop %v1177
    %v1190 = vmul.f32 1.0, %v1189
    %v1191 = vrcp.pop %v1178
    %v1192 = vmul.f32 1.0, %v1191
    %v1193 = vrcp.pop %v1179
    %v1194 = vmul.f32 1.0, %v1193
    %v1195 = vrcp.pop %v1180
    %v1196 = vmul.f32 1.0, %v1195
    %v1197 = vmul.f32 %v1141, %v1182
    %v1198 = vmul.f32 %v1142, %v1184
    %v1199 = vmul.f32 %v1143, %v1186
    %v1200 = vmul.f32 %v1144, %v1188
    %v1201 = vmul.f32 %v1145, %v1190
    %v1202 = vmul.f32 %v1146, %v1192
    %v1203 = vmul.f32 %v1147, %v1194
    %v1204 = vmul.f32 %v1148, %v1196
    %v1205 = vpack.c.bf16 %v1199, %v1197
    %v1206 = vpack.c.bf16 %v1200, %v1198
    %v1207 = vpack.c.bf16 %v1203, %v1201
    %v1208 = vpack.c.bf16 %v1204, %v1202
    %v1209 = vld [vmem:[%s5] sm:$0xf]
    %v1210 = vld [vmem:[%s5 + $0x4] sm:$0xf]
    %v1211 = vld [vmem:[%s5 + $0x8] sm:$0xf]
    %v1212 = vld [vmem:[%s5 + $0xc] sm:$0xf]
    %v1213 = vld [vmem:[%s5 + $0x10] sm:$0xf]
    %v1214 = vld [vmem:[%s5 + $0x14] sm:$0xf]
    %v1215 = vld [vmem:[%s5 + $0x18] sm:$0xf]
    %v1216 = vld [vmem:[%s5 + $0x1c] sm:$0xf]
    %v1217 = vld [vmem:[%s9] sm:$0xff]
    %v1218 = vld [vmem:[%s9 + $0x8] sm:$0xff]
    %v1219 = vld [vmem:[%s9 + $0x10] sm:$0xff]
    %v1220 = vld [vmem:[%s9 + $0x18] sm:$0xff]
    %v1221 = vld [vmem:[%s9 + $0x20] sm:$0xff]
    %v1222 = vld [vmem:[%s9 + $0x28] sm:$0xff]
    %v1223 = vld [vmem:[%s9 + $0x30] sm:$0xff]
    %v1224 = vld [vmem:[%s9 + $0x38] sm:$0xff]
    %1226 = vset.pattern.permute.xlu0 0
    %1227 = vperm.xlu0 %1226, %v1217
    %v1228 = vpop.permute.xlu0 %1227
    %1231 = vset.pattern.permute.xlu0 0
    %1232 = vperm.xlu0 %1231, %v1218
    %v1233 = vpop.permute.xlu0 %1232
    %1236 = vset.pattern.permute.xlu0 0
    %1237 = vperm.xlu0 %1236, %v1219
    %v1238 = vpop.permute.xlu0 %1237
    %1241 = vset.pattern.permute.xlu0 0
    %1242 = vperm.xlu0 %1241, %v1220
    %v1243 = vpop.permute.xlu0 %1242
    %1246 = vset.pattern.permute.xlu0 0
    %1247 = vperm.xlu0 %1246, %v1221
    %v1248 = vpop.permute.xlu0 %1247
    %1251 = vset.pattern.permute.xlu0 0
    %1252 = vperm.xlu0 %1251, %v1222
    %v1253 = vpop.permute.xlu0 %1252
    %1256 = vset.pattern.permute.xlu0 0
    %1257 = vperm.xlu0 %1256, %v1223
    %v1258 = vpop.permute.xlu0 %1257
    %1261 = vset.pattern.permute.xlu0 0
    %1262 = vperm.xlu0 %1261, %v1224
    %v1263 = vpop.permute.xlu0 %1262
    %v1273 = vunpack.c.l.b16 %v1209
    %v1274 = vunpack.c.l.b16 %v1210
    %v1275 = vunpack.c.l.b16 %v1211
    %v1276 = vunpack.c.l.b16 %v1212
    %v1277 = vunpack.c.l.b16 %v1213
    %v1278 = vunpack.c.l.b16 %v1214
    %v1279 = vunpack.c.l.b16 %v1215
    %v1280 = vunpack.c.l.b16 %v1216
    %v1281 = vpack.c.b16 %v1274, %v1273
    %v1282 = vpack.c.b16 %v1276, %v1275
    %v1283 = vpack.c.b16 %v1278, %v1277
    %v1284 = vpack.c.b16 %v1280, %v1279
    %v1286 = vsel %vm1055, %v1281, 0
    %v1289 = vsel %vm1055, %v1282, 0
    %v1292 = vsel %vm1055, %v1283, 0
    %v1295 = vsel %vm1055, %v1284, 0
    %1297 = vmatprep.subr.bf16.mxu0 0
    %1298 = vmatpush1.bf16.msra.mxu0 0
    %1299 = vmatprep.subr.bf16.mxu0 0
    %1300 = vmatpush1.bf16.msra.mxu0 0
    %1301 = vmatprep.subr.bf16.mxu0 0
    %1302 = vmatpush1.bf16.msra.mxu0 0
    %1303 = vmatprep.subr.bf16.mxu0 0
    %1304 = vmatpush1.bf16.msra.mxu0 0
    %1305 = vmatprep.subr.bf16.mxu0 0
    %1306 = vmatpush1.bf16.msra.mxu0 0
    %1307 = vmatprep.subr.bf16.mxu0 0
    %1308 = vmatpush1.bf16.msra.mxu0 0
    %1309 = vmatprep.subr.bf16.mxu0 %v1208
    %1310 = vmatpush1.bf16.msra.mxu0 %v1207
    %1311 = vmatprep.subr.bf16.mxu0 %v1206
    %1312 = vmatpush1.bf16.msra.mxu0 %v1205
    %1313 = vmatprep.subr.bf16.mxu0 0
    %1314 = vmatpush2.bf16.msra.mxu0 0
    %1315 = vmatprep.subr.bf16.mxu0 0
    %1316 = vmatpush2.bf16.msra.mxu0 0
    %1317 = vmatprep.subr.bf16.mxu0 0
    %1318 = vmatpush2.bf16.msra.mxu0 0
    %1319 = vmatprep.subr.bf16.mxu0 0
    %1320 = vmatpush2.bf16.msra.mxu0 0
    %1321 = vmatprep.subr.bf16.mxu0 0
    %1322 = vmatpush2.bf16.msra.mxu0 0
    %1323 = vmatprep.subr.bf16.mxu0 0
    %1324 = vmatpush2.bf16.msra.mxu0 0
    %1325 = vmatprep.subr.bf16.mxu0 0
    %1326 = vmatpush2.bf16.msra.mxu0 0
    %1327 = vmatprep.subr.bf16.mxu0 0
    %1328 = vmatpush2.bf16.msra.mxu0 0
    %1329 = vmatprep.mubr.bf16.mxu0 0
    %1330 = vmatmul.mubr.bf16.gmra.mxu0 %v1286
    %v1331 = vpop.f32.mrf.mxu0
    %v1332 = vadd.f32 %v1228, %v1331
    %v1333 = vpop.f32.mrf.mxu0
    %v1334 = vadd.f32 %v1228, %v1333
    %v1335 = vpop.f32.mrf.mxu0
    %v1336 = vadd.f32 %v1233, %v1335
    %v1337 = vpop.f32.mrf.mxu0
    %v1338 = vadd.f32 %v1233, %v1337
    %1339 = vmatprep.mubr.bf16.mxu0 0
    %1340 = vmatmul.mubr.bf16.gmra.mxu0 %v1289
    %v1341 = vpop.f32.mrf.mxu0
    %v1342 = vadd.f32 %v1238, %v1341
    %v1343 = vpop.f32.mrf.mxu0
    %v1344 = vadd.f32 %v1238, %v1343
    %v1345 = vpop.f32.mrf.mxu0
    %v1346 = vadd.f32 %v1243, %v1345
    %v1347 = vpop.f32.mrf.mxu0
    %v1348 = vadd.f32 %v1243, %v1347
    %1349 = vmatprep.mubr.bf16.mxu0 0
    %1350 = vmatmul.mubr.bf16.gmra.mxu0 %v1292
    %v1351 = vpop.f32.mrf.mxu0
    %v1352 = vadd.f32 %v1248, %v1351
    %v1353 = vpop.f32.mrf.mxu0
    %v1354 = vadd.f32 %v1248, %v1353
    %v1355 = vpop.f32.mrf.mxu0
    %v1356 = vadd.f32 %v1253, %v1355
    %v1357 = vpop.f32.mrf.mxu0
    %v1358 = vadd.f32 %v1253, %v1357
    %1359 = vmatprep.mubr.bf16.mxu0 0
    %1360 = vmatmul.mubr.bf16.gmra.mxu0 %v1295
    %v1361 = vpop.f32.mrf.mxu0
    %v1362 = vadd.f32 %v1258, %v1361
    %v1363 = vpop.f32.mrf.mxu0
    %v1364 = vadd.f32 %v1258, %v1363
    %v1365 = vpop.f32.mrf.mxu0
    %v1366 = vadd.f32 %v1263, %v1365
    %v1367 = vpop.f32.mrf.mxu0
    %v1368 = vadd.f32 %v1263, %v1367
    %1369 = vdwg.mxu0
    %v1370 = vadd.f32 %v1332, 0.0
    %v1371 = vadd.f32 %v1334, 0.0
    %v1372 = vadd.f32 %v1336, 0.0
    %v1373 = vadd.f32 %v1338, 0.0
    %v1374 = vadd.f32 %v1342, 0.0
    %v1375 = vadd.f32 %v1344, 0.0
    %v1376 = vadd.f32 %v1346, 0.0
    %v1377 = vadd.f32 %v1348, 0.0
    %v1378 = vadd.f32 %v1352, %v834
    %v1379 = vadd.f32 %v1354, %v836
    %v1380 = vadd.f32 %v1356, %v838
    %v1381 = vadd.f32 %v1358, %v840
    %v1382 = vadd.f32 %v1362, %v844
    %v1383 = vadd.f32 %v1364, %v846
    %v1384 = vadd.f32 %v1366, %v848
    %v1385 = vadd.f32 %v1368, %v850
    %v1386 = vmul.f32 %v1378, 0.70710677
    %v1387 = vmul.f32 %v1379, 0.70710677
    %v1388 = vmul.f32 %v1380, 0.70710677
    %v1389 = vmul.f32 %v1381, 0.70710677
    %v1390 = vmul.f32 %v1382, 0.70710677
    %v1391 = vmul.f32 %v1383, 0.70710677
    %v1392 = vmul.f32 %v1384, 0.70710677
    %v1393 = vmul.f32 %v1385, 0.70710677
    %1394 = vrot.lane.b32.xlu0 %v1386, 4
    %v1395 = vpop.permute.xlu0 %1394
    %1396 = vrot.lane.b32.xlu0 %v1388, 4
    %v1397 = vpop.permute.xlu0 %1396
    %1398 = vrot.lane.b32.xlu0 %v1390, 4
    %v1399 = vpop.permute.xlu0 %1398
    %1400 = vrot.lane.b32.xlu0 %v1392, 4
    %v1401 = vpop.permute.xlu0 %1400
    %1402 = vrot.lane.b32.xlu0 %v1387, 4
    %v1403 = vpop.permute.xlu0 %1402
    %1404 = vrot.lane.b32.xlu0 %v1389, 4
    %v1405 = vpop.permute.xlu0 %1404
    %1406 = vrot.lane.b32.xlu0 %v1391, 4
    %v1407 = vpop.permute.xlu0 %1406
    %1408 = vrot.lane.b32.xlu0 %v1393, 4
    %v1409 = vpop.permute.xlu0 %1408
    %vm1410 = vcmp.lt.s32.totalorder %v853, 4
    %v1411 = vsel %vm1410, %v1395, %v1403
    %v1412 = vsel %vm1410, %v1397, %v1405
    %v1413 = vsel %vm1410, %v1399, %v1407
    %v1414 = vsel %vm1410, %v1401, %v1409
    %v1415 = vsel %vm1410, %v1403, %v1395
    %v1416 = vsel %vm1410, %v1405, %v1397
    %v1417 = vsel %vm1410, %v1407, %v1399
    %v1418 = vsel %vm1410, %v1409, %v1401
    %v1419 = vsel %vm883, %v1415, 0.0
    %v1420 = vsel %vm884, %v1411, 0.0
    %v1421 = vsel %vm883, %v1416, 0.0
    %v1422 = vsel %vm884, %v1412, 0.0
    %v1423 = vsel %vm883, %v1417, 0.0
    %v1424 = vsel %vm884, %v1413, 0.0
    %v1425 = vsel %vm883, %v1418, 0.0
    %v1426 = vsel %vm884, %v1414, 0.0
    %v1427 = vpack.c.bf16 %v1421, %v1419
    %v1428 = vpack.c.bf16 %v1422, %v1420
    %v1429 = vpack.c.bf16 %v1425, %v1423
    %v1430 = vpack.c.bf16 %v1426, %v1424
    %1431 = vrot.lane.b32.xlu0 %v1386, 2
    %v1432 = vpop.permute.xlu0 %1431
    %1433 = vrot.lane.b32.xlu0 %v1388, 2
    %v1434 = vpop.permute.xlu0 %1433
    %1435 = vrot.lane.b32.xlu0 %v1390, 2
    %v1436 = vpop.permute.xlu0 %1435
    %1437 = vrot.lane.b32.xlu0 %v1392, 2
    %v1438 = vpop.permute.xlu0 %1437
    %1439 = vrot.lane.b32.xlu0 %v1387, 2
    %v1440 = vpop.permute.xlu0 %1439
    %1441 = vrot.lane.b32.xlu0 %v1389, 2
    %v1442 = vpop.permute.xlu0 %1441
    %1443 = vrot.lane.b32.xlu0 %v1391, 2
    %v1444 = vpop.permute.xlu0 %1443
    %1445 = vrot.lane.b32.xlu0 %v1393, 2
    %v1446 = vpop.permute.xlu0 %1445
    %v1447 = vsel %vm901, %v1432, %v1440
    %v1448 = vsel %vm901, %v1434, %v1442
    %v1449 = vsel %vm901, %v1436, %v1444
    %v1450 = vsel %vm901, %v1438, %v1446
    %v1451 = vsel %vm901, %v1440, %v1432
    %v1452 = vsel %vm901, %v1442, %v1434
    %v1453 = vsel %vm901, %v1444, %v1436
    %v1454 = vsel %vm901, %v1446, %v1438
    %v1455 = vsel %vm881, %v1451, 0.0
    %v1456 = vsel %vm882, %v1447, 0.0
    %v1457 = vsel %vm881, %v1452, 0.0
    %v1458 = vsel %vm882, %v1448, 0.0
    %v1459 = vsel %vm881, %v1453, 0.0
    %v1460 = vsel %vm882, %v1449, 0.0
    %v1461 = vsel %vm881, %v1454, 0.0
    %v1462 = vsel %vm882, %v1450, 0.0
    %v1463 = vpack.c.bf16 %v1457, %v1455
    %v1464 = vpack.c.bf16 %v1458, %v1456
    %v1465 = vpack.c.bf16 %v1461, %v1459
    %v1466 = vpack.c.bf16 %v1462, %v1460
    %v1467 = vpack.c.bf16 %v1388, %v1386
    %v1468 = vpack.c.bf16 %v1389, %v1387
    %v1469 = vpack.c.bf16 %v1392, %v1390
    %v1470 = vpack.c.bf16 %v1393, %v1391
    %s1471 = scalar_lea.vmem %s4, 64
    %v1472 = vld [vmem:[%s1471] sm:$0xff]
    %v1473 = vld [vmem:[%s1471 + $0x8] sm:$0xff]
    %v1474 = vld [vmem:[%s1471 + $0x10] sm:$0xff]
    %v1475 = vld [vmem:[%s1471 + $0x18] sm:$0xff]
    %v1476 = vld [vmem:[%s1471 + $0x20] sm:$0xff]
    %v1477 = vld [vmem:[%s1471 + $0x28] sm:$0xff]
    %v1478 = vld [vmem:[%s1471 + $0x30] sm:$0xff]
    %v1479 = vld [vmem:[%s1471 + $0x38] sm:$0xff]
    %s1480 = scalar_lea.vmem %s8, 64
    %v1481 = vld [vmem:[%s1480] sm:$0xff]
    %v1482 = vld [vmem:[%s1480 + $0x8] sm:$0xff]
    %v1483 = vld [vmem:[%s1480 + $0x10] sm:$0xff]
    %v1484 = vld [vmem:[%s1480 + $0x18] sm:$0xff]
    %v1485 = vld [vmem:[%s1480 + $0x20] sm:$0xff]
    %v1486 = vld [vmem:[%s1480 + $0x28] sm:$0xff]
    %v1487 = vld [vmem:[%s1480 + $0x30] sm:$0xff]
    %v1488 = vld [vmem:[%s1480 + $0x38] sm:$0xff]
    %1490 = vset.pattern.permute.xlu0 0
    %1491 = vperm.xlu0 %1490, %v1481
    %v1492 = vpop.permute.xlu0 %1491
    %1495 = vset.pattern.permute.xlu0 0
    %1496 = vperm.xlu0 %1495, %v1482
    %v1497 = vpop.permute.xlu0 %1496
    %1500 = vset.pattern.permute.xlu0 0
    %1501 = vperm.xlu0 %1500, %v1483
    %v1502 = vpop.permute.xlu0 %1501
    %1505 = vset.pattern.permute.xlu0 0
    %1506 = vperm.xlu0 %1505, %v1484
    %v1507 = vpop.permute.xlu0 %1506
    %1510 = vset.pattern.permute.xlu0 0
    %1511 = vperm.xlu0 %1510, %v1485
    %v1512 = vpop.permute.xlu0 %1511
    %1515 = vset.pattern.permute.xlu0 0
    %1516 = vperm.xlu0 %1515, %v1486
    %v1517 = vpop.permute.xlu0 %1516
    %1520 = vset.pattern.permute.xlu0 0
    %1521 = vperm.xlu0 %1520, %v1487
    %v1522 = vpop.permute.xlu0 %1521
    %1525 = vset.pattern.permute.xlu0 0
    %1526 = vperm.xlu0 %1525, %v1488
    %v1527 = vpop.permute.xlu0 %1526
    %v1537 = vunpack.c.l.b16 %v1472
    %v1538 = vunpack.c.h.b16 %v1472
    %v1539 = vunpack.c.l.b16 %v1473
    %v1540 = vunpack.c.h.b16 %v1473
    %v1541 = vunpack.c.l.b16 %v1474
    %v1542 = vunpack.c.h.b16 %v1474
    %v1543 = vunpack.c.l.b16 %v1475
    %v1544 = vunpack.c.h.b16 %v1475
    %v1545 = vunpack.c.l.b16 %v1476
    %v1546 = vunpack.c.h.b16 %v1476
    %v1547 = vunpack.c.l.b16 %v1477
    %v1548 = vunpack.c.h.b16 %v1477
    %v1549 = vunpack.c.l.b16 %v1478
    %v1550 = vunpack.c.h.b16 %v1478
    %v1551 = vunpack.c.l.b16 %v1479
    %v1552 = vunpack.c.h.b16 %v1479
    %v1553 = vpack.c.b16 %v1539, %v1537
    %v1554 = vpack.c.b16 %v1540, %v1538
    %v1555 = vpack.c.b16 %v1543, %v1541
    %v1556 = vpack.c.b16 %v1544, %v1542
    %v1557 = vpack.c.b16 %v1547, %v1545
    %v1558 = vpack.c.b16 %v1548, %v1546
    %v1559 = vpack.c.b16 %v1551, %v1549
    %v1560 = vpack.c.b16 %v1552, %v1550
    %v1566 = vsel %vm1055, %v1554, 0
    %v1569 = vsel %vm1055, %v1556, 0
    %v1572 = vsel %vm1055, %v1558, 0
    %v1575 = vsel %vm1055, %v1560, 0
    %1577 = vmatprep.subr.bf16.mxu0 %v741
    %1578 = vmatpush1.bf16.msra.mxu0 %v740
    %1579 = vmatprep.subr.bf16.mxu0 %v739
    %1580 = vmatpush1.bf16.msra.mxu0 %v738
    %1581 = vmatprep.subr.bf16.mxu0 %v1470
    %1582 = vmatpush1.bf16.msra.mxu0 %v1469
    %1583 = vmatprep.subr.bf16.mxu0 %v1468
    %1584 = vmatpush1.bf16.msra.mxu0 %v1467
    %1585 = vmatprep.subr.bf16.mxu0 %v1466
    %1586 = vmatpush1.bf16.msra.mxu0 %v1465
    %1587 = vmatprep.subr.bf16.mxu0 %v1464
    %1588 = vmatpush1.bf16.msra.mxu0 %v1463
    %1589 = vmatprep.subr.bf16.mxu0 %v1430
    %1590 = vmatpush1.bf16.msra.mxu0 %v1429
    %1591 = vmatprep.subr.bf16.mxu0 %v1428
    %1592 = vmatpush1.bf16.msra.mxu0 %v1427
    %1593 = vmatprep.subr.bf16.mxu0 0
    %1594 = vmatpush2.bf16.msra.mxu0 0
    %1595 = vmatprep.subr.bf16.mxu0 0
    %1596 = vmatpush2.bf16.msra.mxu0 0
    %1597 = vmatprep.subr.bf16.mxu0 0
    %1598 = vmatpush2.bf16.msra.mxu0 0
    %1599 = vmatprep.subr.bf16.mxu0 0
    %1600 = vmatpush2.bf16.msra.mxu0 0
    %1601 = vmatprep.subr.bf16.mxu0 0
    %1602 = vmatpush2.bf16.msra.mxu0 0
    %1603 = vmatprep.subr.bf16.mxu0 0
    %1604 = vmatpush2.bf16.msra.mxu0 0
    %1605 = vmatprep.subr.bf16.mxu0 %v745
    %1606 = vmatpush2.bf16.msra.mxu0 %v744
    %1607 = vmatprep.subr.bf16.mxu0 %v743
    %1608 = vmatpush2.bf16.msra.mxu0 %v742
    %1609 = vmatprep.mubr.bf16.mxu0 %v1566
    %1610 = vmatmul.mubr.bf16.gmra.mxu0 %v1553
    %v1611 = vpop.f32.mrf.mxu0
    %v1612 = vadd.f32 %v1492, %v1611
    %v1613 = vpop.f32.mrf.mxu0
    %v1614 = vadd.f32 %v1492, %v1613
    %v1615 = vpop.f32.mrf.mxu0
    %v1616 = vadd.f32 %v1497, %v1615
    %v1617 = vpop.f32.mrf.mxu0
    %v1618 = vadd.f32 %v1497, %v1617
    %1619 = vmatprep.mubr.bf16.mxu0 %v1569
    %1620 = vmatmul.mubr.bf16.gmra.mxu0 %v1555
    %v1621 = vpop.f32.mrf.mxu0
    %v1622 = vadd.f32 %v1502, %v1621
    %v1623 = vpop.f32.mrf.mxu0
    %v1624 = vadd.f32 %v1502, %v1623
    %v1625 = vpop.f32.mrf.mxu0
    %v1626 = vadd.f32 %v1507, %v1625
    %v1627 = vpop.f32.mrf.mxu0
    %v1628 = vadd.f32 %v1507, %v1627
    %1629 = vmatprep.mubr.bf16.mxu0 %v1572
    %1630 = vmatmul.mubr.bf16.gmra.mxu0 %v1557
    %v1631 = vpop.f32.mrf.mxu0
    %v1632 = vadd.f32 %v1512, %v1631
    %v1633 = vpop.f32.mrf.mxu0
    %v1634 = vadd.f32 %v1512, %v1633
    %v1635 = vpop.f32.mrf.mxu0
    %v1636 = vadd.f32 %v1517, %v1635
    %v1637 = vpop.f32.mrf.mxu0
    %v1638 = vadd.f32 %v1517, %v1637
    %1639 = vmatprep.mubr.bf16.mxu0 %v1575
    %1640 = vmatmul.mubr.bf16.gmra.mxu0 %v1559
    %v1641 = vpop.f32.mrf.mxu0
    %v1642 = vadd.f32 %v1522, %v1641
    %v1643 = vpop.f32.mrf.mxu0
    %v1644 = vadd.f32 %v1522, %v1643
    %v1645 = vpop.f32.mrf.mxu0
    %v1646 = vadd.f32 %v1527, %v1645
    %v1647 = vpop.f32.mrf.mxu0
    %v1648 = vadd.f32 %v1527, %v1647
    %1649 = vdwg.mxu0
    %v1650 = vtanh.pop %v1612
    %v1651 = vtanh.pop %v1614
    %v1652 = vtanh.pop %v1616
    %v1653 = vtanh.pop %v1618
    %v1654 = vtanh.pop %v1622
    %v1655 = vtanh.pop %v1624
    %v1656 = vtanh.pop %v1626
    %v1657 = vtanh.pop %v1628
    %v1658 = vxor.u32 %v1632, 2147483648
    %v1659 = vxor.u32 %v1634, 2147483648
    %v1660 = vxor.u32 %v1636, 2147483648
    %v1661 = vxor.u32 %v1638, 2147483648
    %v1662 = vxor.u32 %v1642, 2147483648
    %v1663 = vxor.u32 %v1644, 2147483648
    %v1664 = vxor.u32 %v1646, 2147483648
    %v1665 = vxor.u32 %v1648, 2147483648
    %v1666 = vmul.f32 %v1658, 1.442695
    %v1667 = vpow.pop %v1666
    %v1668 = vmul.f32 %v1659, 1.442695
    %v1669 = vpow.pop %v1668
    %v1670 = vmul.f32 %v1660, 1.442695
    %v1671 = vpow.pop %v1670
    %v1672 = vmul.f32 %v1661, 1.442695
    %v1673 = vpow.pop %v1672
    %v1674 = vmul.f32 %v1662, 1.442695
    %v1675 = vpow.pop %v1674
    %v1676 = vmul.f32 %v1663, 1.442695
    %v1677 = vpow.pop %v1676
    %v1678 = vmul.f32 %v1664, 1.442695
    %v1679 = vpow.pop %v1678
    %v1680 = vmul.f32 %v1665, 1.442695
    %v1681 = vpow.pop %v1680
    %v1682 = vadd.f32 %v1667, 1.0
    %v1683 = vadd.f32 %v1669, 1.0
    %v1684 = vadd.f32 %v1671, 1.0
    %v1685 = vadd.f32 %v1673, 1.0
    %v1686 = vadd.f32 %v1675, 1.0
    %v1687 = vadd.f32 %v1677, 1.0
    %v1688 = vadd.f32 %v1679, 1.0
    %v1689 = vadd.f32 %v1681, 1.0
    %v1690 = vrcp.pop %v1682
    %v1691 = vmul.f32 1.0, %v1690
    %v1692 = vrcp.pop %v1683
    %v1693 = vmul.f32 1.0, %v1692
    %v1694 = vrcp.pop %v1684
    %v1695 = vmul.f32 1.0, %v1694
    %v1696 = vrcp.pop %v1685
    %v1697 = vmul.f32 1.0, %v1696
    %v1698 = vrcp.pop %v1686
    %v1699 = vmul.f32 1.0, %v1698
    %v1700 = vrcp.pop %v1687
    %v1701 = vmul.f32 1.0, %v1700
    %v1702 = vrcp.pop %v1688
    %v1703 = vmul.f32 1.0, %v1702
    %v1704 = vrcp.pop %v1689
    %v1705 = vmul.f32 1.0, %v1704
    %v1706 = vmul.f32 %v1650, %v1691
    %v1707 = vmul.f32 %v1651, %v1693
    %v1708 = vmul.f32 %v1652, %v1695
    %v1709 = vmul.f32 %v1653, %v1697
    %v1710 = vmul.f32 %v1654, %v1699
    %v1711 = vmul.f32 %v1655, %v1701
    %v1712 = vmul.f32 %v1656, %v1703
    %v1713 = vmul.f32 %v1657, %v1705
    %v1714 = vpack.c.bf16 %v1708, %v1706
    %v1715 = vpack.c.bf16 %v1709, %v1707
    %v1716 = vpack.c.bf16 %v1712, %v1710
    %v1717 = vpack.c.bf16 %v1713, %v1711
    %s1718 = scalar_lea.vmem %s5, 32
    %v1719 = vld [vmem:[%s1718] sm:$0xf]
    %v1720 = vld [vmem:[%s1718 + $0x4] sm:$0xf]
    %v1721 = vld [vmem:[%s1718 + $0x8] sm:$0xf]
    %v1722 = vld [vmem:[%s1718 + $0xc] sm:$0xf]
    %v1723 = vld [vmem:[%s1718 + $0x10] sm:$0xf]
    %v1724 = vld [vmem:[%s1718 + $0x14] sm:$0xf]
    %v1725 = vld [vmem:[%s1718 + $0x18] sm:$0xf]
    %v1726 = vld [vmem:[%s1718 + $0x1c] sm:$0xf]
    %s1727 = scalar_lea.vmem %s9, 64
    %v1728 = vld [vmem:[%s1727] sm:$0xff]
    %v1729 = vld [vmem:[%s1727 + $0x8] sm:$0xff]
    %v1730 = vld [vmem:[%s1727 + $0x10] sm:$0xff]
    %v1731 = vld [vmem:[%s1727 + $0x18] sm:$0xff]
    %v1732 = vld [vmem:[%s1727 + $0x20] sm:$0xff]
    %v1733 = vld [vmem:[%s1727 + $0x28] sm:$0xff]
    %v1734 = vld [vmem:[%s1727 + $0x30] sm:$0xff]
    %v1735 = vld [vmem:[%s1727 + $0x38] sm:$0xff]
    %1737 = vset.pattern.permute.xlu0 0
    %1738 = vperm.xlu0 %1737, %v1728
    %v1739 = vpop.permute.xlu0 %1738
    %1742 = vset.pattern.permute.xlu0 0
    %1743 = vperm.xlu0 %1742, %v1729
    %v1744 = vpop.permute.xlu0 %1743
    %1747 = vset.pattern.permute.xlu0 0
    %1748 = vperm.xlu0 %1747, %v1730
    %v1749 = vpop.permute.xlu0 %1748
    %1752 = vset.pattern.permute.xlu0 0
    %1753 = vperm.xlu0 %1752, %v1731
    %v1754 = vpop.permute.xlu0 %1753
    %1757 = vset.pattern.permute.xlu0 0
    %1758 = vperm.xlu0 %1757, %v1732
    %v1759 = vpop.permute.xlu0 %1758
    %1762 = vset.pattern.permute.xlu0 0
    %1763 = vperm.xlu0 %1762, %v1733
    %v1764 = vpop.permute.xlu0 %1763
    %1767 = vset.pattern.permute.xlu0 0
    %1768 = vperm.xlu0 %1767, %v1734
    %v1769 = vpop.permute.xlu0 %1768
    %1772 = vset.pattern.permute.xlu0 0
    %1773 = vperm.xlu0 %1772, %v1735
    %v1774 = vpop.permute.xlu0 %1773
    %v1784 = vunpack.c.l.b16 %v1719
    %v1785 = vunpack.c.l.b16 %v1720
    %v1786 = vunpack.c.l.b16 %v1721
    %v1787 = vunpack.c.l.b16 %v1722
    %v1788 = vunpack.c.l.b16 %v1723
    %v1789 = vunpack.c.l.b16 %v1724
    %v1790 = vunpack.c.l.b16 %v1725
    %v1791 = vunpack.c.l.b16 %v1726
    %v1792 = vpack.c.b16 %v1785, %v1784
    %v1793 = vpack.c.b16 %v1787, %v1786
    %v1794 = vpack.c.b16 %v1789, %v1788
    %v1795 = vpack.c.b16 %v1791, %v1790
    %v1797 = vsel %vm1055, %v1792, 0
    %v1800 = vsel %vm1055, %v1793, 0
    %v1803 = vsel %vm1055, %v1794, 0
    %v1806 = vsel %vm1055, %v1795, 0
    %1808 = vmatprep.subr.bf16.mxu0 0
    %1809 = vmatpush1.bf16.msra.mxu0 0
    %1810 = vmatprep.subr.bf16.mxu0 0
    %1811 = vmatpush1.bf16.msra.mxu0 0
    %1812 = vmatprep.subr.bf16.mxu0 0
    %1813 = vmatpush1.bf16.msra.mxu0 0
    %1814 = vmatprep.subr.bf16.mxu0 0
    %1815 = vmatpush1.bf16.msra.mxu0 0
    %1816 = vmatprep.subr.bf16.mxu0 0
    %1817 = vmatpush1.bf16.msra.mxu0 0
    %1818 = vmatprep.subr.bf16.mxu0 0
    %1819 = vmatpush1.bf16.msra.mxu0 0
    %1820 = vmatprep.subr.bf16.mxu0 %v1717
    %1821 = vmatpush1.bf16.msra.mxu0 %v1716
    %1822 = vmatprep.subr.bf16.mxu0 %v1715
    %1823 = vmatpush1.bf16.msra.mxu0 %v1714
    %1824 = vmatprep.subr.bf16.mxu0 0
    %1825 = vmatpush2.bf16.msra.mxu0 0
    %1826 = vmatprep.subr.bf16.mxu0 0
    %1827 = vmatpush2.bf16.msra.mxu0 0
    %1828 = vmatprep.subr.bf16.mxu0 0
    %1829 = vmatpush2.bf16.msra.mxu0 0
    %1830 = vmatprep.subr.bf16.mxu0 0
    %1831 = vmatpush2.bf16.msra.mxu0 0
    %1832 = vmatprep.subr.bf16.mxu0 0
    %1833 = vmatpush2.bf16.msra.mxu0 0
    %1834 = vmatprep.subr.bf16.mxu0 0
    %1835 = vmatpush2.bf16.msra.mxu0 0
    %1836 = vmatprep.subr.bf16.mxu0 0
    %1837 = vmatpush2.bf16.msra.mxu0 0
    %1838 = vmatprep.subr.bf16.mxu0 0
    %1839 = vmatpush2.bf16.msra.mxu0 0
    %1840 = vmatprep.mubr.bf16.mxu0 0
    %1841 = vmatmul.mubr.bf16.gmra.mxu0 %v1797
    %v1842 = vpop.f32.mrf.mxu0
    %v1843 = vadd.f32 %v1739, %v1842
    %v1844 = vpop.f32.mrf.mxu0
    %v1845 = vadd.f32 %v1739, %v1844
    %v1846 = vpop.f32.mrf.mxu0
    %v1847 = vadd.f32 %v1744, %v1846
    %v1848 = vpop.f32.mrf.mxu0
    %v1849 = vadd.f32 %v1744, %v1848
    %1850 = vmatprep.mubr.bf16.mxu0 0
    %1851 = vmatmul.mubr.bf16.gmra.mxu0 %v1800
    %v1852 = vpop.f32.mrf.mxu0
    %v1853 = vadd.f32 %v1749, %v1852
    %v1854 = vpop.f32.mrf.mxu0
    %v1855 = vadd.f32 %v1749, %v1854
    %v1856 = vpop.f32.mrf.mxu0
    %v1857 = vadd.f32 %v1754, %v1856
    %v1858 = vpop.f32.mrf.mxu0
    %v1859 = vadd.f32 %v1754, %v1858
    %1860 = vmatprep.mubr.bf16.mxu0 0
    %1861 = vmatmul.mubr.bf16.gmra.mxu0 %v1803
    %v1862 = vpop.f32.mrf.mxu0
    %v1863 = vadd.f32 %v1759, %v1862
    %v1864 = vpop.f32.mrf.mxu0
    %v1865 = vadd.f32 %v1759, %v1864
    %v1866 = vpop.f32.mrf.mxu0
    %v1867 = vadd.f32 %v1764, %v1866
    %v1868 = vpop.f32.mrf.mxu0
    %v1869 = vadd.f32 %v1764, %v1868
    %1870 = vmatprep.mubr.bf16.mxu0 0
    %1871 = vmatmul.mubr.bf16.gmra.mxu0 %v1806
    %v1872 = vpop.f32.mrf.mxu0
    %v1873 = vadd.f32 %v1769, %v1872
    %v1874 = vpop.f32.mrf.mxu0
    %v1875 = vadd.f32 %v1769, %v1874
    %v1876 = vpop.f32.mrf.mxu0
    %v1877 = vadd.f32 %v1774, %v1876
    %v1878 = vpop.f32.mrf.mxu0
    %v1879 = vadd.f32 %v1774, %v1878
    %1880 = vdwg.mxu0
    %v1881 = vadd.f32 %v1370, %v1843
    %v1882 = vadd.f32 %v1371, %v1845
    %v1883 = vadd.f32 %v1372, %v1847
    %v1884 = vadd.f32 %v1373, %v1849
    %v1885 = vadd.f32 %v1374, %v1853
    %v1886 = vadd.f32 %v1375, %v1855
    %v1887 = vadd.f32 %v1376, %v1857
    %v1888 = vadd.f32 %v1377, %v1859
    %v1889 = vadd.f32 %v1863, %v1386
    %v1890 = vadd.f32 %v1865, %v1387
    %v1891 = vadd.f32 %v1867, %v1388
    %v1892 = vadd.f32 %v1869, %v1389
    %v1893 = vadd.f32 %v1873, %v1390
    %v1894 = vadd.f32 %v1875, %v1391
    %v1895 = vadd.f32 %v1877, %v1392
    %v1896 = vadd.f32 %v1879, %v1393
    %v1897 = vmul.f32 %v1889, 0.70710677
    %v1898 = vmul.f32 %v1890, 0.70710677
    %v1899 = vmul.f32 %v1891, 0.70710677
    %v1900 = vmul.f32 %v1892, 0.70710677
    %v1901 = vmul.f32 %v1893, 0.70710677
    %v1902 = vmul.f32 %v1894, 0.70710677
    %v1903 = vmul.f32 %v1895, 0.70710677
    %v1904 = vmul.f32 %v1896, 0.70710677
    %1905 = vrot.lane.b32.xlu0 %v1897, 2
    %v1906 = vpop.permute.xlu0 %1905
    %1907 = vrot.lane.b32.xlu0 %v1899, 2
    %v1908 = vpop.permute.xlu0 %1907
    %1909 = vrot.lane.b32.xlu0 %v1901, 2
    %v1910 = vpop.permute.xlu0 %1909
    %1911 = vrot.lane.b32.xlu0 %v1903, 2
    %v1912 = vpop.permute.xlu0 %1911
    %1913 = vrot.lane.b32.xlu0 %v1898, 2
    %v1914 = vpop.permute.xlu0 %1913
    %1915 = vrot.lane.b32.xlu0 %v1900, 2
    %v1916 = vpop.permute.xlu0 %1915
    %1917 = vrot.lane.b32.xlu0 %v1902, 2
    %v1918 = vpop.permute.xlu0 %1917
    %1919 = vrot.lane.b32.xlu0 %v1904, 2
    %v1920 = vpop.permute.xlu0 %1919
    %v1921 = vsel %vm901, %v1906, %v1914
    %v1922 = vsel %vm901, %v1908, %v1916
    %v1923 = vsel %vm901, %v1910, %v1918
    %v1924 = vsel %vm901, %v1912, %v1920
    %v1925 = vsel %vm901, %v1914, %v1906
    %v1926 = vsel %vm901, %v1916, %v1908
    %v1927 = vsel %vm901, %v1918, %v1910
    %v1928 = vsel %vm901, %v1920, %v1912
    %v1929 = vsel %vm881, %v1925, 0.0
    %v1930 = vsel %vm882, %v1921, 0.0
    %v1931 = vsel %vm881, %v1926, 0.0
    %v1932 = vsel %vm882, %v1922, 0.0
    %v1933 = vsel %vm881, %v1927, 0.0
    %v1934 = vsel %vm882, %v1923, 0.0
    %v1935 = vsel %vm881, %v1928, 0.0
    %v1936 = vsel %vm882, %v1924, 0.0
    %v1937 = vpack.c.bf16 %v1931, %v1929
    %v1938 = vpack.c.bf16 %v1932, %v1930
    %v1939 = vpack.c.bf16 %v1935, %v1933
    %v1940 = vpack.c.bf16 %v1936, %v1934
    %1941 = vrot.lane.b32.xlu0 %v1897, 1
    %v1942 = vpop.permute.xlu0 %1941
    %1943 = vrot.lane.b32.xlu0 %v1899, 1
    %v1944 = vpop.permute.xlu0 %1943
    %1945 = vrot.lane.b32.xlu0 %v1901, 1
    %v1946 = vpop.permute.xlu0 %1945
    %1947 = vrot.lane.b32.xlu0 %v1903, 1
    %v1948 = vpop.permute.xlu0 %1947
    %1949 = vrot.lane.b32.xlu0 %v1898, 1
    %v1950 = vpop.permute.xlu0 %1949
    %1951 = vrot.lane.b32.xlu0 %v1900, 1
    %v1952 = vpop.permute.xlu0 %1951
    %1953 = vrot.lane.b32.xlu0 %v1902, 1
    %v1954 = vpop.permute.xlu0 %1953
    %1955 = vrot.lane.b32.xlu0 %v1904, 1
    %v1956 = vpop.permute.xlu0 %1955
    %v1957 = vsel %vm938, %v1942, %v1950
    %v1958 = vsel %vm938, %v1944, %v1952
    %v1959 = vsel %vm938, %v1946, %v1954
    %v1960 = vsel %vm938, %v1948, %v1956
    %v1961 = vsel %vm938, %v1950, %v1942
    %v1962 = vsel %vm938, %v1952, %v1944
    %v1963 = vsel %vm938, %v1954, %v1946
    %v1964 = vsel %vm938, %v1956, %v1948
    %v1965 = vsel %vm879, %v1961, 0.0
    %v1966 = vsel %vm880, %v1957, 0.0
    %v1967 = vsel %vm879, %v1962, 0.0
    %v1968 = vsel %vm880, %v1958, 0.0
    %v1969 = vsel %vm879, %v1963, 0.0
    %v1970 = vsel %vm880, %v1959, 0.0
    %v1971 = vsel %vm879, %v1964, 0.0
    %v1972 = vsel %vm880, %v1960, 0.0
    %v1973 = vpack.c.bf16 %v1967, %v1965
    %v1974 = vpack.c.bf16 %v1968, %v1966
    %v1975 = vpack.c.bf16 %v1971, %v1969
    %v1976 = vpack.c.bf16 %v1972, %v1970
    %v1977 = vpack.c.bf16 %v1899, %v1897
    %v1978 = vpack.c.bf16 %v1900, %v1898
    %v1979 = vpack.c.bf16 %v1903, %v1901
    %v1980 = vpack.c.bf16 %v1904, %v1902
    %s1981 = scalar_lea.vmem %s4, 128
    %v1982 = vld [vmem:[%s1981] sm:$0xff]
    %v1983 = vld [vmem:[%s1981 + $0x8] sm:$0xff]
    %v1984 = vld [vmem:[%s1981 + $0x10] sm:$0xff]
    %v1985 = vld [vmem:[%s1981 + $0x18] sm:$0xff]
    %v1986 = vld [vmem:[%s1981 + $0x20] sm:$0xff]
    %v1987 = vld [vmem:[%s1981 + $0x28] sm:$0xff]
    %v1988 = vld [vmem:[%s1981 + $0x30] sm:$0xff]
    %v1989 = vld [vmem:[%s1981 + $0x38] sm:$0xff]
    %s1990 = scalar_lea.vmem %s8, 128
    %v1991 = vld [vmem:[%s1990] sm:$0xff]
    %v1992 = vld [vmem:[%s1990 + $0x8] sm:$0xff]
    %v1993 = vld [vmem:[%s1990 + $0x10] sm:$0xff]
    %v1994 = vld [vmem:[%s1990 + $0x18] sm:$0xff]
    %v1995 = vld [vmem:[%s1990 + $0x20] sm:$0xff]
    %v1996 = vld [vmem:[%s1990 + $0x28] sm:$0xff]
    %v1997 = vld [vmem:[%s1990 + $0x30] sm:$0xff]
    %v1998 = vld [vmem:[%s1990 + $0x38] sm:$0xff]
    %2000 = vset.pattern.permute.xlu0 0
    %2001 = vperm.xlu0 %2000, %v1991
    %v2002 = vpop.permute.xlu0 %2001
    %2005 = vset.pattern.permute.xlu0 0
    %2006 = vperm.xlu0 %2005, %v1992
    %v2007 = vpop.permute.xlu0 %2006
    %2010 = vset.pattern.permute.xlu0 0
    %2011 = vperm.xlu0 %2010, %v1993
    %v2012 = vpop.permute.xlu0 %2011
    %2015 = vset.pattern.permute.xlu0 0
    %2016 = vperm.xlu0 %2015, %v1994
    %v2017 = vpop.permute.xlu0 %2016
    %2020 = vset.pattern.permute.xlu0 0
    %2021 = vperm.xlu0 %2020, %v1995
    %v2022 = vpop.permute.xlu0 %2021
    %2025 = vset.pattern.permute.xlu0 0
    %2026 = vperm.xlu0 %2025, %v1996
    %v2027 = vpop.permute.xlu0 %2026
    %2030 = vset.pattern.permute.xlu0 0
    %2031 = vperm.xlu0 %2030, %v1997
    %v2032 = vpop.permute.xlu0 %2031
    %2035 = vset.pattern.permute.xlu0 0
    %2036 = vperm.xlu0 %2035, %v1998
    %v2037 = vpop.permute.xlu0 %2036
    %v2047 = vunpack.c.l.b16 %v1982
    %v2048 = vunpack.c.h.b16 %v1982
    %v2049 = vunpack.c.l.b16 %v1983
    %v2050 = vunpack.c.h.b16 %v1983
    %v2051 = vunpack.c.l.b16 %v1984
    %v2052 = vunpack.c.h.b16 %v1984
    %v2053 = vunpack.c.l.b16 %v1985
    %v2054 = vunpack.c.h.b16 %v1985
    %v2055 = vunpack.c.l.b16 %v1986
    %v2056 = vunpack.c.h.b16 %v1986
    %v2057 = vunpack.c.l.b16 %v1987
    %v2058 = vunpack.c.h.b16 %v1987
    %v2059 = vunpack.c.l.b16 %v1988
    %v2060 = vunpack.c.h.b16 %v1988
    %v2061 = vunpack.c.l.b16 %v1989
    %v2062 = vunpack.c.h.b16 %v1989
    %v2063 = vpack.c.b16 %v2049, %v2047
    %v2064 = vpack.c.b16 %v2050, %v2048
    %v2065 = vpack.c.b16 %v2053, %v2051
    %v2066 = vpack.c.b16 %v2054, %v2052
    %v2067 = vpack.c.b16 %v2057, %v2055
    %v2068 = vpack.c.b16 %v2058, %v2056
    %v2069 = vpack.c.b16 %v2061, %v2059
    %v2070 = vpack.c.b16 %v2062, %v2060
    %v2076 = vsel %vm1055, %v2064, 0
    %v2079 = vsel %vm1055, %v2066, 0
    %v2082 = vsel %vm1055, %v2068, 0
    %v2085 = vsel %vm1055, %v2070, 0
    %2087 = vmatprep.subr.bf16.mxu0 %v741
    %2088 = vmatpush1.bf16.msra.mxu0 %v740
    %2089 = vmatprep.subr.bf16.mxu0 %v739
    %2090 = vmatpush1.bf16.msra.mxu0 %v738
    %2091 = vmatprep.subr.bf16.mxu0 %v1980
    %2092 = vmatpush1.bf16.msra.mxu0 %v1979
    %2093 = vmatprep.subr.bf16.mxu0 %v1978
    %2094 = vmatpush1.bf16.msra.mxu0 %v1977
    %2095 = vmatprep.subr.bf16.mxu0 %v1976
    %2096 = vmatpush1.bf16.msra.mxu0 %v1975
    %2097 = vmatprep.subr.bf16.mxu0 %v1974
    %2098 = vmatpush1.bf16.msra.mxu0 %v1973
    %2099 = vmatprep.subr.bf16.mxu0 %v1940
    %2100 = vmatpush1.bf16.msra.mxu0 %v1939
    %2101 = vmatprep.subr.bf16.mxu0 %v1938
    %2102 = vmatpush1.bf16.msra.mxu0 %v1937
    %2103 = vmatprep.subr.bf16.mxu0 0
    %2104 = vmatpush2.bf16.msra.mxu0 0
    %2105 = vmatprep.subr.bf16.mxu0 0
    %2106 = vmatpush2.bf16.msra.mxu0 0
    %2107 = vmatprep.subr.bf16.mxu0 0
    %2108 = vmatpush2.bf16.msra.mxu0 0
    %2109 = vmatprep.subr.bf16.mxu0 0
    %2110 = vmatpush2.bf16.msra.mxu0 0
    %2111 = vmatprep.subr.bf16.mxu0 0
    %2112 = vmatpush2.bf16.msra.mxu0 0
    %2113 = vmatprep.subr.bf16.mxu0 0
    %2114 = vmatpush2.bf16.msra.mxu0 0
    %2115 = vmatprep.subr.bf16.mxu0 %v745
    %2116 = vmatpush2.bf16.msra.mxu0 %v744
    %2117 = vmatprep.subr.bf16.mxu0 %v743
    %2118 = vmatpush2.bf16.msra.mxu0 %v742
    %2119 = vmatprep.mubr.bf16.mxu0 %v2076
    %2120 = vmatmul.mubr.bf16.gmra.mxu0 %v2063
    %v2121 = vpop.f32.mrf.mxu0
    %v2122 = vadd.f32 %v2002, %v2121
    %v2123 = vpop.f32.mrf.mxu0
    %v2124 = vadd.f32 %v2002, %v2123
    %v2125 = vpop.f32.mrf.mxu0
    %v2126 = vadd.f32 %v2007, %v2125
    %v2127 = vpop.f32.mrf.mxu0
    %v2128 = vadd.f32 %v2007, %v2127
    %2129 = vmatprep.mubr.bf16.mxu0 %v2079
    %2130 = vmatmul.mubr.bf16.gmra.mxu0 %v2065
    %v2131 = vpop.f32.mrf.mxu0
    %v2132 = vadd.f32 %v2012, %v2131
    %v2133 = vpop.f32.mrf.mxu0
    %v2134 = vadd.f32 %v2012, %v2133
    %v2135 = vpop.f32.mrf.mxu0
    %v2136 = vadd.f32 %v2017, %v2135
    %v2137 = vpop.f32.mrf.mxu0
    %v2138 = vadd.f32 %v2017, %v2137
    %2139 = vmatprep.mubr.bf16.mxu0 %v2082
    %2140 = vmatmul.mubr.bf16.gmra.mxu0 %v2067
    %v2141 = vpop.f32.mrf.mxu0
    %v2142 = vadd.f32 %v2022, %v2141
    %v2143 = vpop.f32.mrf.mxu0
    %v2144 = vadd.f32 %v2022, %v2143
    %v2145 = vpop.f32.mrf.mxu0
    %v2146 = vadd.f32 %v2027, %v2145
    %v2147 = vpop.f32.mrf.mxu0
    %v2148 = vadd.f32 %v2027, %v2147
    %2149 = vmatprep.mubr.bf16.mxu0 %v2085
    %2150 = vmatmul.mubr.bf16.gmra.mxu0 %v2069
    %v2151 = vpop.f32.mrf.mxu0
    %v2152 = vadd.f32 %v2032, %v2151
    %v2153 = vpop.f32.mrf.mxu0
    %v2154 = vadd.f32 %v2032, %v2153
    %v2155 = vpop.f32.mrf.mxu0
    %v2156 = vadd.f32 %v2037, %v2155
    %v2157 = vpop.f32.mrf.mxu0
    %v2158 = vadd.f32 %v2037, %v2157
    %2159 = vdwg.mxu0
    %v2160 = vtanh.pop %v2122
    %v2161 = vtanh.pop %v2124
    %v2162 = vtanh.pop %v2126
    %v2163 = vtanh.pop %v2128
    %v2164 = vtanh.pop %v2132
    %v2165 = vtanh.pop %v2134
    %v2166 = vtanh.pop %v2136
    %v2167 = vtanh.pop %v2138
    %v2168 = vxor.u32 %v2142, 2147483648
    %v2169 = vxor.u32 %v2144, 2147483648
    %v2170 = vxor.u32 %v2146, 2147483648
    %v2171 = vxor.u32 %v2148, 2147483648
    %v2172 = vxor.u32 %v2152, 2147483648
    %v2173 = vxor.u32 %v2154, 2147483648
    %v2174 = vxor.u32 %v2156, 2147483648
    %v2175 = vxor.u32 %v2158, 2147483648
    %v2176 = vmul.f32 %v2168, 1.442695
    %v2177 = vpow.pop %v2176
    %v2178 = vmul.f32 %v2169, 1.442695
    %v2179 = vpow.pop %v2178
    %v2180 = vmul.f32 %v2170, 1.442695
    %v2181 = vpow.pop %v2180
    %v2182 = vmul.f32 %v2171, 1.442695
    %v2183 = vpow.pop %v2182
    %v2184 = vmul.f32 %v2172, 1.442695
    %v2185 = vpow.pop %v2184
    %v2186 = vmul.f32 %v2173, 1.442695
    %v2187 = vpow.pop %v2186
    %v2188 = vmul.f32 %v2174, 1.442695
    %v2189 = vpow.pop %v2188
    %v2190 = vmul.f32 %v2175, 1.442695
    %v2191 = vpow.pop %v2190
    %v2192 = vadd.f32 %v2177, 1.0
    %v2193 = vadd.f32 %v2179, 1.0
    %v2194 = vadd.f32 %v2181, 1.0
    %v2195 = vadd.f32 %v2183, 1.0
    %v2196 = vadd.f32 %v2185, 1.0
    %v2197 = vadd.f32 %v2187, 1.0
    %v2198 = vadd.f32 %v2189, 1.0
    %v2199 = vadd.f32 %v2191, 1.0
    %v2200 = vrcp.pop %v2192
    %v2201 = vmul.f32 1.0, %v2200
    %v2202 = vrcp.pop %v2193
    %v2203 = vmul.f32 1.0, %v2202
    %v2204 = vrcp.pop %v2194
    %v2205 = vmul.f32 1.0, %v2204
    %v2206 = vrcp.pop %v2195
    %v2207 = vmul.f32 1.0, %v2206
    %v2208 = vrcp.pop %v2196
    %v2209 = vmul.f32 1.0, %v2208
    %v2210 = vrcp.pop %v2197
    %v2211 = vmul.f32 1.0, %v2210
    %v2212 = vrcp.pop %v2198
    %v2213 = vmul.f32 1.0, %v2212
    %v2214 = vrcp.pop %v2199
    %v2215 = vmul.f32 1.0, %v2214
    %v2216 = vmul.f32 %v2160, %v2201
    %v2217 = vmul.f32 %v2161, %v2203
    %v2218 = vmul.f32 %v2162, %v2205
    %v2219 = vmul.f32 %v2163, %v2207
    %v2220 = vmul.f32 %v2164, %v2209
    %v2221 = vmul.f32 %v2165, %v2211
    %v2222 = vmul.f32 %v2166, %v2213
    %v2223 = vmul.f32 %v2167, %v2215
    %v2224 = vpack.c.bf16 %v2218, %v2216
    %v2225 = vpack.c.bf16 %v2219, %v2217
    %v2226 = vpack.c.bf16 %v2222, %v2220
    %v2227 = vpack.c.bf16 %v2223, %v2221
    %s2228 = scalar_lea.vmem %s5, 64
    %v2229 = vld [vmem:[%s2228] sm:$0xf]
    %v2230 = vld [vmem:[%s2228 + $0x4] sm:$0xf]
    %v2231 = vld [vmem:[%s2228 + $0x8] sm:$0xf]
    %v2232 = vld [vmem:[%s2228 + $0xc] sm:$0xf]
    %v2233 = vld [vmem:[%s2228 + $0x10] sm:$0xf]
    %v2234 = vld [vmem:[%s2228 + $0x14] sm:$0xf]
    %v2235 = vld [vmem:[%s2228 + $0x18] sm:$0xf]
    %v2236 = vld [vmem:[%s2228 + $0x1c] sm:$0xf]
    %s2237 = scalar_lea.vmem %s9, 128
    %v2238 = vld [vmem:[%s2237] sm:$0xff]
    %v2239 = vld [vmem:[%s2237 + $0x8] sm:$0xff]
    %v2240 = vld [vmem:[%s2237 + $0x10] sm:$0xff]
    %v2241 = vld [vmem:[%s2237 + $0x18] sm:$0xff]
    %v2242 = vld [vmem:[%s2237 + $0x20] sm:$0xff]
    %v2243 = vld [vmem:[%s2237 + $0x28] sm:$0xff]
    %v2244 = vld [vmem:[%s2237 + $0x30] sm:$0xff]
    %v2245 = vld [vmem:[%s2237 + $0x38] sm:$0xff]
    %2247 = vset.pattern.permute.xlu0 0
    %2248 = vperm.xlu0 %2247, %v2238
    %v2249 = vpop.permute.xlu0 %2248
    %2252 = vset.pattern.permute.xlu0 0
    %2253 = vperm.xlu0 %2252, %v2239
    %v2254 = vpop.permute.xlu0 %2253
    %2257 = vset.pattern.permute.xlu0 0
    %2258 = vperm.xlu0 %2257, %v2240
    %v2259 = vpop.permute.xlu0 %2258
    %2262 = vset.pattern.permute.xlu0 0
    %2263 = vperm.xlu0 %2262, %v2241
    %v2264 = vpop.permute.xlu0 %2263
    %2267 = vset.pattern.permute.xlu0 0
    %2268 = vperm.xlu0 %2267, %v2242
    %v2269 = vpop.permute.xlu0 %2268
    %2272 = vset.pattern.permute.xlu0 0
    %2273 = vperm.xlu0 %2272, %v2243
    %v2274 = vpop.permute.xlu0 %2273
    %2277 = vset.pattern.permute.xlu0 0
    %2278 = vperm.xlu0 %2277, %v2244
    %v2279 = vpop.permute.xlu0 %2278
    %2282 = vset.pattern.permute.xlu0 0
    %2283 = vperm.xlu0 %2282, %v2245
    %v2284 = vpop.permute.xlu0 %2283
    %v2294 = vunpack.c.l.b16 %v2229
    %v2295 = vunpack.c.l.b16 %v2230
    %v2296 = vunpack.c.l.b16 %v2231
    %v2297 = vunpack.c.l.b16 %v2232
    %v2298 = vunpack.c.l.b16 %v2233
    %v2299 = vunpack.c.l.b16 %v2234
    %v2300 = vunpack.c.l.b16 %v2235
    %v2301 = vunpack.c.l.b16 %v2236
    %v2302 = vpack.c.b16 %v2295, %v2294
    %v2303 = vpack.c.b16 %v2297, %v2296
    %v2304 = vpack.c.b16 %v2299, %v2298
    %v2305 = vpack.c.b16 %v2301, %v2300
    %v2307 = vsel %vm1055, %v2302, 0
    %v2310 = vsel %vm1055, %v2303, 0
    %v2313 = vsel %vm1055, %v2304, 0
    %v2316 = vsel %vm1055, %v2305, 0
    %2318 = vmatprep.subr.bf16.mxu0 0
    %2319 = vmatpush1.bf16.msra.mxu0 0
    %2320 = vmatprep.subr.bf16.mxu0 0
    %2321 = vmatpush1.bf16.msra.mxu0 0
    %2322 = vmatprep.subr.bf16.mxu0 0
    %2323 = vmatpush1.bf16.msra.mxu0 0
    %2324 = vmatprep.subr.bf16.mxu0 0
    %2325 = vmatpush1.bf16.msra.mxu0 0
    %2326 = vmatprep.subr.bf16.mxu0 0
    %2327 = vmatpush1.bf16.msra.mxu0 0
    %2328 = vmatprep.subr.bf16.mxu0 0
    %2329 = vmatpush1.bf16.msra.mxu0 0
    %2330 = vmatprep.subr.bf16.mxu0 %v2227
    %2331 = vmatpush1.bf16.msra.mxu0 %v2226
    %2332 = vmatprep.subr.bf16.mxu0 %v2225
    %2333 = vmatpush1.bf16.msra.mxu0 %v2224
    %2334 = vmatprep.subr.bf16.mxu0 0
    %2335 = vmatpush2.bf16.msra.mxu0 0
    %2336 = vmatprep.subr.bf16.mxu0 0
    %2337 = vmatpush2.bf16.msra.mxu0 0
    %2338 = vmatprep.subr.bf16.mxu0 0
    %2339 = vmatpush2.bf16.msra.mxu0 0
    %2340 = vmatprep.subr.bf16.mxu0 0
    %2341 = vmatpush2.bf16.msra.mxu0 0
    %2342 = vmatprep.subr.bf16.mxu0 0
    %2343 = vmatpush2.bf16.msra.mxu0 0
    %2344 = vmatprep.subr.bf16.mxu0 0
    %2345 = vmatpush2.bf16.msra.mxu0 0
    %2346 = vmatprep.subr.bf16.mxu0 0
    %2347 = vmatpush2.bf16.msra.mxu0 0
    %2348 = vmatprep.subr.bf16.mxu0 0
    %2349 = vmatpush2.bf16.msra.mxu0 0
    %2350 = vmatprep.mubr.bf16.mxu0 0
    %2351 = vmatmul.mubr.bf16.gmra.mxu0 %v2307
    %v2352 = vpop.f32.mrf.mxu0
    %v2353 = vadd.f32 %v2249, %v2352
    %v2354 = vpop.f32.mrf.mxu0
    %v2355 = vadd.f32 %v2249, %v2354
    %v2356 = vpop.f32.mrf.mxu0
    %v2357 = vadd.f32 %v2254, %v2356
    %v2358 = vpop.f32.mrf.mxu0
    %v2359 = vadd.f32 %v2254, %v2358
    %2360 = vmatprep.mubr.bf16.mxu0 0
    %2361 = vmatmul.mubr.bf16.gmra.mxu0 %v2310
    %v2362 = vpop.f32.mrf.mxu0
    %v2363 = vadd.f32 %v2259, %v2362
    %v2364 = vpop.f32.mrf.mxu0
    %v2365 = vadd.f32 %v2259, %v2364
    %v2366 = vpop.f32.mrf.mxu0
    %v2367 = vadd.f32 %v2264, %v2366
    %v2368 = vpop.f32.mrf.mxu0
    %v2369 = vadd.f32 %v2264, %v2368
    %2370 = vmatprep.mubr.bf16.mxu0 0
    %2371 = vmatmul.mubr.bf16.gmra.mxu0 %v2313
    %v2372 = vpop.f32.mrf.mxu0
    %v2373 = vadd.f32 %v2269, %v2372
    %v2374 = vpop.f32.mrf.mxu0
    %v2375 = vadd.f32 %v2269, %v2374
    %v2376 = vpop.f32.mrf.mxu0
    %v2377 = vadd.f32 %v2274, %v2376
    %v2378 = vpop.f32.mrf.mxu0
    %v2379 = vadd.f32 %v2274, %v2378
    %2380 = vmatprep.mubr.bf16.mxu0 0
    %2381 = vmatmul.mubr.bf16.gmra.mxu0 %v2316
    %v2382 = vpop.f32.mrf.mxu0
    %v2383 = vadd.f32 %v2279, %v2382
    %v2384 = vpop.f32.mrf.mxu0
    %v2385 = vadd.f32 %v2279, %v2384
    %v2386 = vpop.f32.mrf.mxu0
    %v2387 = vadd.f32 %v2284, %v2386
    %v2388 = vpop.f32.mrf.mxu0
    %v2389 = vadd.f32 %v2284, %v2388
    %2390 = vdwg.mxu0
    %v2391 = vadd.f32 %v1881, %v2353
    %v2392 = vadd.f32 %v1882, %v2355
    %v2393 = vadd.f32 %v1883, %v2357
    %v2394 = vadd.f32 %v1884, %v2359
    %v2395 = vadd.f32 %v1885, %v2363
    %v2396 = vadd.f32 %v1886, %v2365
    %v2397 = vadd.f32 %v1887, %v2367
    %v2398 = vadd.f32 %v1888, %v2369
    %v2399 = vadd.f32 %v2373, %v1897
    %v2400 = vadd.f32 %v2375, %v1898
    %v2401 = vadd.f32 %v2377, %v1899
    %v2402 = vadd.f32 %v2379, %v1900
    %v2403 = vadd.f32 %v2383, %v1901
    %v2404 = vadd.f32 %v2385, %v1902
    %v2405 = vadd.f32 %v2387, %v1903
    %v2406 = vadd.f32 %v2389, %v1904
    %v2407 = vmul.f32 %v2399, 0.70710677
    %v2408 = vmul.f32 %v2400, 0.70710677
    %v2409 = vmul.f32 %v2401, 0.70710677
    %v2410 = vmul.f32 %v2402, 0.70710677
    %v2411 = vmul.f32 %v2403, 0.70710677
    %v2412 = vmul.f32 %v2404, 0.70710677
    %v2413 = vmul.f32 %v2405, 0.70710677
    %v2414 = vmul.f32 %v2406, 0.70710677
    %2415 = vrot.lane.b32.xlu0 %v2407, 4
    %v2416 = vpop.permute.xlu0 %2415
    %2417 = vrot.lane.b32.xlu0 %v2409, 4
    %v2418 = vpop.permute.xlu0 %2417
    %2419 = vrot.lane.b32.xlu0 %v2411, 4
    %v2420 = vpop.permute.xlu0 %2419
    %2421 = vrot.lane.b32.xlu0 %v2413, 4
    %v2422 = vpop.permute.xlu0 %2421
    %2423 = vrot.lane.b32.xlu0 %v2408, 4
    %v2424 = vpop.permute.xlu0 %2423
    %2425 = vrot.lane.b32.xlu0 %v2410, 4
    %v2426 = vpop.permute.xlu0 %2425
    %2427 = vrot.lane.b32.xlu0 %v2412, 4
    %v2428 = vpop.permute.xlu0 %2427
    %2429 = vrot.lane.b32.xlu0 %v2414, 4
    %v2430 = vpop.permute.xlu0 %2429
    %v2431 = vsel %vm1410, %v2416, %v2424
    %v2432 = vsel %vm1410, %v2418, %v2426
    %v2433 = vsel %vm1410, %v2420, %v2428
    %v2434 = vsel %vm1410, %v2422, %v2430
    %v2435 = vsel %vm1410, %v2424, %v2416
    %v2436 = vsel %vm1410, %v2426, %v2418
    %v2437 = vsel %vm1410, %v2428, %v2420
    %v2438 = vsel %vm1410, %v2430, %v2422
    %v2439 = vsel %vm883, %v2435, 0.0
    %v2440 = vsel %vm884, %v2431, 0.0
    %v2441 = vsel %vm883, %v2436, 0.0
    %v2442 = vsel %vm884, %v2432, 0.0
    %v2443 = vsel %vm883, %v2437, 0.0
    %v2444 = vsel %vm884, %v2433, 0.0
    %v2445 = vsel %vm883, %v2438, 0.0
    %v2446 = vsel %vm884, %v2434, 0.0
    %v2447 = vpack.c.bf16 %v2441, %v2439
    %v2448 = vpack.c.bf16 %v2442, %v2440
    %v2449 = vpack.c.bf16 %v2445, %v2443
    %v2450 = vpack.c.bf16 %v2446, %v2444
    %2451 = vrot.lane.b32.xlu0 %v2407, 2
    %v2452 = vpop.permute.xlu0 %2451
    %2453 = vrot.lane.b32.xlu0 %v2409, 2
    %v2454 = vpop.permute.xlu0 %2453
    %2455 = vrot.lane.b32.xlu0 %v2411, 2
    %v2456 = vpop.permute.xlu0 %2455
    %2457 = vrot.lane.b32.xlu0 %v2413, 2
    %v2458 = vpop.permute.xlu0 %2457
    %2459 = vrot.lane.b32.xlu0 %v2408, 2
    %v2460 = vpop.permute.xlu0 %2459
    %2461 = vrot.lane.b32.xlu0 %v2410, 2
    %v2462 = vpop.permute.xlu0 %2461
    %2463 = vrot.lane.b32.xlu0 %v2412, 2
    %v2464 = vpop.permute.xlu0 %2463
    %2465 = vrot.lane.b32.xlu0 %v2414, 2
    %v2466 = vpop.permute.xlu0 %2465
    %v2467 = vsel %vm901, %v2452, %v2460
    %v2468 = vsel %vm901, %v2454, %v2462
    %v2469 = vsel %vm901, %v2456, %v2464
    %v2470 = vsel %vm901, %v2458, %v2466
    %v2471 = vsel %vm901, %v2460, %v2452
    %v2472 = vsel %vm901, %v2462, %v2454
    %v2473 = vsel %vm901, %v2464, %v2456
    %v2474 = vsel %vm901, %v2466, %v2458
    %v2475 = vsel %vm881, %v2471, 0.0
    %v2476 = vsel %vm882, %v2467, 0.0
    %v2477 = vsel %vm881, %v2472, 0.0
    %v2478 = vsel %vm882, %v2468, 0.0
    %v2479 = vsel %vm881, %v2473, 0.0
    %v2480 = vsel %vm882, %v2469, 0.0
    %v2481 = vsel %vm881, %v2474, 0.0
    %v2482 = vsel %vm882, %v2470, 0.0
    %v2483 = vpack.c.bf16 %v2477, %v2475
    %v2484 = vpack.c.bf16 %v2478, %v2476
    %v2485 = vpack.c.bf16 %v2481, %v2479
    %v2486 = vpack.c.bf16 %v2482, %v2480
    %v2487 = vpack.c.bf16 %v2409, %v2407
    %v2488 = vpack.c.bf16 %v2410, %v2408
    %v2489 = vpack.c.bf16 %v2413, %v2411
    %v2490 = vpack.c.bf16 %v2414, %v2412
    %s2491 = scalar_lea.vmem %s4, 192
    %v2492 = vld [vmem:[%s2491] sm:$0xff]
    %v2493 = vld [vmem:[%s2491 + $0x8] sm:$0xff]
    %v2494 = vld [vmem:[%s2491 + $0x10] sm:$0xff]
    %v2495 = vld [vmem:[%s2491 + $0x18] sm:$0xff]
    %v2496 = vld [vmem:[%s2491 + $0x20] sm:$0xff]
    %v2497 = vld [vmem:[%s2491 + $0x28] sm:$0xff]
    %v2498 = vld [vmem:[%s2491 + $0x30] sm:$0xff]
    %v2499 = vld [vmem:[%s2491 + $0x38] sm:$0xff]
    %s2500 = scalar_lea.vmem %s8, 192
    %v2501 = vld [vmem:[%s2500] sm:$0xff]
    %v2502 = vld [vmem:[%s2500 + $0x8] sm:$0xff]
    %v2503 = vld [vmem:[%s2500 + $0x10] sm:$0xff]
    %v2504 = vld [vmem:[%s2500 + $0x18] sm:$0xff]
    %v2505 = vld [vmem:[%s2500 + $0x20] sm:$0xff]
    %v2506 = vld [vmem:[%s2500 + $0x28] sm:$0xff]
    %v2507 = vld [vmem:[%s2500 + $0x30] sm:$0xff]
    %v2508 = vld [vmem:[%s2500 + $0x38] sm:$0xff]
    %2510 = vset.pattern.permute.xlu0 0
    %2511 = vperm.xlu0 %2510, %v2501
    %v2512 = vpop.permute.xlu0 %2511
    %2515 = vset.pattern.permute.xlu0 0
    %2516 = vperm.xlu0 %2515, %v2502
    %v2517 = vpop.permute.xlu0 %2516
    %2520 = vset.pattern.permute.xlu0 0
    %2521 = vperm.xlu0 %2520, %v2503
    %v2522 = vpop.permute.xlu0 %2521
    %2525 = vset.pattern.permute.xlu0 0
    %2526 = vperm.xlu0 %2525, %v2504
    %v2527 = vpop.permute.xlu0 %2526
    %2530 = vset.pattern.permute.xlu0 0
    %2531 = vperm.xlu0 %2530, %v2505
    %v2532 = vpop.permute.xlu0 %2531
    %2535 = vset.pattern.permute.xlu0 0
    %2536 = vperm.xlu0 %2535, %v2506
    %v2537 = vpop.permute.xlu0 %2536
    %2540 = vset.pattern.permute.xlu0 0
    %2541 = vperm.xlu0 %2540, %v2507
    %v2542 = vpop.permute.xlu0 %2541
    %2545 = vset.pattern.permute.xlu0 0
    %2546 = vperm.xlu0 %2545, %v2508
    %v2547 = vpop.permute.xlu0 %2546
    %v2557 = vunpack.c.l.b16 %v2492
    %v2558 = vunpack.c.h.b16 %v2492
    %v2559 = vunpack.c.l.b16 %v2493
    %v2560 = vunpack.c.h.b16 %v2493
    %v2561 = vunpack.c.l.b16 %v2494
    %v2562 = vunpack.c.h.b16 %v2494
    %v2563 = vunpack.c.l.b16 %v2495
    %v2564 = vunpack.c.h.b16 %v2495
    %v2565 = vunpack.c.l.b16 %v2496
    %v2566 = vunpack.c.h.b16 %v2496
    %v2567 = vunpack.c.l.b16 %v2497
    %v2568 = vunpack.c.h.b16 %v2497
    %v2569 = vunpack.c.l.b16 %v2498
    %v2570 = vunpack.c.h.b16 %v2498
    %v2571 = vunpack.c.l.b16 %v2499
    %v2572 = vunpack.c.h.b16 %v2499
    %v2573 = vpack.c.b16 %v2559, %v2557
    %v2574 = vpack.c.b16 %v2560, %v2558
    %v2575 = vpack.c.b16 %v2563, %v2561
    %v2576 = vpack.c.b16 %v2564, %v2562
    %v2577 = vpack.c.b16 %v2567, %v2565
    %v2578 = vpack.c.b16 %v2568, %v2566
    %v2579 = vpack.c.b16 %v2571, %v2569
    %v2580 = vpack.c.b16 %v2572, %v2570
    %v2586 = vsel %vm1055, %v2574, 0
    %v2589 = vsel %vm1055, %v2576, 0
    %v2592 = vsel %vm1055, %v2578, 0
    %v2595 = vsel %vm1055, %v2580, 0
    %2597 = vmatprep.subr.bf16.mxu0 %v741
    %2598 = vmatpush1.bf16.msra.mxu0 %v740
    %2599 = vmatprep.subr.bf16.mxu0 %v739
    %2600 = vmatpush1.bf16.msra.mxu0 %v738
    %2601 = vmatprep.subr.bf16.mxu0 %v2490
    %2602 = vmatpush1.bf16.msra.mxu0 %v2489
    %2603 = vmatprep.subr.bf16.mxu0 %v2488
    %2604 = vmatpush1.bf16.msra.mxu0 %v2487
    %2605 = vmatprep.subr.bf16.mxu0 %v2486
    %2606 = vmatpush1.bf16.msra.mxu0 %v2485
    %2607 = vmatprep.subr.bf16.mxu0 %v2484
    %2608 = vmatpush1.bf16.msra.mxu0 %v2483
    %2609 = vmatprep.subr.bf16.mxu0 %v2450
    %2610 = vmatpush1.bf16.msra.mxu0 %v2449
    %2611 = vmatprep.subr.bf16.mxu0 %v2448
    %2612 = vmatpush1.bf16.msra.mxu0 %v2447
    %2613 = vmatprep.subr.bf16.mxu0 0
    %2614 = vmatpush2.bf16.msra.mxu0 0
    %2615 = vmatprep.subr.bf16.mxu0 0
    %2616 = vmatpush2.bf16.msra.mxu0 0
    %2617 = vmatprep.subr.bf16.mxu0 0
    %2618 = vmatpush2.bf16.msra.mxu0 0
    %2619 = vmatprep.subr.bf16.mxu0 0
    %2620 = vmatpush2.bf16.msra.mxu0 0
    %2621 = vmatprep.subr.bf16.mxu0 0
    %2622 = vmatpush2.bf16.msra.mxu0 0
    %2623 = vmatprep.subr.bf16.mxu0 0
    %2624 = vmatpush2.bf16.msra.mxu0 0
    %2625 = vmatprep.subr.bf16.mxu0 %v745
    %2626 = vmatpush2.bf16.msra.mxu0 %v744
    %2627 = vmatprep.subr.bf16.mxu0 %v743
    %2628 = vmatpush2.bf16.msra.mxu0 %v742
    %2629 = vmatprep.mubr.bf16.mxu0 %v2586
    %2630 = vmatmul.mubr.bf16.gmra.mxu0 %v2573
    %v2631 = vpop.f32.mrf.mxu0
    %v2632 = vadd.f32 %v2512, %v2631
    %v2633 = vpop.f32.mrf.mxu0
    %v2634 = vadd.f32 %v2512, %v2633
    %v2635 = vpop.f32.mrf.mxu0
    %v2636 = vadd.f32 %v2517, %v2635
    %v2637 = vpop.f32.mrf.mxu0
    %v2638 = vadd.f32 %v2517, %v2637
    %2639 = vmatprep.mubr.bf16.mxu0 %v2589
    %2640 = vmatmul.mubr.bf16.gmra.mxu0 %v2575
    %v2641 = vpop.f32.mrf.mxu0
    %v2642 = vadd.f32 %v2522, %v2641
    %v2643 = vpop.f32.mrf.mxu0
    %v2644 = vadd.f32 %v2522, %v2643
    %v2645 = vpop.f32.mrf.mxu0
    %v2646 = vadd.f32 %v2527, %v2645
    %v2647 = vpop.f32.mrf.mxu0
    %v2648 = vadd.f32 %v2527, %v2647
    %2649 = vmatprep.mubr.bf16.mxu0 %v2592
    %2650 = vmatmul.mubr.bf16.gmra.mxu0 %v2577
    %v2651 = vpop.f32.mrf.mxu0
    %v2652 = vadd.f32 %v2532, %v2651
    %v2653 = vpop.f32.mrf.mxu0
    %v2654 = vadd.f32 %v2532, %v2653
    %v2655 = vpop.f32.mrf.mxu0
    %v2656 = vadd.f32 %v2537, %v2655
    %v2657 = vpop.f32.mrf.mxu0
    %v2658 = vadd.f32 %v2537, %v2657
    %2659 = vmatprep.mubr.bf16.mxu0 %v2595
    %2660 = vmatmul.mubr.bf16.gmra.mxu0 %v2579
    %v2661 = vpop.f32.mrf.mxu0
    %v2662 = vadd.f32 %v2542, %v2661
    %v2663 = vpop.f32.mrf.mxu0
    %v2664 = vadd.f32 %v2542, %v2663
    %v2665 = vpop.f32.mrf.mxu0
    %v2666 = vadd.f32 %v2547, %v2665
    %v2667 = vpop.f32.mrf.mxu0
    %v2668 = vadd.f32 %v2547, %v2667
    %2669 = vdwg.mxu0
    %v2670 = vtanh.pop %v2632
    %v2671 = vtanh.pop %v2634
    %v2672 = vtanh.pop %v2636
    %v2673 = vtanh.pop %v2638
    %v2674 = vtanh.pop %v2642
    %v2675 = vtanh.pop %v2644
    %v2676 = vtanh.pop %v2646
    %v2677 = vtanh.pop %v2648
    %v2678 = vxor.u32 %v2652, 2147483648
    %v2679 = vxor.u32 %v2654, 2147483648
    %v2680 = vxor.u32 %v2656, 2147483648
    %v2681 = vxor.u32 %v2658, 2147483648
    %v2682 = vxor.u32 %v2662, 2147483648
    %v2683 = vxor.u32 %v2664, 2147483648
    %v2684 = vxor.u32 %v2666, 2147483648
    %v2685 = vxor.u32 %v2668, 2147483648
    %v2686 = vmul.f32 %v2678, 1.442695
    %v2687 = vpow.pop %v2686
    %v2688 = vmul.f32 %v2679, 1.442695
    %v2689 = vpow.pop %v2688
    %v2690 = vmul.f32 %v2680, 1.442695
    %v2691 = vpow.pop %v2690
    %v2692 = vmul.f32 %v2681, 1.442695
    %v2693 = vpow.pop %v2692
    %v2694 = vmul.f32 %v2682, 1.442695
    %v2695 = vpow.pop %v2694
    %v2696 = vmul.f32 %v2683, 1.442695
    %v2697 = vpow.pop %v2696
    %v2698 = vmul.f32 %v2684, 1.442695
    %v2699 = vpow.pop %v2698
    %v2700 = vmul.f32 %v2685, 1.442695
    %v2701 = vpow.pop %v2700
    %v2702 = vadd.f32 %v2687, 1.0
    %v2703 = vadd.f32 %v2689, 1.0
    %v2704 = vadd.f32 %v2691, 1.0
    %v2705 = vadd.f32 %v2693, 1.0
    %v2706 = vadd.f32 %v2695, 1.0
    %v2707 = vadd.f32 %v2697, 1.0
    %v2708 = vadd.f32 %v2699, 1.0
    %v2709 = vadd.f32 %v2701, 1.0
    %v2710 = vrcp.pop %v2702
    %v2711 = vmul.f32 1.0, %v2710
    %v2712 = vrcp.pop %v2703
    %v2713 = vmul.f32 1.0, %v2712
    %v2714 = vrcp.pop %v2704
    %v2715 = vmul.f32 1.0, %v2714
    %v2716 = vrcp.pop %v2705
    %v2717 = vmul.f32 1.0, %v2716
    %v2718 = vrcp.pop %v2706
    %v2719 = vmul.f32 1.0, %v2718
    %v2720 = vrcp.pop %v2707
    %v2721 = vmul.f32 1.0, %v2720
    %v2722 = vrcp.pop %v2708
    %v2723 = vmul.f32 1.0, %v2722
    %v2724 = vrcp.pop %v2709
    %v2725 = vmul.f32 1.0, %v2724
    %v2726 = vmul.f32 %v2670, %v2711
    %v2727 = vmul.f32 %v2671, %v2713
    %v2728 = vmul.f32 %v2672, %v2715
    %v2729 = vmul.f32 %v2673, %v2717
    %v2730 = vmul.f32 %v2674, %v2719
    %v2731 = vmul.f32 %v2675, %v2721
    %v2732 = vmul.f32 %v2676, %v2723
    %v2733 = vmul.f32 %v2677, %v2725
    %v2734 = vpack.c.bf16 %v2728, %v2726
    %v2735 = vpack.c.bf16 %v2729, %v2727
    %v2736 = vpack.c.bf16 %v2732, %v2730
    %v2737 = vpack.c.bf16 %v2733, %v2731
    %s2738 = scalar_lea.vmem %s5, 96
    %v2739 = vld [vmem:[%s2738] sm:$0xf]
    %v2740 = vld [vmem:[%s2738 + $0x4] sm:$0xf]
    %v2741 = vld [vmem:[%s2738 + $0x8] sm:$0xf]
    %v2742 = vld [vmem:[%s2738 + $0xc] sm:$0xf]
    %s2743 = scalar_lea.vmem %s9, 192
    %v2744 = vld [vmem:[%s2743] sm:$0xff]
    %v2745 = vld [vmem:[%s2743 + $0x8] sm:$0xff]
    %v2746 = vld [vmem:[%s2743 + $0x10] sm:$0xff]
    %v2747 = vld [vmem:[%s2743 + $0x18] sm:$0xff]
    %2749 = vset.pattern.permute.xlu0 0
    %2750 = vperm.xlu0 %2749, %v2744
    %v2751 = vpop.permute.xlu0 %2750
    %2754 = vset.pattern.permute.xlu0 0
    %2755 = vperm.xlu0 %2754, %v2745
    %v2756 = vpop.permute.xlu0 %2755
    %2759 = vset.pattern.permute.xlu0 0
    %2760 = vperm.xlu0 %2759, %v2746
    %v2761 = vpop.permute.xlu0 %2760
    %2764 = vset.pattern.permute.xlu0 0
    %2765 = vperm.xlu0 %2764, %v2747
    %v2766 = vpop.permute.xlu0 %2765
    %v2772 = vunpack.c.l.b16 %v2739
    %v2773 = vunpack.c.l.b16 %v2740
    %v2774 = vunpack.c.l.b16 %v2741
    %v2775 = vunpack.c.l.b16 %v2742
    %v2776 = vpack.c.b16 %v2773, %v2772
    %v2777 = vpack.c.b16 %v2775, %v2774
    %v2779 = vsel %vm1055, %v2776, 0
    %v2782 = vsel %vm1055, %v2777, 0
    %2784 = vmatprep.subr.bf16.mxu0 0
    %2785 = vmatpush1.bf16.msra.mxu0 0
    %2786 = vmatprep.subr.bf16.mxu0 0
    %2787 = vmatpush1.bf16.msra.mxu0 0
    %2788 = vmatprep.subr.bf16.mxu0 0
    %2789 = vmatpush1.bf16.msra.mxu0 0
    %2790 = vmatprep.subr.bf16.mxu0 0
    %2791 = vmatpush1.bf16.msra.mxu0 0
    %2792 = vmatprep.subr.bf16.mxu0 0
    %2793 = vmatpush1.bf16.msra.mxu0 0
    %2794 = vmatprep.subr.bf16.mxu0 0
    %2795 = vmatpush1.bf16.msra.mxu0 0
    %2796 = vmatprep.subr.bf16.mxu0 %v2737
    %2797 = vmatpush1.bf16.msra.mxu0 %v2736
    %2798 = vmatprep.subr.bf16.mxu0 %v2735
    %2799 = vmatpush1.bf16.msra.mxu0 %v2734
    %2800 = vmatprep.subr.bf16.mxu0 0
    %2801 = vmatpush2.bf16.msra.mxu0 0
    %2802 = vmatprep.subr.bf16.mxu0 0
    %2803 = vmatpush2.bf16.msra.mxu0 0
    %2804 = vmatprep.subr.bf16.mxu0 0
    %2805 = vmatpush2.bf16.msra.mxu0 0
    %2806 = vmatprep.subr.bf16.mxu0 0
    %2807 = vmatpush2.bf16.msra.mxu0 0
    %2808 = vmatprep.subr.bf16.mxu0 0
    %2809 = vmatpush2.bf16.msra.mxu0 0
    %2810 = vmatprep.subr.bf16.mxu0 0
    %2811 = vmatpush2.bf16.msra.mxu0 0
    %2812 = vmatprep.subr.bf16.mxu0 0
    %2813 = vmatpush2.bf16.msra.mxu0 0
    %2814 = vmatprep.subr.bf16.mxu0 0
    %2815 = vmatpush2.bf16.msra.mxu0 0
    %2816 = vmatprep.mubr.bf16.mxu0 0
    %2817 = vmatmul.mubr.bf16.gmra.mxu0 %v2779
    %v2818 = vpop.f32.mrf.mxu0
    %v2819 = vadd.f32 %v2751, %v2818
    %v2820 = vpop.f32.mrf.mxu0
    %v2821 = vadd.f32 %v2751, %v2820
    %v2822 = vpop.f32.mrf.mxu0
    %v2823 = vadd.f32 %v2756, %v2822
    %v2824 = vpop.f32.mrf.mxu0
    %v2825 = vadd.f32 %v2756, %v2824
    %2826 = vmatprep.mubr.bf16.mxu0 0
    %2827 = vmatmul.mubr.bf16.gmra.mxu0 %v2782
    %v2828 = vpop.f32.mrf.mxu0
    %v2829 = vadd.f32 %v2761, %v2828
    %v2830 = vpop.f32.mrf.mxu0
    %v2831 = vadd.f32 %v2761, %v2830
    %v2832 = vpop.f32.mrf.mxu0
    %v2833 = vadd.f32 %v2766, %v2832
    %v2834 = vpop.f32.mrf.mxu0
    %v2835 = vadd.f32 %v2766, %v2834
    %2836 = vdwg.mxu0
    %v2837 = vadd.f32 %v2391, %v2819
    %v2838 = vadd.f32 %v2392, %v2821
    %v2839 = vadd.f32 %v2393, %v2823
    %v2840 = vadd.f32 %v2394, %v2825
    %v2841 = vadd.f32 %v2395, %v2829
    %v2842 = vadd.f32 %v2396, %v2831
    %v2843 = vadd.f32 %v2397, %v2833
    %v2844 = vadd.f32 %v2398, %v2835
    %v2845 = vmul.f32 %v2837, 0.5
    %v2846 = vmul.f32 %v2838, 0.5
    %v2847 = vmul.f32 %v2839, 0.5
    %v2848 = vmul.f32 %v2840, 0.5
    %v2849 = vmul.f32 %v2841, 0.5
    %v2850 = vmul.f32 %v2842, 0.5
    %v2851 = vmul.f32 %v2843, 0.5
    %v2852 = vmul.f32 %v2844, 0.5
    %v2853 = vmax.f32 %v2845, 0.0
    %v2854 = vmax.f32 %v2846, 0.0
    %v2855 = vmax.f32 %v2847, 0.0
    %v2856 = vmax.f32 %v2848, 0.0
    %v2857 = vmax.f32 %v2849, 0.0
    %v2858 = vmax.f32 %v2850, 0.0
    %v2859 = vmax.f32 %v2851, 0.0
    %v2860 = vmax.f32 %v2852, 0.0
    %v2861 = vld [vmem:[%s6] sm:$0xf]
    %v2862 = vld [vmem:[%s6 + $0x4] sm:$0xf]
    %v2863 = vld [vmem:[%s6 + $0x8] sm:$0xf]
    %v2864 = vld [vmem:[%s6 + $0xc] sm:$0xf]
    %v2865 = vpack.c.bf16 %v2855, %v2853
    %v2866 = vpack.c.bf16 %v2856, %v2854
    %v2867 = vpack.c.bf16 %v2859, %v2857
    %v2868 = vpack.c.bf16 %v2860, %v2858
    %2870 = vset.pattern.permute.xlu0 0
    %2871 = vperm.xlu0 %2870, %v66
    %v2872 = vpop.permute.xlu0 %2871
    %2875 = vset.pattern.permute.xlu0 0
    %2876 = vperm.xlu0 %2875, %v67
    %v2877 = vpop.permute.xlu0 %2876
    %2880 = vset.pattern.permute.xlu0 0
    %2881 = vperm.xlu0 %2880, %v68
    %v2882 = vpop.permute.xlu0 %2881
    %2885 = vset.pattern.permute.xlu0 0
    %2886 = vperm.xlu0 %2885, %v69
    %v2887 = vpop.permute.xlu0 %2886
    %v2893 = vunpack.c.l.b16 %v2861
    %v2894 = vunpack.c.l.b16 %v2862
    %v2895 = vunpack.c.l.b16 %v2863
    %v2896 = vunpack.c.l.b16 %v2864
    %v2897 = vpack.c.b16 %v2894, %v2893
    %v2898 = vpack.c.b16 %v2896, %v2895
    %v2900 = vsel %vm1055, %v2897, 0
    %v2903 = vsel %vm1055, %v2898, 0
    %2905 = vmatprep.subr.bf16.mxu0 0
    %2906 = vmatpush1.bf16.msra.mxu0 0
    %2907 = vmatprep.subr.bf16.mxu0 0
    %2908 = vmatpush1.bf16.msra.mxu0 0
    %2909 = vmatprep.subr.bf16.mxu0 0
    %2910 = vmatpush1.bf16.msra.mxu0 0
    %2911 = vmatprep.subr.bf16.mxu0 0
    %2912 = vmatpush1.bf16.msra.mxu0 0
    %2913 = vmatprep.subr.bf16.mxu0 0
    %2914 = vmatpush1.bf16.msra.mxu0 0
    %2915 = vmatprep.subr.bf16.mxu0 0
    %2916 = vmatpush1.bf16.msra.mxu0 0
    %2917 = vmatprep.subr.bf16.mxu0 %v2868
    %2918 = vmatpush1.bf16.msra.mxu0 %v2867
    %2919 = vmatprep.subr.bf16.mxu0 %v2866
    %2920 = vmatpush1.bf16.msra.mxu0 %v2865
    %2921 = vmatprep.subr.bf16.mxu0 0
    %2922 = vmatpush2.bf16.msra.mxu0 0
    %2923 = vmatprep.subr.bf16.mxu0 0
    %2924 = vmatpush2.bf16.msra.mxu0 0
    %2925 = vmatprep.subr.bf16.mxu0 0
    %2926 = vmatpush2.bf16.msra.mxu0 0
    %2927 = vmatprep.subr.bf16.mxu0 0
    %2928 = vmatpush2.bf16.msra.mxu0 0
    %2929 = vmatprep.subr.bf16.mxu0 0
    %2930 = vmatpush2.bf16.msra.mxu0 0
    %2931 = vmatprep.subr.bf16.mxu0 0
    %2932 = vmatpush2.bf16.msra.mxu0 0
    %2933 = vmatprep.subr.bf16.mxu0 0
    %2934 = vmatpush2.bf16.msra.mxu0 0
    %2935 = vmatprep.subr.bf16.mxu0 0
    %2936 = vmatpush2.bf16.msra.mxu0 0
    %2937 = vmatprep.mubr.bf16.mxu0 0
    %2938 = vmatmul.mubr.bf16.gmra.mxu0 %v2900
    %v2939 = vpop.f32.mrf.mxu0
    %v2940 = vadd.f32 %v2872, %v2939
    %v2941 = vpop.f32.mrf.mxu0
    %v2942 = vadd.f32 %v2872, %v2941
    %v2943 = vpop.f32.mrf.mxu0
    %v2944 = vadd.f32 %v2877, %v2943
    %v2945 = vpop.f32.mrf.mxu0
    %v2946 = vadd.f32 %v2877, %v2945
    %2947 = vmatprep.mubr.bf16.mxu0 0
    %2948 = vmatmul.mubr.bf16.gmra.mxu0 %v2903
    %v2949 = vpop.f32.mrf.mxu0
    %v2950 = vadd.f32 %v2882, %v2949
    %v2951 = vpop.f32.mrf.mxu0
    %v2952 = vadd.f32 %v2882, %v2951
    %v2953 = vpop.f32.mrf.mxu0
    %v2954 = vadd.f32 %v2887, %v2953
    %v2955 = vpop.f32.mrf.mxu0
    %v2956 = vadd.f32 %v2887, %v2955
    %2957 = vdwg.mxu0
    %v2958 = vmax.f32 %v2940, 0.0
    %v2959 = vmax.f32 %v2942, 0.0
    %v2960 = vmax.f32 %v2944, 0.0
    %v2961 = vmax.f32 %v2946, 0.0
    %v2962 = vmax.f32 %v2950, 0.0
    %v2963 = vmax.f32 %v2952, 0.0
    %v2964 = vmax.f32 %v2954, 0.0
    %v2965 = vmax.f32 %v2956, 0.0
    %v2966 = vld [vmem:[%s7] sm:$0xf]
    %v2967 = vld [vmem:[%s7 + $0x4] sm:$0xf]
    %v2968 = vpack.c.bf16 %v2960, %v2958
    %v2969 = vpack.c.bf16 %v2961, %v2959
    %v2970 = vpack.c.bf16 %v2964, %v2962
    %v2971 = vpack.c.bf16 %v2965, %v2963
    %2973 = vset.pattern.permute.xlu0 0
    %2974 = vperm.xlu0 %2973, %v70
    %v2975 = vpop.permute.xlu0 %2974
    %2978 = vset.pattern.permute.xlu0 0
    %2979 = vperm.xlu0 %2978, %v71
    %v2980 = vpop.permute.xlu0 %2979
    %v2984 = vunpack.c.l.b16 %v2966
    %v2985 = vunpack.c.l.b16 %v2967
    %v2986 = vpack.c.b16 %v2985, %v2984
    %v2988 = vsel %vm1055, %v2986, 0
    %2990 = vmatprep.subr.bf16.mxu0 0
    %2991 = vmatpush1.bf16.msra.mxu0 0
    %2992 = vmatprep.subr.bf16.mxu0 0
    %2993 = vmatpush1.bf16.msra.mxu0 0
    %2994 = vmatprep.subr.bf16.mxu0 0
    %2995 = vmatpush1.bf16.msra.mxu0 0
    %2996 = vmatprep.subr.bf16.mxu0 0
    %2997 = vmatpush1.bf16.msra.mxu0 0
    %2998 = vmatprep.subr.bf16.mxu0 0
    %2999 = vmatpush1.bf16.msra.mxu0 0
    %3000 = vmatprep.subr.bf16.mxu0 0
    %3001 = vmatpush1.bf16.msra.mxu0 0
    %3002 = vmatprep.subr.bf16.mxu0 %v2971
    %3003 = vmatpush1.bf16.msra.mxu0 %v2970
    %3004 = vmatprep.subr.bf16.mxu0 %v2969
    %3005 = vmatpush1.bf16.msra.mxu0 %v2968
    %3006 = vmatprep.subr.bf16.mxu0 0
    %3007 = vmatpush2.bf16.msra.mxu0 0
    %3008 = vmatprep.subr.bf16.mxu0 0
    %3009 = vmatpush2.bf16.msra.mxu0 0
    %3010 = vmatprep.subr.bf16.mxu0 0
    %3011 = vmatpush2.bf16.msra.mxu0 0
    %3012 = vmatprep.subr.bf16.mxu0 0
    %3013 = vmatpush2.bf16.msra.mxu0 0
    %3014 = vmatprep.subr.bf16.mxu0 0
    %3015 = vmatpush2.bf16.msra.mxu0 0
    %3016 = vmatprep.subr.bf16.mxu0 0
    %3017 = vmatpush2.bf16.msra.mxu0 0
    %3018 = vmatprep.subr.bf16.mxu0 0
    %3019 = vmatpush2.bf16.msra.mxu0 0
    %3020 = vmatprep.subr.bf16.mxu0 0
    %3021 = vmatpush2.bf16.msra.mxu0 0
    %3022 = vmatprep.mubr.bf16.mxu0 0
    %3023 = vmatmul.mubr.bf16.gmra.mxu0 %v2988
    %v3024 = vpop.f32.mrf.mxu0
    %v3025 = vadd.f32 %v2975, %v3024
    %v3026 = vpop.f32.mrf.mxu0
    %v3027 = vadd.f32 %v2975, %v3026
    %v3028 = vpop.f32.mrf.mxu0
    %v3029 = vadd.f32 %v2980, %v3028
    %v3030 = vpop.f32.mrf.mxu0
    %v3031 = vadd.f32 %v2980, %v3030
    %3032 = vdwg.mxu0
    %v3033 = vmax.f32 %v3025, %v3029
    %v3034 = vrot.slane %v3033, 4
    %v3035 = vmax.f32 %v3033, %v3034
    %v3036 = vrot.slane %v3035, 2
    %v3037 = vmax.f32 %v3035, %v3036
    %v3038 = vrot.slane %v3037, 1
    %v3039 = vmax.f32 %v3037, %v3038
    %v3040 = vmax.f32 %v3027, %v3031
    %v3041 = vrot.slane %v3040, 4
    %v3042 = vmax.f32 %v3040, %v3041
    %v3043 = vrot.slane %v3042, 2
    %v3044 = vmax.f32 %v3042, %v3043
    %v3045 = vrot.slane %v3044, 1
    %v3046 = vmax.f32 %v3044, %v3045
    %v3047 = vsub.f32 %v3025, %v3039
    %v3048 = vsub.f32 %v3027, %v3046
    %v3049 = vsub.f32 %v3029, %v3039
    %v3050 = vsub.f32 %v3031, %v3046
    %v3051 = vmul.f32 %v3047, 1.442695
    %v3052 = vpow.pop %v3051
    %v3053 = vmul.f32 %v3048, 1.442695
    %v3054 = vpow.pop %v3053
    %v3055 = vmul.f32 %v3049, 1.442695
    %v3056 = vpow.pop %v3055
    %v3057 = vmul.f32 %v3050, 1.442695
    %v3058 = vpow.pop %v3057
    %v3059 = vadd.f32 %v3052, %v3056
    %v3060 = vrot.slane %v3059, 4
    %v3061 = vadd.f32 %v3059, %v3060
    %v3062 = vrot.slane %v3061, 2
    %v3063 = vadd.f32 %v3061, %v3062
    %v3064 = vrot.slane %v3063, 1
    %v3065 = vadd.f32 %v3063, %v3064
    %v3066 = vadd.f32 %v3054, %v3058
    %v3067 = vrot.slane %v3066, 4
    %v3068 = vadd.f32 %v3066, %v3067
    %v3069 = vrot.slane %v3068, 2
    %v3070 = vadd.f32 %v3068, %v3069
    %v3071 = vrot.slane %v3070, 1
    %v3072 = vadd.f32 %v3070, %v3071
    %v3073 = vrcp.pop %v3065
    %v3074 = vrcp.pop %v3072
    %v3075 = vmul.f32 %v3052, %v3073
    %v3076 = vmul.f32 %v3054, %v3074
    %v3077 = vmul.f32 %v3056, %v3073
    %v3078 = vmul.f32 %v3058, %v3074
    %3079 = vst [vmem:[#allocation5] sm:$0xff] %v3075
    %3080 = vst [vmem:[#allocation5 + $0x8] sm:$0xff] %v3076
    %3081 = vst [vmem:[#allocation5 + $0x10] sm:$0xff] %v3077
    %3082 = vst [vmem:[#allocation5 + $0x18] sm:$0xff] %v3078
    // Predicated region
    $region50: #{tpu_custom_call.1} parent=1 // pred_check
      _
    $region51: #{tpu_custom_call.1} parent=1 // pred_check_branch
      %3084 = sbr.rel (0) target = $region53
    $region52: #{tpu_custom_call.1} parent=1 // pred_region
      %s3086 = ssub.s32 512, 512
      %3087 = vsyncadd [#allocation4], %s3086
      %s3088 = sshll.u32 [#allocation5], 4
      %s3089 = int_to_ptr.vmem [resolvable:$true] %s3088
      %3094 = dma.vmem_to_hbm [thread:$0]  %s3089, 512, %s11, [#allocation4], 256, 256, 16
    $region53: #{tpu_custom_call.1} parent=1 // pred_fallthru
      _
    // Predicated region
    $region54: #{tpu_custom_call.1} parent=1 // pred_check
      _
    $region55: #{tpu_custom_call.1} parent=1 // pred_check_branch
      %3096 = sbr.rel (0) target = $region57
    $region56: #{tpu_custom_call.1} parent=1 // pred_region
      %3097 = dma.done [#allocation4], 512
    $region57: #{tpu_custom_call.1} parent=1 // pred_fallthru
      _
    %3098 = vsyncpa [#allocation3], 1
    %3099 = vsyncpa [#allocation4], 1

</llo_original>
